<compile_context>
chip_gen: v7x
topology: tpu7x:2x2x1
jax: 0.10.0
libtpu: 0.0.40
codegen_flags: <defaults>
</compile_context>

<pallas_src>
import functools

import jax
import jax.numpy as jnp
from jax.experimental import pallas as pl
from jax.experimental.pallas import tpu as pltpu

EPS = 1e-6  # LayerNorm eps (partial(LayerNorm, eps=1e-06))


# ---------------------------------------------------------------------------
# shared math helpers (pure jnp/lax -> usable inside kernels and in the
# pure-JAX reference used for the correctness check)
# ---------------------------------------------------------------------------
def _gelu(x):
    # exact (erf-based) GELU, matching torch.nn.GELU default
    return 0.5 * x * (1.0 + jax.lax.erf(x * 0.7071067811865475))


def _layernorm(x, g, b):
    mu = jnp.mean(x, axis=-1, keepdims=True)
    xc = x - mu
    var = jnp.mean(xc * xc, axis=-1, keepdims=True)
    return xc * jax.lax.rsqrt(var + EPS) * g + b


# ---------------------------------------------------------------------------
# the single fused Pallas kernel: patch embed + all blocks + norm + head
# ---------------------------------------------------------------------------
def vit_kernel(
    xp_ref, pw_ref, posb_ref,
    g1_ref, b1_ref, wqkv_ref, bqkv_ref, wproj_ref, bproj_ref,
    g2_ref, b2_ref, wfc1_ref, bfc1_ref, wfc2_ref, bfc2_ref,
    ng_ref, nb_ref, wh_ref, bh_ref,
    o_ref, acc_ref, *, num_heads, head_dim,
):
    # grid = (batch_tiles, depth); per-layer weights indexed by the depth
    # axis, the f32 residual activation persists in acc_ref across depth.
    layer = pl.program_id(1)
    bt, n_tok, d = acc_ref.shape
    scale = head_dim ** -0.5

    @pl.when(layer == 0)
    def _():
        # fused patch embed + cls token + conv bias + pos_embed
        # (row 0 of xp is an all-zero dummy patch standing in for cls)
        xp = xp_ref[...].reshape(bt * n_tok, -1)
        emb = jnp.dot(xp, pw_ref[...], preferred_element_type=jnp.float32)
        acc_ref[...] = emb.reshape(bt, n_tok, d) + posb_ref[...]

    x = acc_ref[...]                                   # (Bt, N, D) f32 residual

    # ---------------- attention branch ----------------
    xn = _layernorm(x, g1_ref[0], b1_ref[0]).astype(jnp.bfloat16)
    qkv = (jnp.dot(xn.reshape(bt * n_tok, d), wqkv_ref[0],
                   preferred_element_type=jnp.float32)
           + bqkv_ref[0]).reshape(bt, n_tok, 3 * d)    # fused lane-dense QKV

    ctx_list = []
    for b in range(bt):                                # static, Bt <= 4
        qkv_b = qkv[b]                                 # (N, 3D) f32
        q = qkv_b[:, 0 * d:1 * d] * scale              # fold softmax scale into q
        k = qkv_b[:, 1 * d:2 * d]
        v = qkv_b[:, 2 * d:3 * d]

        def heads(t):                                  # (N, D) -> (H, N, hd)
            return pltpu.einshape(
                "nhd->hnd", t.reshape(n_tok, num_heads, head_dim))

        qh = heads(q).astype(jnp.bfloat16)
        kh = heads(k).astype(jnp.bfloat16)
        vh = heads(v).astype(jnp.bfloat16)

        s = jnp.einsum("hnd,hmd->hnm", qh, kh,
                       preferred_element_type=jnp.float32)      # (H, N, N)
        s = s - jnp.max(s, axis=-1, keepdims=True)
        p = jnp.exp(s)
        p = p * pl.reciprocal(jnp.sum(p, axis=-1, keepdims=True), approx=True)

        ctx = jnp.einsum("hnm,hmd->hnd", p.astype(jnp.bfloat16), vh,
                         preferred_element_type=jnp.float32)    # (H, N, hd)
        # merge heads back -> (N, D) so the output projection is one matmul
        ctx_list.append(pltpu.einshape("hnd->nhd", ctx).reshape(n_tok, d))

    ctx_all = jnp.stack(ctx_list, axis=0).reshape(bt * n_tok, d)
    attn = (jnp.dot(ctx_all.astype(jnp.bfloat16), wproj_ref[0],
                    preferred_element_type=jnp.float32) + bproj_ref[0])
    x = x + attn.reshape(bt, n_tok, d)

    # ---------------- MLP branch ----------------
    xn2 = _layernorm(x, g2_ref[0], b2_ref[0]).astype(jnp.bfloat16)
    h1 = _gelu(jnp.dot(xn2.reshape(bt * n_tok, d), wfc1_ref[0],
                       preferred_element_type=jnp.float32) + bfc1_ref[0])
    h2 = (jnp.dot(h1.astype(jnp.bfloat16), wfc2_ref[0],
                  preferred_element_type=jnp.float32) + bfc2_ref[0])
    x = x + h2.reshape(bt, n_tok, d)

    acc_ref[...] = x

    @pl.when(layer == pl.num_programs(1) - 1)
    def _():
        # fused final LayerNorm (cls row only) + classification head;
        # only (Bt, 1, n_pad) logits ever reach HBM.
        cls = x[:, 0, :]                                        # (Bt, D)
        cls_n = _layernorm(cls, ng_ref[...], nb_ref[...])
        logits = (jnp.dot(cls_n.astype(jnp.bfloat16), wh_ref[...],
                          preferred_element_type=jnp.float32) + bh_ref[...])
        o_ref[...] = logits[:, None, :]


# ---------------------------------------------------------------------------
# glue: patch extraction, parameter stacking, forward wrapper
# ---------------------------------------------------------------------------
def extract_patches(x, patch):
    # NCHW -> (B, num_patches, C*p*p), patch order row-major over (H/p, W/p)
    b, c, h, w = x.shape
    gh, gw = h // patch, w // patch
    xp = x.reshape(b, c, gh, patch, gw, patch)
    xp = xp.transpose(0, 2, 4, 1, 3, 5)
    return xp.reshape(b, gh * gw, c * patch * patch)


def pack_block_params(blocks):
    """Stack per-layer weights along a leading depth axis (no head split)."""
    keys = ["g1", "b1", "wqkv", "bqkv", "wproj", "bproj",
            "g2", "b2", "wfc1", "bfc1", "wfc2", "bfc2"]
    return {k: jnp.stack([blk[k] for blk in blocks], axis=0) for k in keys}


def _pick_batch_tile(b):
    # Amortize per-layer weight DMA over several images, but keep the
    # leading "parallel" grid axis >= 2 when possible (v7x has 2 TCs).
    for bt in (4, 2, 1):
        if b % bt == 0 and b // bt >= 2:
            return bt
    return b


def _vmem_limit_bytes():
    # chip-aware scoped-VMEM limit: ~112 MiB on 128-MiB parts (v5e/v6e),
    # ~48 MiB on 64-MiB parts (v7x).
    try:
        cap = int(pltpu.get_tpu_info().vmem_capacity_bytes)
    except Exception:
        cap = 64 * 1024 * 1024
    return int(min(max(cap - 16 * 1024 * 1024, 32 * 1024 * 1024),
                   112 * 1024 * 1024))


def _vit_forward(x, params, patch, num_heads):
    b = x.shape[0]
    d = params["pos_embed"].shape[-1]
    n_tok = params["pos_embed"].shape[1]
    num_patches = n_tok - 1
    head_dim = d // num_heads

    # --- patches + fused additive term (pos_embed + [cls ; conv bias]) ---
    xp = extract_patches(x, patch)                               # (B, P, Cpp)
    cpp = xp.shape[-1]
    xp_pad = jnp.concatenate(
        [jnp.zeros((b, 1, cpp), xp.dtype), xp], axis=1).astype(jnp.bfloat16)
    bias_rows = jnp.concatenate(
        [params["cls_token"][0],
         jnp.broadcast_to(params["patch_b"], (num_patches, d))], axis=0)
    pos_bias = params["pos_embed"][0] + bias_rows                # (N, D) f32

    st = pack_block_params(params["blocks"])
    depth = st["wqkv"].shape[0]

    # --- lane-padded classification head ---
    n_cls = params["head_b"].shape[-1]
    n_pad = ((n_cls + 127) // 128) * 128
    wh_pad = jnp.pad(params["head_w"], ((0, 0), (0, n_pad - n_cls)))
    bh_pad = jnp.pad(params["head_b"], ((0, 0), (0, n_pad - n_cls)))

    bt = _pick_batch_tile(b)

    def lspec(arr):
        nd = arr.ndim
        return pl.BlockSpec((1,) + arr.shape[1:],
                            lambda i, l, _nd=nd: (l,) + (0,) * (_nd - 1))

    order = ["g1", "b1", "wqkv", "bqkv", "wproj", "bproj",
             "g2", "b2", "wfc1", "bfc1", "wfc2", "bfc2"]

    in_specs = [
        pl.BlockSpec((bt, n_tok, cpp), lambda i, l: (i, 0, 0)),   # patches
        pl.BlockSpec((cpp, d), lambda i, l: (0, 0)),              # patch_w
        pl.BlockSpec((n_tok, d), lambda i, l: (0, 0)),            # pos_bias
    ]
    in_specs += [lspec(st[k]) for k in order]                     # per-layer
    in_specs += [
        pl.BlockSpec((1, d), lambda i, l: (0, 0)),                # norm_g
        pl.BlockSpec((1, d), lambda i, l: (0, 0)),                # norm_b
        pl.BlockSpec((d, n_pad), lambda i, l: (0, 0)),            # head_w
        pl.BlockSpec((1, n_pad), lambda i, l: (0, 0)),            # head_b
    ]

    grid_spec = pltpu.PrefetchScalarGridSpec(
        num_scalar_prefetch=0,
        grid=(b // bt, depth),
        in_specs=in_specs,
        out_specs=pl.BlockSpec((bt, 1, n_pad), lambda i, l: (i, 0, 0)),
        scratch_shapes=[pltpu.VMEM((bt, n_tok, d), jnp.float32)],
    )

    logits = pl.pallas_call(
        functools.partial(vit_kernel, num_heads=num_heads, head_dim=head_dim),
        out_shape=jax.ShapeDtypeStruct((b, 1, n_pad), jnp.float32),
        grid_spec=grid_spec,
        compiler_params=pltpu.CompilerParams(
            dimension_semantics=("parallel", "arbitrary"),
            vmem_limit_bytes=_vmem_limit_bytes()),
    )(xp_pad, params["patch_w"], pos_bias,
      *[st[k] for k in order],
      params["norm_g"], params["norm_b"], wh_pad, bh_pad)

    return logits[:, 0, :n_cls]


vit_forward = jax.jit(_vit_forward, static_argnums=(2, 3))


# ---------------------------------------------------------------------------
# pure-JAX reference (f32, HIGHEST precision, same bf16-quantized weights)
# ---------------------------------------------------------------------------
def ref_forward(x, params, patch, num_heads):
    hp = jax.lax.Precision.HIGHEST
    f32 = lambda a: a.astype(jnp.float32)
    b = x.shape[0]
    xp = extract_patches(x, patch)
    emb = jnp.matmul(xp, f32(params["patch_w"]), precision=hp) + params["patch_b"]
    d = emb.shape[-1]
    hd = d // num_heads
    cls = jnp.broadcast_to(params["cls_token"], (b, 1, d))
    z = jnp.concatenate([cls, emb], axis=1) + params["pos_embed"]
    for blk in params["blocks"]:
        zn = _layernorm(z, blk["g1"], blk["b1"])
        qkv = jnp.matmul(zn, f32(blk["wqkv"]), precision=hp) + blk["bqkv"]
        q, k, v = jnp.split(qkv, 3, axis=-1)

        def sh(t):
            return t.reshape(b, -1, num_heads, hd).transpose(0, 2, 1, 3)

        q, k, v = sh(q), sh(k), sh(v)
        s = jnp.einsum("bhnd,bhmd->bhnm", q, k, precision=hp) * hd ** -0.5
        p = jax.nn.softmax(s, axis=-1)
        o = jnp.einsum("bhnm,bhmd->bhnd", p, v, precision=hp)
        o = o.transpose(0, 2, 1, 3).reshape(b, -1, d)
        o = jnp.matmul(o, f32(blk["wproj"]), precision=hp) + blk["bproj"]
        z = z + o
        zn2 = _layernorm(z, blk["g2"], blk["b2"])
        h1 = _gelu(jnp.matmul(zn2, f32(blk["wfc1"]), precision=hp) + blk["bfc1"])
        z = z + jnp.matmul(h1, f32(blk["wfc2"]), precision=hp) + blk["bfc2"]
    zn = _layernorm(z, params["norm_g"], params["norm_b"])
    cls_tok = zn[:, 0, :]
    return jnp.matmul(cls_tok, f32(params["head_w"]), precision=hp) + params["head_b"]


# ---------------------------------------------------------------------------
# deterministic synthetic parameters (matmul weights stored in bf16)
# ---------------------------------------------------------------------------
def init_params(key, *, in_c, patch, embed_dim, depth, num_heads, mlp_ratio,
                num_patches, num_classes):
    cpp = in_c * patch * patch
    hid = int(embed_dim * mlp_ratio)
    n_tok = num_patches + 1

    def nrm(k, shape, std=0.02, dtype=jnp.float32):
        return (std * jax.random.normal(k, shape, dtype=jnp.float32)).astype(dtype)

    bf16 = jnp.bfloat16
    keys = jax.random.split(key, 8 + depth)
    params = {
        "patch_w": nrm(keys[0], (cpp, embed_dim), dtype=bf16),
        "patch_b": nrm(keys[1], (1, embed_dim)),
        "cls_token": nrm(keys[2], (1, 1, embed_dim)),
        "pos_embed": nrm(keys[3], (1, n_tok, embed_dim)),
        "norm_g": jnp.ones((1, embed_dim), jnp.float32),
        "norm_b": jnp.zeros((1, embed_dim), jnp.float32),
        "head_w": nrm(keys[4], (embed_dim, num_classes), dtype=bf16),
        "head_b": nrm(keys[5], (1, num_classes)),
        "blocks": [],
    }
    for i in range(depth):
        bk = jax.random.split(keys[8 + i], 8)
        params["blocks"].append({
            "g1": jnp.ones((1, embed_dim), jnp.float32),
            "b1": jnp.zeros((1, embed_dim), jnp.float32),
            "wqkv": nrm(bk[0], (embed_dim, 3 * embed_dim), dtype=bf16),
            "bqkv": nrm(bk[1], (1, 3 * embed_dim)),
            "wproj": nrm(bk[2], (embed_dim, embed_dim), dtype=bf16),
            "bproj": nrm(bk[3], (1, embed_dim)),
            "g2": jnp.ones((1, embed_dim), jnp.float32),
            "b2": jnp.zeros((1, embed_dim), jnp.float32),
            "wfc1": nrm(bk[4], (embed_dim, hid), dtype=bf16),
            "bfc1": nrm(bk[5], (1, hid)),
            "wfc2": nrm(bk[6], (hid, embed_dim), dtype=bf16),
            "bfc2": nrm(bk[7], (1, embed_dim)),
        })
    return params


# ---------------------------------------------------------------------------
if __name__ == "__main__":
    # small shapes consistent with the module's forward
    B, IN_C, IMG, PATCH = 2, 4, 16, 4
    EMBED, DEPTH, HEADS, MLP_RATIO, N_CLASSES = 32, 2, 4, 4.0, 10
    NUM_PATCHES = (IMG // PATCH) ** 2            # 16 -> seq len 17 with cls token

    key = jax.random.PRNGKey(0)
    k_x, k_p = jax.random.split(key)
    x = jax.random.normal(k_x, (B, IN_C, IMG, IMG), dtype=jnp.float32)  # NCHW
    params = init_params(
        k_p, in_c=IN_C, patch=PATCH, embed_dim=EMBED, depth=DEPTH,
        num_heads=HEADS, mlp_ratio=MLP_RATIO, num_patches=NUM_PATCHES,
        num_classes=N_CLASSES,
    )

    out = jax.block_until_ready(vit_forward(x, params, PATCH, HEADS))
    ref = jax.block_until_ready(ref_forward(x, params, PATCH, HEADS))

    assert out.shape == (B, N_CLASSES)
    # bf16 activations / approx-reciprocal softmax vs f32 HIGHEST reference
    assert jnp.allclose(out, ref, atol=2e-2, rtol=2e-2), (out, ref)

    print("KERNEL_OK")
</pallas_src>

<mosaic_0001>
module attributes {stable_mosaic.version = 11 : i64} {
  func.func @vit_kernel(%arg0: i32, %arg1: i32, %arg2: memref<1x17x64xbf16, #tpu.memory_space<vmem>>, %arg3: memref<64x32xbf16, #tpu.memory_space<vmem>>, %arg4: memref<17x32xf32, #tpu.memory_space<vmem>>, %arg5: memref<1x1x32xf32, #tpu.memory_space<vmem>>, %arg6: memref<1x1x32xf32, #tpu.memory_space<vmem>>, %arg7: memref<1x32x96xbf16, #tpu.memory_space<vmem>>, %arg8: memref<1x1x96xf32, #tpu.memory_space<vmem>>, %arg9: memref<1x32x32xbf16, #tpu.memory_space<vmem>>, %arg10: memref<1x1x32xf32, #tpu.memory_space<vmem>>, %arg11: memref<1x1x32xf32, #tpu.memory_space<vmem>>, %arg12: memref<1x1x32xf32, #tpu.memory_space<vmem>>, %arg13: memref<1x32x128xbf16, #tpu.memory_space<vmem>>, %arg14: memref<1x1x128xf32, #tpu.memory_space<vmem>>, %arg15: memref<1x128x32xbf16, #tpu.memory_space<vmem>>, %arg16: memref<1x1x32xf32, #tpu.memory_space<vmem>>, %arg17: memref<1x32xf32, #tpu.memory_space<vmem>>, %arg18: memref<1x32xf32, #tpu.memory_space<vmem>>, %arg19: memref<32x128xbf16, #tpu.memory_space<vmem>>, %arg20: memref<1x128xf32, #tpu.memory_space<vmem>>, %arg21: memref<1x1x128xf32, #tpu.memory_space<vmem>>, %arg22: memref<1x17x32xf32, #tpu.memory_space<vmem>>) attributes {dimension_semantics = [#tpu.dimension_semantics<parallel>, #tpu.dimension_semantics<arbitrary>], iteration_bounds = array<i64: 2, 2>, scalar_prefetch = 0 : i64, scratch_operands = 1 : i64, tpu.core_type = #tpu.core_type<tc>, window_params = [{transform_indices = @transform_0, window_bounds = array<i64: 1, 17, 64>}, {pipeline_mode = #tpu.pipeline_mode<synchronous>, transform_indices = @transform_1, window_bounds = array<i64: 64, 32>}, {pipeline_mode = #tpu.pipeline_mode<synchronous>, transform_indices = @transform_2, window_bounds = array<i64: 17, 32>}, {transform_indices = @transform_3, window_bounds = array<i64: 1, 1, 32>}, {transform_indices = @transform_4, window_bounds = array<i64: 1, 1, 32>}, {transform_indices = @transform_5, window_bounds = array<i64: 1, 32, 96>}, {transform_indices = @transform_6, window_bounds = array<i64: 1, 1, 96>}, {transform_indices = @transform_7, window_bounds = array<i64: 1, 32, 32>}, {transform_indices = @transform_8, window_bounds = array<i64: 1, 1, 32>}, {transform_indices = @transform_9, window_bounds = array<i64: 1, 1, 32>}, {transform_indices = @transform_10, window_bounds = array<i64: 1, 1, 32>}, {transform_indices = @transform_11, window_bounds = array<i64: 1, 32, 128>}, {transform_indices = @transform_12, window_bounds = array<i64: 1, 1, 128>}, {transform_indices = @transform_13, window_bounds = array<i64: 1, 128, 32>}, {transform_indices = @transform_14, window_bounds = array<i64: 1, 1, 32>}, {pipeline_mode = #tpu.pipeline_mode<synchronous>, transform_indices = @transform_15, window_bounds = array<i64: 1, 32>}, {pipeline_mode = #tpu.pipeline_mode<synchronous>, transform_indices = @transform_16, window_bounds = array<i64: 1, 32>}, {pipeline_mode = #tpu.pipeline_mode<synchronous>, transform_indices = @transform_17, window_bounds = array<i64: 32, 128>}, {pipeline_mode = #tpu.pipeline_mode<synchronous>, transform_indices = @transform_18, window_bounds = array<i64: 1, 128>}, {transform_indices = @transform_19, window_bounds = array<i64: 1, 1, 128>}]} {
    %c0_i32 = arith.constant 0 : i32
    %0 = arith.cmpi eq, %arg1, %c0_i32 : i32
    %1 = arith.extui %0 : i1 to i32
    %c0_i32_0 = arith.constant 0 : i32
    %2 = arith.cmpi ne, %1, %c0_i32_0 : i32
    scf.if %2 {
      %c0_64 = arith.constant 0 : index
      %c0_65 = arith.constant 0 : index
      %c0_66 = arith.constant 0 : index
      %139 = vector.load %arg2[%c0_64, %c0_65, %c0_66] : memref<1x17x64xbf16, #tpu.memory_space<vmem>>, vector<1x17x64xbf16>
      %140 = vector.shape_cast %139 : vector<1x17x64xbf16> to vector<17x64xbf16>
      %c0_67 = arith.constant 0 : index
      %c0_68 = arith.constant 0 : index
      %141 = vector.load %arg3[%c0_67, %c0_68] : memref<64x32xbf16, #tpu.memory_space<vmem>>, vector<64x32xbf16>
      %cst_69 = arith.constant dense<0.000000e+00> : vector<17x32xf32>
      %142 = tpu.matmul %140, %141, %cst_69 {dimension_numbers = #tpu.dot_dimension_numbers<[1], [0], [0], [1], [0, 0, 1, 1], [], []>} : vector<17x64xbf16>, vector<64x32xbf16>, vector<17x32xf32> -> vector<17x32xf32>
      %143 = vector.shape_cast %142 : vector<17x32xf32> to vector<1x17x32xf32>
      %c0_70 = arith.constant 0 : index
      %c0_71 = arith.constant 0 : index
      %144 = vector.load %arg4[%c0_70, %c0_71] : memref<17x32xf32, #tpu.memory_space<vmem>>, vector<17x32xf32>
      %145 = vector.shape_cast %144 : vector<17x32xf32> to vector<1x17x32xf32>
      %146 = arith.addf %143, %145 : vector<1x17x32xf32>
      %c0_72 = arith.constant 0 : index
      %c0_73 = arith.constant 0 : index
      %c0_74 = arith.constant 0 : index
      %147 = vector.load %arg22[%c0_72, %c0_73, %c0_74] : memref<1x17x32xf32, #tpu.memory_space<vmem>>, vector<1x17x32xf32>
      tpu.vector_store %arg22[%c0_72, %c0_73, %c0_74], %146 {strides = array<i32>} : memref<1x17x32xf32, #tpu.memory_space<vmem>>, vector<1x17x32xf32>,
    } else {
    }
    %c0 = arith.constant 0 : index
    %c0_1 = arith.constant 0 : index
    %c0_2 = arith.constant 0 : index
    %3 = vector.load %arg22[%c0, %c0_1, %c0_2] : memref<1x17x32xf32, #tpu.memory_space<vmem>>, vector<1x17x32xf32>
    %c0_3 = arith.constant 0 : index
    %c0_4 = arith.constant 0 : index
    %c0_5 = arith.constant 0 : index
    %4 = vector.load %arg5[%c0_3, %c0_4, %c0_5] : memref<1x1x32xf32, #tpu.memory_space<vmem>>, vector<1x1x32xf32>
    %5 = vector.shape_cast %4 : vector<1x1x32xf32> to vector<1x32xf32>
    %c0_6 = arith.constant 0 : index
    %c0_7 = arith.constant 0 : index
    %c0_8 = arith.constant 0 : index
    %6 = vector.load %arg6[%c0_6, %c0_7, %c0_8] : memref<1x1x32xf32, #tpu.memory_space<vmem>>, vector<1x1x32xf32>
    %7 = vector.shape_cast %6 : vector<1x1x32xf32> to vector<1x32xf32>
    %cst = arith.constant dense<0.000000e+00> : vector<1x17xf32>
    %8 = vector.multi_reduction <add>, %3, %cst [2] : vector<1x17x32xf32> to vector<1x17xf32>
    %9 = vector.shape_cast %8 : vector<1x17xf32> to vector<1x17x1xf32>
    %cst_9 = arith.constant 3.200000e+01 : f32
    %10 = vector.broadcast %cst_9 : f32 to vector<1x17x1xf32>
    %11 = arith.divf %9, %10 : vector<1x17x1xf32>
    %12 = vector.broadcast %11 : vector<1x17x1xf32> to vector<1x17x32xf32>
    %13 = arith.subf %3, %12 : vector<1x17x32xf32>
    %14 = arith.mulf %13, %13 : vector<1x17x32xf32>
    %cst_10 = arith.constant dense<0.000000e+00> : vector<1x17xf32>
    %15 = vector.multi_reduction <add>, %14, %cst_10 [2] : vector<1x17x32xf32> to vector<1x17xf32>
    %16 = vector.shape_cast %15 : vector<1x17xf32> to vector<1x17x1xf32>
    %cst_11 = arith.constant 3.200000e+01 : f32
    %17 = vector.broadcast %cst_11 : f32 to vector<1x17x1xf32>
    %18 = arith.divf %16, %17 : vector<1x17x1xf32>
    %cst_12 = arith.constant 9.99999997E-7 : f32
    %19 = vector.broadcast %cst_12 : f32 to vector<1x17x1xf32>
    %20 = arith.addf %18, %19 : vector<1x17x1xf32>
    %21 = math.rsqrt %20 : vector<1x17x1xf32>
    %22 = vector.broadcast %21 : vector<1x17x1xf32> to vector<1x17x32xf32>
    %23 = arith.mulf %13, %22 : vector<1x17x32xf32>
    %24 = vector.shape_cast %5 : vector<1x32xf32> to vector<1x1x32xf32>
    %25 = vector.broadcast %24 : vector<1x1x32xf32> to vector<1x17x32xf32>
    %26 = arith.mulf %23, %25 : vector<1x17x32xf32>
    %27 = vector.shape_cast %7 : vector<1x32xf32> to vector<1x1x32xf32>
    %28 = vector.broadcast %27 : vector<1x1x32xf32> to vector<1x17x32xf32>
    %29 = arith.addf %26, %28 : vector<1x17x32xf32>
    %30 = arith.truncf %29 : vector<1x17x32xf32> to vector<1x17x32xbf16>
    %31 = vector.shape_cast %30 : vector<1x17x32xbf16> to vector<17x32xbf16>
    %c0_13 = arith.constant 0 : index
    %c0_14 = arith.constant 0 : index
    %c0_15 = arith.constant 0 : index
    %32 = vector.load %arg7[%c0_13, %c0_14, %c0_15] : memref<1x32x96xbf16, #tpu.memory_space<vmem>>, vector<1x32x96xbf16>
    %33 = vector.shape_cast %32 : vector<1x32x96xbf16> to vector<32x96xbf16>
    %cst_16 = arith.constant dense<0.000000e+00> : vector<17x96xf32>
    %34 = tpu.matmul %31, %33, %cst_16 {dimension_numbers = #tpu.dot_dimension_numbers<[1], [0], [0], [1], [0, 0, 1, 1], [], []>} : vector<17x32xbf16>, vector<32x96xbf16>, vector<17x96xf32> -> vector<17x96xf32>
    %c0_17 = arith.constant 0 : index
    %c0_18 = arith.constant 0 : index
    %c0_19 = arith.constant 0 : index
    %35 = vector.load %arg8[%c0_17, %c0_18, %c0_19] : memref<1x1x96xf32, #tpu.memory_space<vmem>>, vector<1x1x96xf32>
    %36 = vector.shape_cast %35 : vector<1x1x96xf32> to vector<1x96xf32>
    %37 = vector.broadcast %36 : vector<1x96xf32> to vector<17x96xf32>
    %38 = arith.addf %34, %37 : vector<17x96xf32>
    %39 = vector.shape_cast %38 : vector<17x96xf32> to vector<1x17x96xf32>
    %40 = vector.shape_cast %39 : vector<1x17x96xf32> to vector<17x96xf32>
    %41 = vector.extract_strided_slice %40 {offsets = [0, 0], sizes = [17, 32], strides = [1, 1]} : vector<17x96xf32> to vector<17x32xf32>
    %cst_20 = arith.constant 0.353553385 : f32
    %42 = vector.broadcast %cst_20 : f32 to vector<17x32xf32>
    %43 = arith.mulf %41, %42 : vector<17x32xf32>
    %44 = vector.extract_strided_slice %40 {offsets = [0, 32], sizes = [17, 32], strides = [1, 1]} : vector<17x96xf32> to vector<17x32xf32>
    %45 = vector.extract_strided_slice %40 {offsets = [0, 64], sizes = [17, 32], strides = [1, 1]} : vector<17x96xf32> to vector<17x32xf32>
    %46 = vector.shape_cast %43 : vector<17x32xf32> to vector<17x4x8xf32>
    %47 = tpu.transpose %46, [1, 0, 2] : vector<17x4x8xf32> -> vector<4x17x8xf32>
    %48 = arith.truncf %47 : vector<4x17x8xf32> to vector<4x17x8xbf16>
    %49 = vector.shape_cast %44 : vector<17x32xf32> to vector<17x4x8xf32>
    %50 = tpu.transpose %49, [1, 0, 2] : vector<17x4x8xf32> -> vector<4x17x8xf32>
    %51 = arith.truncf %50 : vector<4x17x8xf32> to vector<4x17x8xbf16>
    %52 = vector.shape_cast %45 : vector<17x32xf32> to vector<17x4x8xf32>
    %53 = tpu.transpose %52, [1, 0, 2] : vector<17x4x8xf32> -> vector<4x17x8xf32>
    %54 = arith.truncf %53 : vector<4x17x8xf32> to vector<4x17x8xbf16>
    "tpu.trace_start"() <{level = 10 : i32, message = "hnd,hmd->hnm"}> : () -> ()
    %cst_21 = arith.constant dense<0.000000e+00> : vector<4x17x17xf32>
    %55 = tpu.matmul %48, %51, %cst_21 {dimension_numbers = #tpu.dot_dimension_numbers<[2], [2], [1], [1], [0, 0, 0, 1, 1, 1], [0], [0]>} : vector<4x17x8xbf16>, vector<4x17x8xbf16>, vector<4x17x17xf32> -> vector<4x17x17xf32>
    "tpu.trace_stop"() : () -> ()
    %cst_22 = arith.constant dense<0xFF800000> : vector<4x17xf32>
    %56 = vector.multi_reduction <maximumf>, %55, %cst_22 [2] : vector<4x17x17xf32> to vector<4x17xf32>
    %57 = vector.shape_cast %56 : vector<4x17xf32> to vector<4x17x1xf32>
    %58 = vector.broadcast %57 : vector<4x17x1xf32> to vector<4x17x17xf32>
    %59 = arith.subf %55, %58 : vector<4x17x17xf32>
    %60 = math.exp %59 : vector<4x17x17xf32>
    %cst_23 = arith.constant dense<0.000000e+00> : vector<4x17xf32>
    %61 = vector.multi_reduction <add>, %60, %cst_23 [2] : vector<4x17x17xf32> to vector<4x17xf32>
    %62 = vector.shape_cast %61 : vector<4x17xf32> to vector<4x17x1xf32>
    %63 = tpu.reciprocal %62 {approx = true} : vector<4x17x1xf32> -> vector<4x17x1xf32>
    %64 = vector.broadcast %63 : vector<4x17x1xf32> to vector<4x17x17xf32>
    %65 = arith.mulf %60, %64 : vector<4x17x17xf32>
    %66 = arith.truncf %65 : vector<4x17x17xf32> to vector<4x17x17xbf16>
    "tpu.trace_start"() <{level = 10 : i32, message = "hnm,hmd->hnd"}> : () -> ()
    %cst_24 = arith.constant dense<0.000000e+00> : vector<4x17x8xf32>
    %67 = tpu.matmul %66, %54, %cst_24 {dimension_numbers = #tpu.dot_dimension_numbers<[2], [1], [1], [2], [0, 0, 0, 1, 1, 2], [0], [0]>} : vector<4x17x17xbf16>, vector<4x17x8xbf16>, vector<4x17x8xf32> -> vector<4x17x8xf32>
    "tpu.trace_stop"() : () -> ()
    %68 = tpu.transpose %67, [1, 0, 2] : vector<4x17x8xf32> -> vector<17x4x8xf32>
    %69 = vector.shape_cast %68 : vector<17x4x8xf32> to vector<17x32xf32>
    %70 = vector.shape_cast %69 : vector<17x32xf32> to vector<1x17x32xf32>
    %71 = vector.shape_cast %70 : vector<1x17x32xf32> to vector<17x32xf32>
    %72 = arith.truncf %71 : vector<17x32xf32> to vector<17x32xbf16>
    %c0_25 = arith.constant 0 : index
    %c0_26 = arith.constant 0 : index
    %c0_27 = arith.constant 0 : index
    %73 = vector.load %arg9[%c0_25, %c0_26, %c0_27] : memref<1x32x32xbf16, #tpu.memory_space<vmem>>, vector<1x32x32xbf16>
    %74 = vector.shape_cast %73 : vector<1x32x32xbf16> to vector<32x32xbf16>
    %cst_28 = arith.constant dense<0.000000e+00> : vector<17x32xf32>
    %75 = tpu.matmul %72, %74, %cst_28 {dimension_numbers = #tpu.dot_dimension_numbers<[1], [0], [0], [1], [0, 0, 1, 1], [], []>} : vector<17x32xbf16>, vector<32x32xbf16>, vector<17x32xf32> -> vector<17x32xf32>
    %c0_29 = arith.constant 0 : index
    %c0_30 = arith.constant 0 : index
    %c0_31 = arith.constant 0 : index
    %76 = vector.load %arg10[%c0_29, %c0_30, %c0_31] : memref<1x1x32xf32, #tpu.memory_space<vmem>>, vector<1x1x32xf32>
    %77 = vector.shape_cast %76 : vector<1x1x32xf32> to vector<1x32xf32>
    %78 = vector.broadcast %77 : vector<1x32xf32> to vector<17x32xf32>
    %79 = arith.addf %75, %78 : vector<17x32xf32>
    %80 = vector.shape_cast %79 : vector<17x32xf32> to vector<1x17x32xf32>
    %81 = arith.addf %3, %80 : vector<1x17x32xf32>
    %c0_32 = arith.constant 0 : index
    %c0_33 = arith.constant 0 : index
    %c0_34 = arith.constant 0 : index
    %82 = vector.load %arg11[%c0_32, %c0_33, %c0_34] : memref<1x1x32xf32, #tpu.memory_space<vmem>>, vector<1x1x32xf32>
    %83 = vector.shape_cast %82 : vector<1x1x32xf32> to vector<1x32xf32>
    %c0_35 = arith.constant 0 : index
    %c0_36 = arith.constant 0 : index
    %c0_37 = arith.constant 0 : index
    %84 = vector.load %arg12[%c0_35, %c0_36, %c0_37] : memref<1x1x32xf32, #tpu.memory_space<vmem>>, vector<1x1x32xf32>
    %85 = vector.shape_cast %84 : vector<1x1x32xf32> to vector<1x32xf32>
    %cst_38 = arith.constant dense<0.000000e+00> : vector<1x17xf32>
    %86 = vector.multi_reduction <add>, %81, %cst_38 [2] : vector<1x17x32xf32> to vector<1x17xf32>
    %87 = vector.shape_cast %86 : vector<1x17xf32> to vector<1x17x1xf32>
    %cst_39 = arith.constant 3.200000e+01 : f32
    %88 = vector.broadcast %cst_39 : f32 to vector<1x17x1xf32>
    %89 = arith.divf %87, %88 : vector<1x17x1xf32>
    %90 = vector.broadcast %89 : vector<1x17x1xf32> to vector<1x17x32xf32>
    %91 = arith.subf %81, %90 : vector<1x17x32xf32>
    %92 = arith.mulf %91, %91 : vector<1x17x32xf32>
    %cst_40 = arith.constant dense<0.000000e+00> : vector<1x17xf32>
    %93 = vector.multi_reduction <add>, %92, %cst_40 [2] : vector<1x17x32xf32> to vector<1x17xf32>
    %94 = vector.shape_cast %93 : vector<1x17xf32> to vector<1x17x1xf32>
    %cst_41 = arith.constant 3.200000e+01 : f32
    %95 = vector.broadcast %cst_41 : f32 to vector<1x17x1xf32>
    %96 = arith.divf %94, %95 : vector<1x17x1xf32>
    %cst_42 = arith.constant 9.99999997E-7 : f32
    %97 = vector.broadcast %cst_42 : f32 to vector<1x17x1xf32>
    %98 = arith.addf %96, %97 : vector<1x17x1xf32>
    %99 = math.rsqrt %98 : vector<1x17x1xf32>
    %100 = vector.broadcast %99 : vector<1x17x1xf32> to vector<1x17x32xf32>
    %101 = arith.mulf %91, %100 : vector<1x17x32xf32>
    %102 = vector.shape_cast %83 : vector<1x32xf32> to vector<1x1x32xf32>
    %103 = vector.broadcast %102 : vector<1x1x32xf32> to vector<1x17x32xf32>
    %104 = arith.mulf %101, %103 : vector<1x17x32xf32>
    %105 = vector.shape_cast %85 : vector<1x32xf32> to vector<1x1x32xf32>
    %106 = vector.broadcast %105 : vector<1x1x32xf32> to vector<1x17x32xf32>
    %107 = arith.addf %104, %106 : vector<1x17x32xf32>
    %108 = arith.truncf %107 : vector<1x17x32xf32> to vector<1x17x32xbf16>
    %109 = vector.shape_cast %108 : vector<1x17x32xbf16> to vector<17x32xbf16>
    %c0_43 = arith.constant 0 : index
    %c0_44 = arith.constant 0 : index
    %c0_45 = arith.constant 0 : index
    %110 = vector.load %arg13[%c0_43, %c0_44, %c0_45] : memref<1x32x128xbf16, #tpu.memory_space<vmem>>, vector<1x32x128xbf16>
    %111 = vector.shape_cast %110 : vector<1x32x128xbf16> to vector<32x128xbf16>
    %cst_46 = arith.constant dense<0.000000e+00> : vector<17x128xf32>
    %112 = tpu.matmul %109, %111, %cst_46 {dimension_numbers = #tpu.dot_dimension_numbers<[1], [0], [0], [1], [0, 0, 1, 1], [], []>} : vector<17x32xbf16>, vector<32x128xbf16>, vector<17x128xf32> -> vector<17x128xf32>
    %c0_47 = arith.constant 0 : index
    %c0_48 = arith.constant 0 : index
    %c0_49 = arith.constant 0 : index
    %113 = vector.load %arg14[%c0_47, %c0_48, %c0_49] : memref<1x1x128xf32, #tpu.memory_space<vmem>>, vector<1x1x128xf32>
    %114 = vector.shape_cast %113 : vector<1x1x128xf32> to vector<1x128xf32>
    %115 = vector.broadcast %114 : vector<1x128xf32> to vector<17x128xf32>
    %116 = arith.addf %112, %115 : vector<17x128xf32>
    %cst_50 = arith.constant 5.000000e-01 : f32
    %117 = vector.broadcast %cst_50 : f32 to vector<17x128xf32>
    %118 = arith.mulf %117, %116 : vector<17x128xf32>
    %cst_51 = arith.constant 0.707106769 : f32
    %119 = vector.broadcast %cst_51 : f32 to vector<17x128xf32>
    %120 = arith.mulf %116, %119 : vector<17x128xf32>
    %121 = math.erf %120 : vector<17x128xf32>
    %cst_52 = arith.constant 1.000000e+00 : f32
    %122 = vector.broadcast %cst_52 : f32 to vector<17x128xf32>
    %123 = arith.addf %122, %121 : vector<17x128xf32>
    %124 = arith.mulf %118, %123 : vector<17x128xf32>
    %125 = arith.truncf %124 : vector<17x128xf32> to vector<17x128xbf16>
    %c0_53 = arith.constant 0 : index
    %c0_54 = arith.constant 0 : index
    %c0_55 = arith.constant 0 : index
    %126 = vector.load %arg15[%c0_53, %c0_54, %c0_55] : memref<1x128x32xbf16, #tpu.memory_space<vmem>>, vector<1x128x32xbf16>
    %127 = vector.shape_cast %126 : vector<1x128x32xbf16> to vector<128x32xbf16>
    %cst_56 = arith.constant dense<0.000000e+00> : vector<17x32xf32>
    %128 = tpu.matmul %125, %127, %cst_56 {dimension_numbers = #tpu.dot_dimension_numbers<[1], [0], [0], [1], [0, 0, 1, 1], [], []>} : vector<17x128xbf16>, vector<128x32xbf16>, vector<17x32xf32> -> vector<17x32xf32>
    %c0_57 = arith.constant 0 : index
    %c0_58 = arith.constant 0 : index
    %c0_59 = arith.constant 0 : index
    %129 = vector.load %arg16[%c0_57, %c0_58, %c0_59] : memref<1x1x32xf32, #tpu.memory_space<vmem>>, vector<1x1x32xf32>
    %130 = vector.shape_cast %129 : vector<1x1x32xf32> to vector<1x32xf32>
    %131 = vector.broadcast %130 : vector<1x32xf32> to vector<17x32xf32>
    %132 = arith.addf %128, %131 : vector<17x32xf32>
    %133 = vector.shape_cast %132 : vector<17x32xf32> to vector<1x17x32xf32>
    %134 = arith.addf %81, %133 : vector<1x17x32xf32>
    %c0_60 = arith.constant 0 : index
    %c0_61 = arith.constant 0 : index
    %c0_62 = arith.constant 0 : index
    %135 = vector.load %arg22[%c0_60, %c0_61, %c0_62] : memref<1x17x32xf32, #tpu.memory_space<vmem>>, vector<1x17x32xf32>
    tpu.vector_store %arg22[%c0_60, %c0_61, %c0_62], %134 {strides = array<i32>} : memref<1x17x32xf32, #tpu.memory_space<vmem>>, vector<1x17x32xf32>,
    %c1_i32 = arith.constant 1 : i32
    %136 = arith.cmpi eq, %arg1, %c1_i32 : i32
    %137 = arith.extui %136 : i1 to i32
    %c0_i32_63 = arith.constant 0 : i32
    %138 = arith.cmpi ne, %137, %c0_i32_63 : i32
    scf.if %138 {
      %139 = vector.extract_strided_slice %134 {offsets = [0, 0, 0], sizes = [1, 1, 32], strides = [1, 1, 1]} : vector<1x17x32xf32> to vector<1x1x32xf32>
      %140 = vector.shape_cast %139 : vector<1x1x32xf32> to vector<1x32xf32>
      %c0_64 = arith.constant 0 : index
      %c0_65 = arith.constant 0 : index
      %141 = vector.load %arg17[%c0_64, %c0_65] : memref<1x32xf32, #tpu.memory_space<vmem>>, vector<1x32xf32>
      %c0_66 = arith.constant 0 : index
      %c0_67 = arith.constant 0 : index
      %142 = vector.load %arg18[%c0_66, %c0_67] : memref<1x32xf32, #tpu.memory_space<vmem>>, vector<1x32xf32>
      %cst_68 = arith.constant dense<0.000000e+00> : vector<1xf32>
      %143 = vector.multi_reduction <add>, %140, %cst_68 [1] : vector<1x32xf32> to vector<1xf32>
      %144 = vector.shape_cast %143 : vector<1xf32> to vector<1x1xf32>
      %cst_69 = arith.constant 3.200000e+01 : f32
      %145 = vector.broadcast %cst_69 : f32 to vector<1x1xf32>
      %146 = arith.divf %144, %145 : vector<1x1xf32>
      %147 = vector.broadcast %146 : vector<1x1xf32> to vector<1x32xf32>
      %148 = arith.subf %140, %147 : vector<1x32xf32>
      %149 = arith.mulf %148, %148 : vector<1x32xf32>
      %cst_70 = arith.constant dense<0.000000e+00> : vector<1xf32>
      %150 = vector.multi_reduction <add>, %149, %cst_70 [1] : vector<1x32xf32> to vector<1xf32>
      %151 = vector.shape_cast %150 : vector<1xf32> to vector<1x1xf32>
      %cst_71 = arith.constant 3.200000e+01 : f32
      %152 = vector.broadcast %cst_71 : f32 to vector<1x1xf32>
      %153 = arith.divf %151, %152 : vector<1x1xf32>
      %cst_72 = arith.constant 9.99999997E-7 : f32
      %154 = vector.broadcast %cst_72 : f32 to vector<1x1xf32>
      %155 = arith.addf %153, %154 : vector<1x1xf32>
      %156 = math.rsqrt %155 : vector<1x1xf32>
      %157 = vector.broadcast %156 : vector<1x1xf32> to vector<1x32xf32>
      %158 = arith.mulf %148, %157 : vector<1x32xf32>
      %159 = arith.mulf %158, %141 : vector<1x32xf32>
      %160 = arith.addf %159, %142 : vector<1x32xf32>
      %161 = arith.truncf %160 : vector<1x32xf32> to vector<1x32xbf16>
      %c0_73 = arith.constant 0 : index
      %c0_74 = arith.constant 0 : index
      %162 = vector.load %arg19[%c0_73, %c0_74] : memref<32x128xbf16, #tpu.memory_space<vmem>>, vector<32x128xbf16>
      %cst_75 = arith.constant dense<0.000000e+00> : vector<1x128xf32>
      %163 = tpu.matmul %161, %162, %cst_75 {dimension_numbers = #tpu.dot_dimension_numbers<[1], [0], [0], [1], [0, 0, 1, 1], [], []>} : vector<1x32xbf16>, vector<32x128xbf16>, vector<1x128xf32> -> vector<1x128xf32>
      %c0_76 = arith.constant 0 : index
      %c0_77 = arith.constant 0 : index
      %164 = vector.load %arg20[%c0_76, %c0_77] : memref<1x128xf32, #tpu.memory_space<vmem>>, vector<1x128xf32>
      %165 = arith.addf %163, %164 : vector<1x128xf32>
      %166 = vector.shape_cast %165 : vector<1x128xf32> to vector<1x1x128xf32>
      %c0_78 = arith.constant 0 : index
      %c0_79 = arith.constant 0 : index
      %c0_80 = arith.constant 0 : index
      %167 = vector.load %arg21[%c0_78, %c0_79, %c0_80] : memref<1x1x128xf32, #tpu.memory_space<vmem>>, vector<1x1x128xf32>
      tpu.vector_store %arg21[%c0_78, %c0_79, %c0_80], %166 {strides = array<i32>} : memref<1x1x128xf32, #tpu.memory_space<vmem>>, vector<1x1x128xf32>,
    } else {
    }
    return
  }
  func.func @transform_0(%arg0: i32, %arg1: i32) -> (i32, i32, i32) {
    %c0_i32 = arith.constant 0 : i32
    %c0_i32_0 = arith.constant 0 : i32
    %c0_i32_1 = arith.constant 0 : i32
    return %arg0, %c0_i32, %c0_i32_0 : i32, i32, i32
  }
  func.func @transform_1(%arg0: i32, %arg1: i32) -> (i32, i32) {
    %c0_i32 = arith.constant 0 : i32
    %c0_i32_0 = arith.constant 0 : i32
    %c0_i32_1 = arith.constant 0 : i32
    return %c0_i32, %c0_i32_0 : i32, i32
  }
  func.func @transform_2(%arg0: i32, %arg1: i32) -> (i32, i32) {
    %c0_i32 = arith.constant 0 : i32
    %c0_i32_0 = arith.constant 0 : i32
    %c0_i32_1 = arith.constant 0 : i32
    return %c0_i32, %c0_i32_0 : i32, i32
  }
  func.func @transform_3(%arg0: i32, %arg1: i32) -> (i32, i32, i32) {
    %c0_i32 = arith.constant 0 : i32
    %c0_i32_0 = arith.constant 0 : i32
    %c0_i32_1 = arith.constant 0 : i32
    return %arg1, %c0_i32, %c0_i32_0 : i32, i32, i32
  }
  func.func @transform_4(%arg0: i32, %arg1: i32) -> (i32, i32, i32) {
    %c0_i32 = arith.constant 0 : i32
    %c0_i32_0 = arith.constant 0 : i32
    %c0_i32_1 = arith.constant 0 : i32
    return %arg1, %c0_i32, %c0_i32_0 : i32, i32, i32
  }
  func.func @transform_5(%arg0: i32, %arg1: i32) -> (i32, i32, i32) {
    %c0_i32 = arith.constant 0 : i32
    %c0_i32_0 = arith.constant 0 : i32
    %c0_i32_1 = arith.constant 0 : i32
    return %arg1, %c0_i32, %c0_i32_0 : i32, i32, i32
  }
  func.func @transform_6(%arg0: i32, %arg1: i32) -> (i32, i32, i32) {
    %c0_i32 = arith.constant 0 : i32
    %c0_i32_0 = arith.constant 0 : i32
    %c0_i32_1 = arith.constant 0 : i32
    return %arg1, %c0_i32, %c0_i32_0 : i32, i32, i32
  }
  func.func @transform_7(%arg0: i32, %arg1: i32) -> (i32, i32, i32) {
    %c0_i32 = arith.constant 0 : i32
    %c0_i32_0 = arith.constant 0 : i32
    %c0_i32_1 = arith.constant 0 : i32
    return %arg1, %c0_i32, %c0_i32_0 : i32, i32, i32
  }
  func.func @transform_8(%arg0: i32, %arg1: i32) -> (i32, i32, i32) {
    %c0_i32 = arith.constant 0 : i32
    %c0_i32_0 = arith.constant 0 : i32
    %c0_i32_1 = arith.constant 0 : i32
    return %arg1, %c0_i32, %c0_i32_0 : i32, i32, i32
  }
  func.func @transform_9(%arg0: i32, %arg1: i32) -> (i32, i32, i32) {
    %c0_i32 = arith.constant 0 : i32
    %c0_i32_0 = arith.constant 0 : i32
    %c0_i32_1 = arith.constant 0 : i32
    return %arg1, %c0_i32, %c0_i32_0 : i32, i32, i32
  }
  func.func @transform_10(%arg0: i32, %arg1: i32) -> (i32, i32, i32) {
    %c0_i32 = arith.constant 0 : i32
    %c0_i32_0 = arith.constant 0 : i32
    %c0_i32_1 = arith.constant 0 : i32
    return %arg1, %c0_i32, %c0_i32_0 : i32, i32, i32
  }
  func.func @transform_11(%arg0: i32, %arg1: i32) -> (i32, i32, i32) {
    %c0_i32 = arith.constant 0 : i32
    %c0_i32_0 = arith.constant 0 : i32
    %c0_i32_1 = arith.constant 0 : i32
    return %arg1, %c0_i32, %c0_i32_0 : i32, i32, i32
  }
  func.func @transform_12(%arg0: i32, %arg1: i32) -> (i32, i32, i32) {
    %c0_i32 = arith.constant 0 : i32
    %c0_i32_0 = arith.constant 0 : i32
    %c0_i32_1 = arith.constant 0 : i32
    return %arg1, %c0_i32, %c0_i32_0 : i32, i32, i32
  }
  func.func @transform_13(%arg0: i32, %arg1: i32) -> (i32, i32, i32) {
    %c0_i32 = arith.constant 0 : i32
    %c0_i32_0 = arith.constant 0 : i32
    %c0_i32_1 = arith.constant 0 : i32
    return %arg1, %c0_i32, %c0_i32_0 : i32, i32, i32
  }
  func.func @transform_14(%arg0: i32, %arg1: i32) -> (i32, i32, i32) {
    %c0_i32 = arith.constant 0 : i32
    %c0_i32_0 = arith.constant 0 : i32
    %c0_i32_1 = arith.constant 0 : i32
    return %arg1, %c0_i32, %c0_i32_0 : i32, i32, i32
  }
  func.func @transform_15(%arg0: i32, %arg1: i32) -> (i32, i32) {
    %c0_i32 = arith.constant 0 : i32
    %c0_i32_0 = arith.constant 0 : i32
    %c0_i32_1 = arith.constant 0 : i32
    return %c0_i32, %c0_i32_0 : i32, i32
  }
  func.func @transform_16(%arg0: i32, %arg1: i32) -> (i32, i32) {
    %c0_i32 = arith.constant 0 : i32
    %c0_i32_0 = arith.constant 0 : i32
    %c0_i32_1 = arith.constant 0 : i32
    return %c0_i32, %c0_i32_0 : i32, i32
  }
  func.func @transform_17(%arg0: i32, %arg1: i32) -> (i32, i32) {
    %c0_i32 = arith.constant 0 : i32
    %c0_i32_0 = arith.constant 0 : i32
    %c0_i32_1 = arith.constant 0 : i32
    return %c0_i32, %c0_i32_0 : i32, i32
  }
  func.func @transform_18(%arg0: i32, %arg1: i32) -> (i32, i32) {
    %c0_i32 = arith.constant 0 : i32
    %c0_i32_0 = arith.constant 0 : i32
    %c0_i32_1 = arith.constant 0 : i32
    return %c0_i32, %c0_i32_0 : i32, i32
  }
  func.func @transform_19(%arg0: i32, %arg1: i32) -> (i32, i32, i32) {
    %c0_i32 = arith.constant 0 : i32
    %c0_i32_0 = arith.constant 0 : i32
    %c0_i32_1 = arith.constant 0 : i32
    return %arg0, %c0_i32, %c0_i32_0 : i32, i32, i32
  }
}

</mosaic_0001>

<llo_original>
// kernel: _vit_forward.1
$region0: #{_vit_forward.1}
  #allocation0 [shape = 'u32[]', space=smem, size = 0x4, offset = 0x4, fixed_abs, tag = 'smem constant byte address 0x4 - core index']
  #allocation1 [shape = 'u32[144,128]{1,0:T(1,128)}', space=vmem, size = 0x12000, scoped, tag = 'internal scratch']
  #allocation2 [shape = 'f32[1,17,32]{2,1,0:T(8,128)}', space=vmem, size = 0x3000, scoped, tag = 'scratch operand']
  %s0 = inlined_call_operand.vmem [shape: bf16[2,17,64], index: 0, kind: input, shape index: {}]
  %s1 = inlined_call_operand.vmem [shape: bf16[64,32], index: 1, kind: input, shape index: {}]
  %s2 = inlined_call_operand.vmem [shape: f32[17,32], index: 2, kind: input, shape index: {}]
  %s3 = inlined_call_operand.vmem [shape: f32[2,1,32], index: 3, kind: input, shape index: {}]
  %s4 = inlined_call_operand.vmem [shape: f32[2,1,32], index: 4, kind: input, shape index: {}]
  %s5 = inlined_call_operand.vmem [shape: bf16[2,32,96], index: 5, kind: input, shape index: {}]
  %s6 = inlined_call_operand.vmem [shape: f32[2,1,96], index: 6, kind: input, shape index: {}]
  %s7 = inlined_call_operand.vmem [shape: bf16[2,32,32], index: 7, kind: input, shape index: {}]
  %s8 = inlined_call_operand.vmem [shape: f32[2,1,32], index: 8, kind: input, shape index: {}]
  %s9 = inlined_call_operand.vmem [shape: f32[2,1,32], index: 9, kind: input, shape index: {}]
  %s10 = inlined_call_operand.vmem [shape: f32[2,1,32], index: 10, kind: input, shape index: {}]
  %s11 = inlined_call_operand.vmem [shape: bf16[2,32,128], index: 11, kind: input, shape index: {}]
  %s12 = inlined_call_operand.vmem [shape: f32[2,1,128], index: 12, kind: input, shape index: {}]
  %s13 = inlined_call_operand.vmem [shape: bf16[2,128,32], index: 13, kind: input, shape index: {}]
  %s14 = inlined_call_operand.vmem [shape: f32[2,1,32], index: 14, kind: input, shape index: {}]
  %s15 = inlined_call_operand.vmem [shape: f32[1,32], index: 15, kind: input, shape index: {}]
  %s16 = inlined_call_operand.vmem [shape: f32[1,32], index: 16, kind: input, shape index: {}]
  %s17 = inlined_call_operand.vmem [shape: bf16[32,128], index: 17, kind: input, shape index: {}]
  %s18 = inlined_call_operand.vmem [shape: f32[1,128], index: 18, kind: input, shape index: {}]
  %s19 = inlined_call_operand.hbm [shape: f32[2,1,128], index: 19, kind: output, shape index: {}]
  %s20 = sld [smem:[#allocation0]]
  $region117: #{_vit_forward.1} parent=0
    _
  %s22 = ssub.s32 1, %s20
  %s23 = scalar_select 0, %s22, %s20
  $region1: #{_vit_forward.1} parent=0
    #allocation3 [shape = 'u8[1024]{0}', space=vmem, size = 0x400, scoped, tag = 'output window, operand 0']
    #allocation4 [shape = 's32[2]{0}', space=sflag, size = 0x8, scoped, tag = 'scoped memory for _vit_forward.1']
    %24 = vsyncpa [#allocation4], 0
    %s25 = scalar_lea.sflag [#allocation4], 1
    %26 = vsyncpa %s25, 0
    loop: start=0, step=1, limit=6
    $region2: #{_vit_forward.1} parent=1 // loop_pre_header
      _
    $region3: #{_vit_forward.1} parent=1 // loop_header
      %s28 = sphi 0, %s32
      %p29 = scmp.ge.s32.totalorder %s28, 6
      %s35 = sphi 0, %s47
      %s36 = sphi 0, %s43
      %s37 = sphi 0, %s35
      %s38 = sphi 0, %s36
      %s39 = sphi 0, %s37
      %s40 = sphi 0, %s38
      %s50 = sphi 0, %s52
      %s53 = sphi 0, %s50
      %s54 = sphi 0, %s53
      %s70 = sphi 0, %s54
      %s74 = sphi 0, %s74
      %s76 = sphi 0, %s74
      %s77 = sphi 0, %s76
      %s91 = sphi 0, %s77
      %s95 = sphi 0, %s95
      %s97 = sphi 0, %s95
      %s98 = sphi 0, %s97
      %s112 = sphi 0, %s98
      %s118 = sphi 0, %s120
      %s121 = sphi 0, %s118
      %s122 = sphi 0, %s121
      %s138 = sphi 0, %s122
      %s144 = sphi 0, %s146
      %s147 = sphi 0, %s144
      %s148 = sphi 0, %s147
      %s164 = sphi 0, %s148
      %s170 = sphi 0, %s172
      %s173 = sphi 0, %s170
      %s174 = sphi 0, %s173
      %s190 = sphi 0, %s174
      %s196 = sphi 0, %s198
      %s199 = sphi 0, %s196
      %s200 = sphi 0, %s199
      %s216 = sphi 0, %s200
      %s222 = sphi 0, %s224
      %s225 = sphi 0, %s222
      %s226 = sphi 0, %s225
      %s242 = sphi 0, %s226
      %s248 = sphi 0, %s250
      %s251 = sphi 0, %s248
      %s252 = sphi 0, %s251
      %s268 = sphi 0, %s252
      %s274 = sphi 0, %s276
      %s277 = sphi 0, %s274
      %s278 = sphi 0, %s277
      %s294 = sphi 0, %s278
      %s300 = sphi 0, %s302
      %s303 = sphi 0, %s300
      %s304 = sphi 0, %s303
      %s320 = sphi 0, %s304
      %s326 = sphi 0, %s328
      %s329 = sphi 0, %s326
      %s330 = sphi 0, %s329
      %s346 = sphi 0, %s330
      %s352 = sphi 0, %s354
      %s355 = sphi 0, %s352
      %s356 = sphi 0, %s355
      %s372 = sphi 0, %s356
      %s378 = sphi 0, %s380
      %s381 = sphi 0, %s378
      %s382 = sphi 0, %s381
      %s398 = sphi 0, %s382
      %s404 = sphi 0, %s406
      %s407 = sphi 0, %s404
      %s408 = sphi 0, %s407
      %s424 = sphi 0, %s408
      %s428 = sphi 0, %s428
      %s430 = sphi 0, %s428
      %s431 = sphi 0, %s430
      %s445 = sphi 0, %s431
      %s449 = sphi 0, %s449
      %s451 = sphi 0, %s449
      %s452 = sphi 0, %s451
      %s466 = sphi 0, %s452
      %s470 = sphi 0, %s470
      %s472 = sphi 0, %s470
      %s473 = sphi 0, %s472
      %s487 = sphi 0, %s473
      %s491 = sphi 0, %s491
      %s493 = sphi 0, %s491
      %s494 = sphi 0, %s493
      %s508 = sphi 0, %s494
      %s514 = sphi 0, %s516
      %s517 = sphi 0, %s514
      %s518 = sphi 0, %s517
      %s534 = sphi 0, %s518
    $region4: #{_vit_forward.1} parent=1 // loop_header_branch
      %31 = sbr.rel (%p29) target = $region8
    $region5: #{_vit_forward.1} parent=1 // loop_body
      %s33 = ssub.s32 %s28, 1
      %s34 = ssub.s32 %s28, 2
      %s41 = sadd.s32 1, %s36
      %p42 = scmp.ge.s32.totalorder %s41, 2
      %s43 = scalar_select %p42, 0, %s41
      %s44 = sadd.s32 1, %s35
      %s45 = scalar_select %p42, %s44, %s35
      %p46 = scmp.ge.s32.totalorder %s45, 2
      %s47 = scalar_select %p46, 0, %s45
      %s48 = ssub.s32 %s35, %s47
      %p49 = scmp.eq.s32.totalorder %s48, 0
      %s51 = sadd.s32 %s50, 1
      %s52 = scalar_select %p49, %s50, %s51
      %p55 = pneg %p49
      %p56 = scmp.eq.s32.totalorder %s28, 3
      %p57 = por %p55, %p56
      %p58 = scmp.ne.s32.totalorder %s50, %s53
      %p59 = scmp.eq.s32.totalorder %s28, 0
      %p60 = por %p58, %p59
      %p61 = scmp.ne.s32.totalorder %s50, %s53
      %p62 = scmp.eq.s32.totalorder %s33, 3
      %p63 = por %p61, %p62
      %p64 = scmp.ne.s32.totalorder %s53, %s54
      %p65 = scmp.eq.s32.totalorder %s33, 0
      %p66 = por %p64, %p65
      %p67 = scmp.ne.s32.totalorder %s53, %s54
      %p68 = scmp.eq.s32.totalorder %s34, 3
      %p69 = por %p67, %p68
      %p71 = scmp.ne.s32.totalorder %s54, %s70
      %p72 = scmp.eq.s32.totalorder %s34, 0
      %p73 = por %p71, %p72
      %s75 = sadd.s32 %s74, 1
      %p78 = scmp.eq.s32.totalorder %s28, 3
      %p79 = scmp.ne.s32.totalorder %s74, %s76
      %p80 = scmp.eq.s32.totalorder %s28, 0
      %p81 = por %p79, %p80
      %p82 = scmp.ne.s32.totalorder %s74, %s76
      %p83 = scmp.eq.s32.totalorder %s33, 3
      %p84 = por %p82, %p83
      %p85 = scmp.ne.s32.totalorder %s76, %s77
      %p86 = scmp.eq.s32.totalorder %s33, 0
      %p87 = por %p85, %p86
      %p88 = scmp.ne.s32.totalorder %s76, %s77
      %p89 = scmp.eq.s32.totalorder %s34, 3
      %p90 = por %p88, %p89
      %p92 = scmp.ne.s32.totalorder %s77, %s91
      %p93 = scmp.eq.s32.totalorder %s34, 0
      %p94 = por %p92, %p93
      %s96 = sadd.s32 %s95, 1
      %p99 = scmp.eq.s32.totalorder %s28, 3
      %p100 = scmp.ne.s32.totalorder %s95, %s97
      %p101 = scmp.eq.s32.totalorder %s28, 0
      %p102 = por %p100, %p101
      %p103 = scmp.ne.s32.totalorder %s95, %s97
      %p104 = scmp.eq.s32.totalorder %s33, 3
      %p105 = por %p103, %p104
      %p106 = scmp.ne.s32.totalorder %s97, %s98
      %p107 = scmp.eq.s32.totalorder %s33, 0
      %p108 = por %p106, %p107
      %p109 = scmp.ne.s32.totalorder %s97, %s98
      %p110 = scmp.eq.s32.totalorder %s34, 3
      %p111 = por %p109, %p110
      %p113 = scmp.ne.s32.totalorder %s98, %s112
      %p114 = scmp.eq.s32.totalorder %s34, 0
      %p115 = por %p113, %p114
      %s116 = ssub.s32 %s36, %s43
      %p117 = scmp.eq.s32.totalorder %s116, 0
      %s119 = sadd.s32 %s118, 1
      %s120 = scalar_select %p117, %s118, %s119
      %p123 = pneg %p117
      %p124 = scmp.eq.s32.totalorder %s28, 3
      %p125 = por %p123, %p124
      %p126 = scmp.ne.s32.totalorder %s118, %s121
      %p127 = scmp.eq.s32.totalorder %s28, 0
      %p128 = por %p126, %p127
      %p129 = scmp.ne.s32.totalorder %s118, %s121
      %p130 = scmp.eq.s32.totalorder %s33, 3
      %p131 = por %p129, %p130
      %p132 = scmp.ne.s32.totalorder %s121, %s122
      %p133 = scmp.eq.s32.totalorder %s33, 0
      %p134 = por %p132, %p133
      %p135 = scmp.ne.s32.totalorder %s121, %s122
      %p136 = scmp.eq.s32.totalorder %s34, 3
      %p137 = por %p135, %p136
      %p139 = scmp.ne.s32.totalorder %s122, %s138
      %p140 = scmp.eq.s32.totalorder %s34, 0
      %p141 = por %p139, %p140
      %s142 = ssub.s32 %s36, %s43
      %p143 = scmp.eq.s32.totalorder %s142, 0
      %s145 = sadd.s32 %s144, 1
      %s146 = scalar_select %p143, %s144, %s145
      %p149 = pneg %p143
      %p150 = scmp.eq.s32.totalorder %s28, 3
      %p151 = por %p149, %p150
      %p152 = scmp.ne.s32.totalorder %s144, %s147
      %p153 = scmp.eq.s32.totalorder %s28, 0
      %p154 = por %p152, %p153
      %p155 = scmp.ne.s32.totalorder %s144, %s147
      %p156 = scmp.eq.s32.totalorder %s33, 3
      %p157 = por %p155, %p156
      %p158 = scmp.ne.s32.totalorder %s147, %s148
      %p159 = scmp.eq.s32.totalorder %s33, 0
      %p160 = por %p158, %p159
      %p161 = scmp.ne.s32.totalorder %s147, %s148
      %p162 = scmp.eq.s32.totalorder %s34, 3
      %p163 = por %p161, %p162
      %p165 = scmp.ne.s32.totalorder %s148, %s164
      %p166 = scmp.eq.s32.totalorder %s34, 0
      %p167 = por %p165, %p166
      %s168 = ssub.s32 %s36, %s43
      %p169 = scmp.eq.s32.totalorder %s168, 0
      %s171 = sadd.s32 %s170, 1
      %s172 = scalar_select %p169, %s170, %s171
      %p175 = pneg %p169
      %p176 = scmp.eq.s32.totalorder %s28, 3
      %p177 = por %p175, %p176
      %p178 = scmp.ne.s32.totalorder %s170, %s173
      %p179 = scmp.eq.s32.totalorder %s28, 0
      %p180 = por %p178, %p179
      %p181 = scmp.ne.s32.totalorder %s170, %s173
      %p182 = scmp.eq.s32.totalorder %s33, 3
      %p183 = por %p181, %p182
      %p184 = scmp.ne.s32.totalorder %s173, %s174
      %p185 = scmp.eq.s32.totalorder %s33, 0
      %p186 = por %p184, %p185
      %p187 = scmp.ne.s32.totalorder %s173, %s174
      %p188 = scmp.eq.s32.totalorder %s34, 3
      %p189 = por %p187, %p188
      %p191 = scmp.ne.s32.totalorder %s174, %s190
      %p192 = scmp.eq.s32.totalorder %s34, 0
      %p193 = por %p191, %p192
      %s194 = ssub.s32 %s36, %s43
      %p195 = scmp.eq.s32.totalorder %s194, 0
      %s197 = sadd.s32 %s196, 1
      %s198 = scalar_select %p195, %s196, %s197
      %p201 = pneg %p195
      %p202 = scmp.eq.s32.totalorder %s28, 3
      %p203 = por %p201, %p202
      %p204 = scmp.ne.s32.totalorder %s196, %s199
      %p205 = scmp.eq.s32.totalorder %s28, 0
      %p206 = por %p204, %p205
      %p207 = scmp.ne.s32.totalorder %s196, %s199
      %p208 = scmp.eq.s32.totalorder %s33, 3
      %p209 = por %p207, %p208
      %p210 = scmp.ne.s32.totalorder %s199, %s200
      %p211 = scmp.eq.s32.totalorder %s33, 0
      %p212 = por %p210, %p211
      %p213 = scmp.ne.s32.totalorder %s199, %s200
      %p214 = scmp.eq.s32.totalorder %s34, 3
      %p215 = por %p213, %p214
      %p217 = scmp.ne.s32.totalorder %s200, %s216
      %p218 = scmp.eq.s32.totalorder %s34, 0
      %p219 = por %p217, %p218
      %s220 = ssub.s32 %s36, %s43
      %p221 = scmp.eq.s32.totalorder %s220, 0
      %s223 = sadd.s32 %s222, 1
      %s224 = scalar_select %p221, %s222, %s223
      %p227 = pneg %p221
      %p228 = scmp.eq.s32.totalorder %s28, 3
      %p229 = por %p227, %p228
      %p230 = scmp.ne.s32.totalorder %s222, %s225
      %p231 = scmp.eq.s32.totalorder %s28, 0
      %p232 = por %p230, %p231
      %p233 = scmp.ne.s32.totalorder %s222, %s225
      %p234 = scmp.eq.s32.totalorder %s33, 3
      %p235 = por %p233, %p234
      %p236 = scmp.ne.s32.totalorder %s225, %s226
      %p237 = scmp.eq.s32.totalorder %s33, 0
      %p238 = por %p236, %p237
      %p239 = scmp.ne.s32.totalorder %s225, %s226
      %p240 = scmp.eq.s32.totalorder %s34, 3
      %p241 = por %p239, %p240
      %p243 = scmp.ne.s32.totalorder %s226, %s242
      %p244 = scmp.eq.s32.totalorder %s34, 0
      %p245 = por %p243, %p244
      %s246 = ssub.s32 %s36, %s43
      %p247 = scmp.eq.s32.totalorder %s246, 0
      %s249 = sadd.s32 %s248, 1
      %s250 = scalar_select %p247, %s248, %s249
      %p253 = pneg %p247
      %p254 = scmp.eq.s32.totalorder %s28, 3
      %p255 = por %p253, %p254
      %p256 = scmp.ne.s32.totalorder %s248, %s251
      %p257 = scmp.eq.s32.totalorder %s28, 0
      %p258 = por %p256, %p257
      %p259 = scmp.ne.s32.totalorder %s248, %s251
      %p260 = scmp.eq.s32.totalorder %s33, 3
      %p261 = por %p259, %p260
      %p262 = scmp.ne.s32.totalorder %s251, %s252
      %p263 = scmp.eq.s32.totalorder %s33, 0
      %p264 = por %p262, %p263
      %p265 = scmp.ne.s32.totalorder %s251, %s252
      %p266 = scmp.eq.s32.totalorder %s34, 3
      %p267 = por %p265, %p266
      %p269 = scmp.ne.s32.totalorder %s252, %s268
      %p270 = scmp.eq.s32.totalorder %s34, 0
      %p271 = por %p269, %p270
      %s272 = ssub.s32 %s36, %s43
      %p273 = scmp.eq.s32.totalorder %s272, 0
      %s275 = sadd.s32 %s274, 1
      %s276 = scalar_select %p273, %s274, %s275
      %p279 = pneg %p273
      %p280 = scmp.eq.s32.totalorder %s28, 3
      %p281 = por %p279, %p280
      %p282 = scmp.ne.s32.totalorder %s274, %s277
      %p283 = scmp.eq.s32.totalorder %s28, 0
      %p284 = por %p282, %p283
      %p285 = scmp.ne.s32.totalorder %s274, %s277
      %p286 = scmp.eq.s32.totalorder %s33, 3
      %p287 = por %p285, %p286
      %p288 = scmp.ne.s32.totalorder %s277, %s278
      %p289 = scmp.eq.s32.totalorder %s33, 0
      %p290 = por %p288, %p289
      %p291 = scmp.ne.s32.totalorder %s277, %s278
      %p292 = scmp.eq.s32.totalorder %s34, 3
      %p293 = por %p291, %p292
      %p295 = scmp.ne.s32.totalorder %s278, %s294
      %p296 = scmp.eq.s32.totalorder %s34, 0
      %p297 = por %p295, %p296
      %s298 = ssub.s32 %s36, %s43
      %p299 = scmp.eq.s32.totalorder %s298, 0
      %s301 = sadd.s32 %s300, 1
      %s302 = scalar_select %p299, %s300, %s301
      %p305 = pneg %p299
      %p306 = scmp.eq.s32.totalorder %s28, 3
      %p307 = por %p305, %p306
      %p308 = scmp.ne.s32.totalorder %s300, %s303
      %p309 = scmp.eq.s32.totalorder %s28, 0
      %p310 = por %p308, %p309
      %p311 = scmp.ne.s32.totalorder %s300, %s303
      %p312 = scmp.eq.s32.totalorder %s33, 3
      %p313 = por %p311, %p312
      %p314 = scmp.ne.s32.totalorder %s303, %s304
      %p315 = scmp.eq.s32.totalorder %s33, 0
      %p316 = por %p314, %p315
      %p317 = scmp.ne.s32.totalorder %s303, %s304
      %p318 = scmp.eq.s32.totalorder %s34, 3
      %p319 = por %p317, %p318
      %p321 = scmp.ne.s32.totalorder %s304, %s320
      %p322 = scmp.eq.s32.totalorder %s34, 0
      %p323 = por %p321, %p322
      %s324 = ssub.s32 %s36, %s43
      %p325 = scmp.eq.s32.totalorder %s324, 0
      %s327 = sadd.s32 %s326, 1
      %s328 = scalar_select %p325, %s326, %s327
      %p331 = pneg %p325
      %p332 = scmp.eq.s32.totalorder %s28, 3
      %p333 = por %p331, %p332
      %p334 = scmp.ne.s32.totalorder %s326, %s329
      %p335 = scmp.eq.s32.totalorder %s28, 0
      %p336 = por %p334, %p335
      %p337 = scmp.ne.s32.totalorder %s326, %s329
      %p338 = scmp.eq.s32.totalorder %s33, 3
      %p339 = por %p337, %p338
      %p340 = scmp.ne.s32.totalorder %s329, %s330
      %p341 = scmp.eq.s32.totalorder %s33, 0
      %p342 = por %p340, %p341
      %p343 = scmp.ne.s32.totalorder %s329, %s330
      %p344 = scmp.eq.s32.totalorder %s34, 3
      %p345 = por %p343, %p344
      %p347 = scmp.ne.s32.totalorder %s330, %s346
      %p348 = scmp.eq.s32.totalorder %s34, 0
      %p349 = por %p347, %p348
      %s350 = ssub.s32 %s36, %s43
      %p351 = scmp.eq.s32.totalorder %s350, 0
      %s353 = sadd.s32 %s352, 1
      %s354 = scalar_select %p351, %s352, %s353
      %p357 = pneg %p351
      %p358 = scmp.eq.s32.totalorder %s28, 3
      %p359 = por %p357, %p358
      %p360 = scmp.ne.s32.totalorder %s352, %s355
      %p361 = scmp.eq.s32.totalorder %s28, 0
      %p362 = por %p360, %p361
      %p363 = scmp.ne.s32.totalorder %s352, %s355
      %p364 = scmp.eq.s32.totalorder %s33, 3
      %p365 = por %p363, %p364
      %p366 = scmp.ne.s32.totalorder %s355, %s356
      %p367 = scmp.eq.s32.totalorder %s33, 0
      %p368 = por %p366, %p367
      %p369 = scmp.ne.s32.totalorder %s355, %s356
      %p370 = scmp.eq.s32.totalorder %s34, 3
      %p371 = por %p369, %p370
      %p373 = scmp.ne.s32.totalorder %s356, %s372
      %p374 = scmp.eq.s32.totalorder %s34, 0
      %p375 = por %p373, %p374
      %s376 = ssub.s32 %s36, %s43
      %p377 = scmp.eq.s32.totalorder %s376, 0
      %s379 = sadd.s32 %s378, 1
      %s380 = scalar_select %p377, %s378, %s379
      %p383 = pneg %p377
      %p384 = scmp.eq.s32.totalorder %s28, 3
      %p385 = por %p383, %p384
      %p386 = scmp.ne.s32.totalorder %s378, %s381
      %p387 = scmp.eq.s32.totalorder %s28, 0
      %p388 = por %p386, %p387
      %p389 = scmp.ne.s32.totalorder %s378, %s381
      %p390 = scmp.eq.s32.totalorder %s33, 3
      %p391 = por %p389, %p390
      %p392 = scmp.ne.s32.totalorder %s381, %s382
      %p393 = scmp.eq.s32.totalorder %s33, 0
      %p394 = por %p392, %p393
      %p395 = scmp.ne.s32.totalorder %s381, %s382
      %p396 = scmp.eq.s32.totalorder %s34, 3
      %p397 = por %p395, %p396
      %p399 = scmp.ne.s32.totalorder %s382, %s398
      %p400 = scmp.eq.s32.totalorder %s34, 0
      %p401 = por %p399, %p400
      %s402 = ssub.s32 %s36, %s43
      %p403 = scmp.eq.s32.totalorder %s402, 0
      %s405 = sadd.s32 %s404, 1
      %s406 = scalar_select %p403, %s404, %s405
      %p409 = pneg %p403
      %p410 = scmp.eq.s32.totalorder %s28, 3
      %p411 = por %p409, %p410
      %p412 = scmp.ne.s32.totalorder %s404, %s407
      %p413 = scmp.eq.s32.totalorder %s28, 0
      %p414 = por %p412, %p413
      %p415 = scmp.ne.s32.totalorder %s404, %s407
      %p416 = scmp.eq.s32.totalorder %s33, 3
      %p417 = por %p415, %p416
      %p418 = scmp.ne.s32.totalorder %s407, %s408
      %p419 = scmp.eq.s32.totalorder %s33, 0
      %p420 = por %p418, %p419
      %p421 = scmp.ne.s32.totalorder %s407, %s408
      %p422 = scmp.eq.s32.totalorder %s34, 3
      %p423 = por %p421, %p422
      %p425 = scmp.ne.s32.totalorder %s408, %s424
      %p426 = scmp.eq.s32.totalorder %s34, 0
      %p427 = por %p425, %p426
      %s429 = sadd.s32 %s428, 1
      %p432 = scmp.eq.s32.totalorder %s28, 3
      %p433 = scmp.ne.s32.totalorder %s428, %s430
      %p434 = scmp.eq.s32.totalorder %s28, 0
      %p435 = por %p433, %p434
      %p436 = scmp.ne.s32.totalorder %s428, %s430
      %p437 = scmp.eq.s32.totalorder %s33, 3
      %p438 = por %p436, %p437
      %p439 = scmp.ne.s32.totalorder %s430, %s431
      %p440 = scmp.eq.s32.totalorder %s33, 0
      %p441 = por %p439, %p440
      %p442 = scmp.ne.s32.totalorder %s430, %s431
      %p443 = scmp.eq.s32.totalorder %s34, 3
      %p444 = por %p442, %p443
      %p446 = scmp.ne.s32.totalorder %s431, %s445
      %p447 = scmp.eq.s32.totalorder %s34, 0
      %p448 = por %p446, %p447
      %s450 = sadd.s32 %s449, 1
      %p453 = scmp.eq.s32.totalorder %s28, 3
      %p454 = scmp.ne.s32.totalorder %s449, %s451
      %p455 = scmp.eq.s32.totalorder %s28, 0
      %p456 = por %p454, %p455
      %p457 = scmp.ne.s32.totalorder %s449, %s451
      %p458 = scmp.eq.s32.totalorder %s33, 3
      %p459 = por %p457, %p458
      %p460 = scmp.ne.s32.totalorder %s451, %s452
      %p461 = scmp.eq.s32.totalorder %s33, 0
      %p462 = por %p460, %p461
      %p463 = scmp.ne.s32.totalorder %s451, %s452
      %p464 = scmp.eq.s32.totalorder %s34, 3
      %p465 = por %p463, %p464
      %p467 = scmp.ne.s32.totalorder %s452, %s466
      %p468 = scmp.eq.s32.totalorder %s34, 0
      %p469 = por %p467, %p468
      %s471 = sadd.s32 %s470, 1
      %p474 = scmp.eq.s32.totalorder %s28, 3
      %p475 = scmp.ne.s32.totalorder %s470, %s472
      %p476 = scmp.eq.s32.totalorder %s28, 0
      %p477 = por %p475, %p476
      %p478 = scmp.ne.s32.totalorder %s470, %s472
      %p479 = scmp.eq.s32.totalorder %s33, 3
      %p480 = por %p478, %p479
      %p481 = scmp.ne.s32.totalorder %s472, %s473
      %p482 = scmp.eq.s32.totalorder %s33, 0
      %p483 = por %p481, %p482
      %p484 = scmp.ne.s32.totalorder %s472, %s473
      %p485 = scmp.eq.s32.totalorder %s34, 3
      %p486 = por %p484, %p485
      %p488 = scmp.ne.s32.totalorder %s473, %s487
      %p489 = scmp.eq.s32.totalorder %s34, 0
      %p490 = por %p488, %p489
      %s492 = sadd.s32 %s491, 1
      %p495 = scmp.eq.s32.totalorder %s28, 3
      %p496 = scmp.ne.s32.totalorder %s491, %s493
      %p497 = scmp.eq.s32.totalorder %s28, 0
      %p498 = por %p496, %p497
      %p499 = scmp.ne.s32.totalorder %s491, %s493
      %p500 = scmp.eq.s32.totalorder %s33, 3
      %p501 = por %p499, %p500
      %p502 = scmp.ne.s32.totalorder %s493, %s494
      %p503 = scmp.eq.s32.totalorder %s33, 0
      %p504 = por %p502, %p503
      %p505 = scmp.ne.s32.totalorder %s493, %s494
      %p506 = scmp.eq.s32.totalorder %s34, 3
      %p507 = por %p505, %p506
      %p509 = scmp.ne.s32.totalorder %s494, %s508
      %p510 = scmp.eq.s32.totalorder %s34, 0
      %p511 = por %p509, %p510
      %s512 = ssub.s32 %s35, %s47
      %p513 = scmp.eq.s32.totalorder %s512, 0
      %s515 = sadd.s32 %s514, 1
      %s516 = scalar_select %p513, %s514, %s515
      %p519 = pneg %p513
      %p520 = scmp.eq.s32.totalorder %s28, 3
      %p521 = por %p519, %p520
      %p522 = scmp.ne.s32.totalorder %s514, %s517
      %p523 = scmp.eq.s32.totalorder %s28, 0
      %p524 = por %p522, %p523
      %p525 = scmp.ne.s32.totalorder %s514, %s517
      %p526 = scmp.eq.s32.totalorder %s33, 3
      %p527 = por %p525, %p526
      %p528 = scmp.ne.s32.totalorder %s517, %s518
      %p529 = scmp.eq.s32.totalorder %s33, 0
      %p530 = por %p528, %p529
      %p531 = scmp.ne.s32.totalorder %s517, %s518
      %p532 = scmp.eq.s32.totalorder %s34, 3
      %p533 = por %p531, %p532
      %p535 = scmp.ne.s32.totalorder %s518, %s534
      %p536 = scmp.eq.s32.totalorder %s34, 0
      %p537 = por %p535, %p536
      %p538 = scmp.le.s32.totalorder 1, %s28
      %p539 = scmp.lt.s32.totalorder %s28, 5
      %p540 = pnand %p538, %p539
      %p541 = pneg %p540
      // Predicated region
      $region9: #{_vit_forward.1} parent=5 // pred_check
        _
      $region10: #{_vit_forward.1} parent=5 // pred_check_branch
        %543 = sbr.rel (%p540) target = $region12
      $region11: #{_vit_forward.1} parent=5 // pred_region
        %s544 = ssub.s32 %s28, 1
        // Predicated region
        $region13: #{_vit_forward.1} parent=11 // pred_check
          %p545 = pneg %p87
        $region14: #{_vit_forward.1} parent=11 // pred_check_branch
          %547 = sbr.rel (%p545) target = $region16
        $region15: #{_vit_forward.1} parent=11 // pred_region
          _
        $region16: #{_vit_forward.1} parent=11 // pred_fallthru
          _
        // Predicated region
        $region17: #{_vit_forward.1} parent=11 // pred_check
          %p548 = pneg %p108
        $region18: #{_vit_forward.1} parent=11 // pred_check_branch
          %550 = sbr.rel (%p548) target = $region20
        $region19: #{_vit_forward.1} parent=11 // pred_region
          _
        $region20: #{_vit_forward.1} parent=11 // pred_fallthru
          _
        // Predicated region
        $region21: #{_vit_forward.1} parent=11 // pred_check
          %p551 = pneg %p441
        $region22: #{_vit_forward.1} parent=11 // pred_check_branch
          %553 = sbr.rel (%p551) target = $region24
        $region23: #{_vit_forward.1} parent=11 // pred_region
          _
        $region24: #{_vit_forward.1} parent=11 // pred_fallthru
          _
        // Predicated region
        $region25: #{_vit_forward.1} parent=11 // pred_check
          %p554 = pneg %p462
        $region26: #{_vit_forward.1} parent=11 // pred_check_branch
          %556 = sbr.rel (%p554) target = $region28
        $region27: #{_vit_forward.1} parent=11 // pred_region
          _
        $region28: #{_vit_forward.1} parent=11 // pred_fallthru
          _
        // Predicated region
        $region29: #{_vit_forward.1} parent=11 // pred_check
          %p557 = pneg %p483
        $region30: #{_vit_forward.1} parent=11 // pred_check_branch
          %559 = sbr.rel (%p557) target = $region32
        $region31: #{_vit_forward.1} parent=11 // pred_region
          _
        $region32: #{_vit_forward.1} parent=11 // pred_fallthru
          _
        // Predicated region
        $region33: #{_vit_forward.1} parent=11 // pred_check
          %p560 = pneg %p504
        $region34: #{_vit_forward.1} parent=11 // pred_check_branch
          %562 = sbr.rel (%p560) target = $region36
        $region35: #{_vit_forward.1} parent=11 // pred_region
          _
        $region36: #{_vit_forward.1} parent=11 // pred_fallthru
          _
      $region12: #{_vit_forward.1} parent=5 // pred_fallthru
        _
      %p563 = scmp.lt.s32.totalorder %s28, 4
      // Predicated region
      $region37: #{_vit_forward.1} parent=5 // pred_check
        %p564 = pneg %p563
      $region38: #{_vit_forward.1} parent=5 // pred_check_branch
        %566 = sbr.rel (%p564) target = $region40
      $region39: #{_vit_forward.1} parent=5 // pred_region
        // Predicated region
        $region41: #{_vit_forward.1} parent=39 // pred_check
          %p567 = pneg %p60
        $region42: #{_vit_forward.1} parent=39 // pred_check_branch
          %569 = sbr.rel (%p567) target = $region44
        $region43: #{_vit_forward.1} parent=39 // pred_region
          %p570 = scmp.lt.s32.totalorder %s35, 1
          %s571 = scalar_select %p570, %s35, 1
          %s572 = smul.addr %s571, 3
          %s573 = smul.addr %s572, 4
          %s574 = scalar_lea.vmem %s0, %s573
        $region44: #{_vit_forward.1} parent=39 // pred_fallthru
          _
        // Predicated region
        $region45: #{_vit_forward.1} parent=39 // pred_check
          %p575 = pneg %p128
        $region46: #{_vit_forward.1} parent=39 // pred_check_branch
          %577 = sbr.rel (%p575) target = $region48
        $region47: #{_vit_forward.1} parent=39 // pred_region
          %p578 = scmp.lt.s32.totalorder %s36, 1
          %s579 = scalar_select %p578, %s36, 1
          %s580 = scalar_lea.vmem %s3, %s579
        $region48: #{_vit_forward.1} parent=39 // pred_fallthru
          _
        // Predicated region
        $region49: #{_vit_forward.1} parent=39 // pred_check
          %p581 = pneg %p154
        $region50: #{_vit_forward.1} parent=39 // pred_check_branch
          %583 = sbr.rel (%p581) target = $region52
        $region51: #{_vit_forward.1} parent=39 // pred_region
          %p584 = scmp.lt.s32.totalorder %s36, 1
          %s585 = scalar_select %p584, %s36, 1
          %s586 = scalar_lea.vmem %s4, %s585
        $region52: #{_vit_forward.1} parent=39 // pred_fallthru
          _
        // Predicated region
        $region53: #{_vit_forward.1} parent=39 // pred_check
          %p587 = pneg %p180
        $region54: #{_vit_forward.1} parent=39 // pred_check_branch
          %589 = sbr.rel (%p587) target = $region56
        $region55: #{_vit_forward.1} parent=39 // pred_region
          %p590 = scmp.lt.s32.totalorder %s36, 1
          %s591 = scalar_select %p590, %s36, 1
          %s592 = smul.addr %s591, 4
          %s593 = smul.addr %s592, 4
          %s594 = scalar_lea.vmem %s5, %s593
        $region56: #{_vit_forward.1} parent=39 // pred_fallthru
          _
        // Predicated region
        $region57: #{_vit_forward.1} parent=39 // pred_check
          %p595 = pneg %p206
        $region58: #{_vit_forward.1} parent=39 // pred_check_branch
          %597 = sbr.rel (%p595) target = $region60
        $region59: #{_vit_forward.1} parent=39 // pred_region
          %p598 = scmp.lt.s32.totalorder %s36, 1
          %s599 = scalar_select %p598, %s36, 1
          %s600 = scalar_lea.vmem %s6, %s599
        $region60: #{_vit_forward.1} parent=39 // pred_fallthru
          _
        // Predicated region
        $region61: #{_vit_forward.1} parent=39 // pred_check
          %p601 = pneg %p232
        $region62: #{_vit_forward.1} parent=39 // pred_check_branch
          %603 = sbr.rel (%p601) target = $region64
        $region63: #{_vit_forward.1} parent=39 // pred_region
          %p604 = scmp.lt.s32.totalorder %s36, 1
          %s605 = scalar_select %p604, %s36, 1
          %s606 = smul.addr %s605, 4
          %s607 = smul.addr %s606, 4
          %s608 = scalar_lea.vmem %s7, %s607
        $region64: #{_vit_forward.1} parent=39 // pred_fallthru
          _
        // Predicated region
        $region65: #{_vit_forward.1} parent=39 // pred_check
          %p609 = pneg %p258
        $region66: #{_vit_forward.1} parent=39 // pred_check_branch
          %611 = sbr.rel (%p609) target = $region68
        $region67: #{_vit_forward.1} parent=39 // pred_region
          %p612 = scmp.lt.s32.totalorder %s36, 1
          %s613 = scalar_select %p612, %s36, 1
          %s614 = scalar_lea.vmem %s8, %s613
        $region68: #{_vit_forward.1} parent=39 // pred_fallthru
          _
        // Predicated region
        $region69: #{_vit_forward.1} parent=39 // pred_check
          %p615 = pneg %p284
        $region70: #{_vit_forward.1} parent=39 // pred_check_branch
          %617 = sbr.rel (%p615) target = $region72
        $region71: #{_vit_forward.1} parent=39 // pred_region
          %p618 = scmp.lt.s32.totalorder %s36, 1
          %s619 = scalar_select %p618, %s36, 1
          %s620 = scalar_lea.vmem %s9, %s619
        $region72: #{_vit_forward.1} parent=39 // pred_fallthru
          _
        // Predicated region
        $region73: #{_vit_forward.1} parent=39 // pred_check
          %p621 = pneg %p310
        $region74: #{_vit_forward.1} parent=39 // pred_check_branch
          %623 = sbr.rel (%p621) target = $region76
        $region75: #{_vit_forward.1} parent=39 // pred_region
          %p624 = scmp.lt.s32.totalorder %s36, 1
          %s625 = scalar_select %p624, %s36, 1
          %s626 = scalar_lea.vmem %s10, %s625
        $region76: #{_vit_forward.1} parent=39 // pred_fallthru
          _
        // Predicated region
        $region77: #{_vit_forward.1} parent=39 // pred_check
          %p627 = pneg %p336
        $region78: #{_vit_forward.1} parent=39 // pred_check_branch
          %629 = sbr.rel (%p627) target = $region80
        $region79: #{_vit_forward.1} parent=39 // pred_region
          %p630 = scmp.lt.s32.totalorder %s36, 1
          %s631 = scalar_select %p630, %s36, 1
          %s632 = smul.addr %s631, 4
          %s633 = smul.addr %s632, 4
          %s634 = scalar_lea.vmem %s11, %s633
        $region80: #{_vit_forward.1} parent=39 // pred_fallthru
          _
        // Predicated region
        $region81: #{_vit_forward.1} parent=39 // pred_check
          %p635 = pneg %p362
        $region82: #{_vit_forward.1} parent=39 // pred_check_branch
          %637 = sbr.rel (%p635) target = $region84
        $region83: #{_vit_forward.1} parent=39 // pred_region
          %p638 = scmp.lt.s32.totalorder %s36, 1
          %s639 = scalar_select %p638, %s36, 1
          %s640 = scalar_lea.vmem %s12, %s639
        $region84: #{_vit_forward.1} parent=39 // pred_fallthru
          _
        // Predicated region
        $region85: #{_vit_forward.1} parent=39 // pred_check
          %p641 = pneg %p388
        $region86: #{_vit_forward.1} parent=39 // pred_check_branch
          %643 = sbr.rel (%p641) target = $region88
        $region87: #{_vit_forward.1} parent=39 // pred_region
          %p644 = scmp.lt.s32.totalorder %s36, 1
          %s645 = scalar_select %p644, %s36, 1
          %s646 = smul.addr %s645, 16
          %s647 = smul.addr %s646, 4
          %s648 = scalar_lea.vmem %s13, %s647
        $region88: #{_vit_forward.1} parent=39 // pred_fallthru
          _
        // Predicated region
        $region89: #{_vit_forward.1} parent=39 // pred_check
          %p649 = pneg %p414
        $region90: #{_vit_forward.1} parent=39 // pred_check_branch
          %651 = sbr.rel (%p649) target = $region92
        $region91: #{_vit_forward.1} parent=39 // pred_region
          %p652 = scmp.lt.s32.totalorder %s36, 1
          %s653 = scalar_select %p652, %s36, 1
          %s654 = scalar_lea.vmem %s14, %s653
        $region92: #{_vit_forward.1} parent=39 // pred_fallthru
          _
      $region40: #{_vit_forward.1} parent=5 // pred_fallthru
        _
      %p655 = scmp.le.s32.totalorder 1, %s28
      %p656 = scmp.lt.s32.totalorder %s28, 5
      %p657 = pnand %p655, %p656
      %p658 = pneg %p657
      // Predicated region
      $region93: #{_vit_forward.1} parent=5 // pred_check
        _
      $region94: #{_vit_forward.1} parent=5 // pred_check_branch
        %660 = sbr.rel (%p657) target = $region96
      $region95: #{_vit_forward.1} parent=5 // pred_region
        %s661 = ssub.s32 %s28, 1
        %p662 = scmp.lt.s32.totalorder %s37, 1
        %s663 = scalar_select %p662, %s37, 1
        %s664 = smul.addr %s663, 3
        %s665 = smul.addr %s664, 4
        %s666 = scalar_lea.vmem %s0, %s665
        %p667 = pneg %p66
        %p668 = pneg %p63
        %p669 = pneg %p87
        %p670 = pneg %p84
        %p671 = pneg %p108
        %p672 = pneg %p105
        %p673 = scmp.lt.s32.totalorder %s38, 1
        %s674 = scalar_select %p673, %s38, 1
        %s675 = scalar_lea.vmem %s3, %s674
        %p676 = pneg %p134
        %p677 = pneg %p131
        %p678 = scmp.lt.s32.totalorder %s38, 1
        %s679 = scalar_select %p678, %s38, 1
        %s680 = scalar_lea.vmem %s4, %s679
        %p681 = pneg %p160
        %p682 = pneg %p157
        %p683 = scmp.lt.s32.totalorder %s38, 1
        %s684 = scalar_select %p683, %s38, 1
        %s685 = smul.addr %s684, 4
        %s686 = smul.addr %s685, 4
        %s687 = scalar_lea.vmem %s5, %s686
        %p688 = pneg %p186
        %p689 = pneg %p183
        %p690 = scmp.lt.s32.totalorder %s38, 1
        %s691 = scalar_select %p690, %s38, 1
        %s692 = scalar_lea.vmem %s6, %s691
        %p693 = pneg %p212
        %p694 = pneg %p209
        %p695 = scmp.lt.s32.totalorder %s38, 1
        %s696 = scalar_select %p695, %s38, 1
        %s697 = smul.addr %s696, 4
        %s698 = smul.addr %s697, 4
        %s699 = scalar_lea.vmem %s7, %s698
        %p700 = pneg %p238
        %p701 = pneg %p235
        %p702 = scmp.lt.s32.totalorder %s38, 1
        %s703 = scalar_select %p702, %s38, 1
        %s704 = scalar_lea.vmem %s8, %s703
        %p705 = pneg %p264
        %p706 = pneg %p261
        %p707 = scmp.lt.s32.totalorder %s38, 1
        %s708 = scalar_select %p707, %s38, 1
        %s709 = scalar_lea.vmem %s9, %s708
        %p710 = pneg %p290
        %p711 = pneg %p287
        %p712 = scmp.lt.s32.totalorder %s38, 1
        %s713 = scalar_select %p712, %s38, 1
        %s714 = scalar_lea.vmem %s10, %s713
        %p715 = pneg %p316
        %p716 = pneg %p313
        %p717 = scmp.lt.s32.totalorder %s38, 1
        %s718 = scalar_select %p717, %s38, 1
        %s719 = smul.addr %s718, 4
        %s720 = smul.addr %s719, 4
        %s721 = scalar_lea.vmem %s11, %s720
        %p722 = pneg %p342
        %p723 = pneg %p339
        %p724 = scmp.lt.s32.totalorder %s38, 1
        %s725 = scalar_select %p724, %s38, 1
        %s726 = scalar_lea.vmem %s12, %s725
        %p727 = pneg %p368
        %p728 = pneg %p365
        %p729 = scmp.lt.s32.totalorder %s38, 1
        %s730 = scalar_select %p729, %s38, 1
        %s731 = smul.addr %s730, 16
        %s732 = smul.addr %s731, 4
        %s733 = scalar_lea.vmem %s13, %s732
        %p734 = pneg %p394
        %p735 = pneg %p391
        %p736 = scmp.lt.s32.totalorder %s38, 1
        %s737 = scalar_select %p736, %s38, 1
        %s738 = scalar_lea.vmem %s14, %s737
        %p739 = pneg %p420
        %p740 = pneg %p417
        %p741 = pneg %p441
        %p742 = pneg %p438
        %p743 = pneg %p462
        %p744 = pneg %p459
        %p745 = pneg %p483
        %p746 = pneg %p480
        %p747 = pneg %p504
        %p748 = pneg %p501
        %p749 = pneg %p530
        %p750 = pneg %p527
        %s751 = sand.u32 %s517, 1
        %s752 = scalar_lea.sflag [#allocation4], %s751
        %s753 = sand.u32 %s517, 1
        %s754 = scalar_lea.vmem [#allocation3], %s753
        %p755 = scmp.lt.s32.totalorder %s37, 1
        %s756 = scalar_select %p755, %s37, 1
        %s757 = smul.addr %s756, 3
        %s758 = smul.addr %s757, 4
        %s759 = scalar_lea.vmem %s0, %s758
        %p760 = scmp.lt.s32.totalorder %s38, 1
        %s761 = scalar_select %p760, %s38, 1
        %s762 = scalar_lea.vmem %s3, %s761
        %p763 = scmp.lt.s32.totalorder %s38, 1
        %s764 = scalar_select %p763, %s38, 1
        %s765 = scalar_lea.vmem %s4, %s764
        %p766 = scmp.lt.s32.totalorder %s38, 1
        %s767 = scalar_select %p766, %s38, 1
        %s768 = smul.addr %s767, 4
        %s769 = smul.addr %s768, 4
        %s770 = scalar_lea.vmem %s5, %s769
        %p771 = scmp.lt.s32.totalorder %s38, 1
        %s772 = scalar_select %p771, %s38, 1
        %s773 = scalar_lea.vmem %s6, %s772
        %p774 = scmp.lt.s32.totalorder %s38, 1
        %s775 = scalar_select %p774, %s38, 1
        %s776 = smul.addr %s775, 4
        %s777 = smul.addr %s776, 4
        %s778 = scalar_lea.vmem %s7, %s777
        %p779 = scmp.lt.s32.totalorder %s38, 1
        %s780 = scalar_select %p779, %s38, 1
        %s781 = scalar_lea.vmem %s8, %s780
        %p782 = scmp.lt.s32.totalorder %s38, 1
        %s783 = scalar_select %p782, %s38, 1
        %s784 = scalar_lea.vmem %s9, %s783
        %p785 = scmp.lt.s32.totalorder %s38, 1
        %s786 = scalar_select %p785, %s38, 1
        %s787 = scalar_lea.vmem %s10, %s786
        %p788 = scmp.lt.s32.totalorder %s38, 1
        %s789 = scalar_select %p788, %s38, 1
        %s790 = smul.addr %s789, 4
        %s791 = smul.addr %s790, 4
        %s792 = scalar_lea.vmem %s11, %s791
        %p793 = scmp.lt.s32.totalorder %s38, 1
        %s794 = scalar_select %p793, %s38, 1
        %s795 = scalar_lea.vmem %s12, %s794
        %p796 = scmp.lt.s32.totalorder %s38, 1
        %s797 = scalar_select %p796, %s38, 1
        %s798 = smul.addr %s797, 16
        %s799 = smul.addr %s798, 4
        %s800 = scalar_lea.vmem %s13, %s799
        %p801 = scmp.lt.s32.totalorder %s38, 1
        %s802 = scalar_select %p801, %s38, 1
        %s803 = scalar_lea.vmem %s14, %s802
        %p805 = scmp.eq.s32.totalorder %s38, 0
        // Predicated region
        $region97: #{_vit_forward.1} parent=95 // pred_check
          %p806 = pneg %p805
        $region98: #{_vit_forward.1} parent=95 // pred_check_branch
          %808 = sbr.rel (%p806) target = $region100
        $region99: #{_vit_forward.1} parent=95 // pred_region
          %v809 = vld [vmem:[%s759] sm:$0xf]
          %v810 = vld [vmem:[%s759 + $0x4] sm:$0xf]
          %v811 = vld [vmem:[%s759 + $0x8] sm:$0x1]
          %v812 = vld [vmem:[%s1] sm:$0xf]
          %v813 = vld [vmem:[%s1 + $0x4] sm:$0xf]
          %v814 = vld [vmem:[%s1 + $0x8] sm:$0xf]
          %v815 = vld [vmem:[%s1 + $0xc] sm:$0xf]
          %v816 = vld [vmem:[%s1 + $0x10] sm:$0xf]
          %v817 = vld [vmem:[%s1 + $0x14] sm:$0xf]
          %v818 = vld [vmem:[%s1 + $0x18] sm:$0xf]
          %v819 = vld [vmem:[%s1 + $0x1c] sm:$0xf]
          %v823 = vunpack.c.l.b16 %v809
          %v824 = vunpack.c.l.b16 %v810
          %v825 = vunpack.c.l.b16 %v811
          %v826 = vpack.c.b16 %v824, %v823
          %v827 = vpack.c.b16 %v825, %v825
          %v836 = vunpack.c.l.b16 %v812
          %v837 = vunpack.c.l.b16 %v813
          %v838 = vunpack.c.l.b16 %v814
          %v839 = vunpack.c.l.b16 %v815
          %v840 = vunpack.c.l.b16 %v816
          %v841 = vunpack.c.l.b16 %v817
          %v842 = vunpack.c.l.b16 %v818
          %v843 = vunpack.c.l.b16 %v819
          %v844 = vpack.c.b16 %v837, %v836
          %v845 = vpack.c.b16 %v839, %v838
          %v846 = vpack.c.b16 %v841, %v840
          %v847 = vpack.c.b16 %v843, %v842
          %vm852 = vcmask 523264
          %v854 = vsel %vm852, %v826, 0
          %v857 = vsel %vm852, %v827, 0
          %859 = vmatprep.subr.bf16.mxu0 0
          %860 = vmatpush1.bf16.msra.mxu0 %v844
          %861 = vmatprep.subr.bf16.mxu0 0
          %862 = vmatpush1.bf16.msra.mxu0 %v845
          %863 = vmatprep.subr.bf16.mxu0 0
          %864 = vmatpush1.bf16.msra.mxu0 %v846
          %865 = vmatprep.subr.bf16.mxu0 0
          %866 = vmatpush1.bf16.msra.mxu0 %v847
          %867 = vmatprep.subr.bf16.mxu0 0
          %868 = vmatpush1.bf16.msra.mxu0 0
          %869 = vmatprep.subr.bf16.mxu0 0
          %870 = vmatpush1.bf16.msra.mxu0 0
          %871 = vmatprep.subr.bf16.mxu0 0
          %872 = vmatpush1.bf16.msra.mxu0 0
          %873 = vmatprep.subr.bf16.mxu0 0
          %874 = vmatpush1.bf16.msra.mxu0 0
          %875 = vmatprep.subr.bf16.mxu0 0
          %876 = vmatpush1.bf16.msra.mxu0 0
          %877 = vmatprep.subr.bf16.mxu0 0
          %878 = vmatpush1.bf16.msra.mxu0 0
          %879 = vmatprep.subr.bf16.mxu0 0
          %880 = vmatpush1.bf16.msra.mxu0 0
          %881 = vmatprep.subr.bf16.mxu0 0
          %882 = vmatpush1.bf16.msra.mxu0 0
          %883 = vmatprep.subr.bf16.mxu0 0
          %884 = vmatpush1.bf16.msra.mxu0 0
          %885 = vmatprep.subr.bf16.mxu0 0
          %886 = vmatpush1.bf16.msra.mxu0 0
          %887 = vmatprep.subr.bf16.mxu0 0
          %888 = vmatpush1.bf16.msra.mxu0 0
          %889 = vmatprep.subr.bf16.mxu0 0
          %890 = vmatpush1.bf16.msra.mxu0 0
          %891 = vmatprep.mubr.bf16.mxu0 0
          %892 = vmatmul.mubr.bf16.gmra.mrb[0].mxu0 %v854
          %v893 = vpop.f32.mrb[0].mxu0
          %v894 = vadd.f32 0.0, %v893
          %v895 = vpop.f32.mrb[0].mxu0
          %v896 = vpop.f32.mrb[0].mxu0
          %v897 = vadd.f32 0.0, %v896
          %v898 = vpop.f32.mrb[0].mxu0
          %899 = vmatprep.mubr.bf16.mxu0 0
          %900 = vmatmul.mubr.bf16.gmra.mrb[0].mxu0 %v857
          %v901 = vpop.f32.mrb[0].mxu0
          %v902 = vadd.f32 0.0, %v901
          %v903 = vpop.f32.mrb[0].mxu0
          %v904 = vpop.f32.mrb[0].mxu0
          %v905 = vpop.f32.mrb[0].mxu0
          %906 = vdwg.mxu0
          %v907 = vld [vmem:[%s2] sm:$0xff]
          %v908 = vld [vmem:[%s2 + $0x8] sm:$0xff]
          %v909 = vld [vmem:[%s2 + $0x10] sm:$0x1]
          %v910 = vadd.f32 %v894, %v907
          %v911 = vadd.f32 %v897, %v908
          %v912 = vadd.f32 %v902, %v909
          %vm913 = vcmask 261120
          %914 = vst.msk [vmem:[#allocation2] sm:$0xff] %vm913, %v910
          %915 = vst.msk [vmem:[#allocation2 + $0x8] sm:$0xff] %vm913, %v911
          %vm916 = vcmask 253952
          %917 = vst.msk [vmem:[#allocation2 + $0x10] sm:$0x1] %vm916, %v912
        $region100: #{_vit_forward.1} parent=95 // pred_fallthru
          _
        %v918 = vld [vmem:[#allocation2] sm:$0xff]
        %v919 = vld [vmem:[#allocation2 + $0x8] sm:$0xff]
        %v920 = vld [vmem:[#allocation2 + $0x10] sm:$0x1]
        %v921 = vld [vmem:[%s762] sm:$0x1]
        %v922 = vld [vmem:[%s765] sm:$0x1]
        %vm923 = vcmask 261120
        %v924 = vsel %vm923, %v918, 0.0
        %925 = vadd.xlane.f32.xlu0 %v924
        %v926 = vpop.xlane.xlu0 %925
        %v927 = vsel %vm923, %v919, 0.0
        %928 = vadd.xlane.f32.xlu0 %v927
        %v929 = vpop.xlane.xlu0 %928
        %vm930 = vcmask 253952
        %v931 = vsel %vm930, %v920, 0.0
        %932 = vadd.xlane.f32.xlu0 %v931
        %v933 = vpop.xlane.xlu0 %932
        %v934 = vrcp.pop 32.0
        %v935 = vmul.f32 %v926, %v934
        %v936 = vmul.f32 %v929, %v934
        %v937 = vmul.f32 %v933, %v934
        %v938 = vsub.f32 %v918, %v935
        %v939 = vsub.f32 %v919, %v936
        %v940 = vsub.f32 %v920, %v937
        %v941 = vmul.f32 %v938, %v938
        %v942 = vmul.f32 %v939, %v939
        %v943 = vmul.f32 %v940, %v940
        %v944 = vsel %vm923, %v941, 0.0
        %945 = vadd.xlane.f32.xlu0 %v944
        %v946 = vpop.xlane.xlu0 %945
        %v947 = vsel %vm923, %v942, 0.0
        %948 = vadd.xlane.f32.xlu0 %v947
        %v949 = vpop.xlane.xlu0 %948
        %v950 = vsel %vm930, %v943, 0.0
        %951 = vadd.xlane.f32.xlu0 %v950
        %v952 = vpop.xlane.xlu0 %951
        %v953 = vmul.f32 %v946, %v934
        %v954 = vmul.f32 %v949, %v934
        %v955 = vmul.f32 %v952, %v934
        %v956 = vadd.f32 %v953, 1e-06
        %v957 = vadd.f32 %v954, 1e-06
        %v958 = vadd.f32 %v955, 1e-06
        %v959 = vrsqrt.pop %v956
        %v960 = vrsqrt.pop %v957
        %v961 = vrsqrt.pop %v958
        %v962 = vmul.f32 %v938, %v959
        %v963 = vmul.f32 %v939, %v960
        %v964 = vmul.f32 %v940, %v961
        %v966 = vlaneseq
        %v967 = vshrl.u32 %v966, 7
        %v968 = vsub.s32 0, %v967
        %v969 = vrot.slane %v921, %v968
        %v971 = vmul.f32 %v962, %v969
        %v972 = vmul.f32 %v963, %v969
        %v973 = vmul.f32 %v964, %v969
        %v975 = vlaneseq
        %v976 = vshrl.u32 %v975, 7
        %v977 = vsub.s32 0, %v976
        %v978 = vrot.slane %v922, %v977
        %v980 = vadd.f32 %v971, %v978
        %v981 = vadd.f32 %v972, %v978
        %v982 = vadd.f32 %v973, %v978
        %v983 = vpack.c.bf16 %v981, %v980
        %v984 = vpack.c.bf16 %v982, %v982
        %v985 = vld [vmem:[%s770] sm:$0xf]
        %v986 = vld [vmem:[%s770 + $0x4] sm:$0xf]
        %v987 = vld [vmem:[%s770 + $0x8] sm:$0xf]
        %v988 = vld [vmem:[%s770 + $0xc] sm:$0xf]
        %v989 = vld [vmem:[%s773] sm:$0x1]
        %v991 = vlaneseq
        %v992 = vshrl.u32 %v991, 7
        %v993 = vsub.s32 0, %v992
        %v994 = vrot.slane %v989, %v993
        %v1000 = vunpack.c.l.b16 %v985
        %v1001 = vunpack.c.l.b16 %v986
        %v1002 = vunpack.c.l.b16 %v987
        %v1003 = vunpack.c.l.b16 %v988
        %v1004 = vpack.c.b16 %v1001, %v1000
        %v1005 = vpack.c.b16 %v1003, %v1002
        %v1009 = vsel %vm923, %v983, 0
        %v1012 = vsel %vm923, %v984, 0
        %1014 = vmatprep.subr.bf16.mxu0 0
        %1015 = vmatpush1.bf16.msra.mxu0 %v1004
        %1016 = vmatprep.subr.bf16.mxu0 0
        %1017 = vmatpush1.bf16.msra.mxu0 %v1005
        %1018 = vmatprep.subr.bf16.mxu0 0
        %1019 = vmatpush1.bf16.msra.mxu0 0
        %1020 = vmatprep.subr.bf16.mxu0 0
        %1021 = vmatpush1.bf16.msra.mxu0 0
        %1022 = vmatprep.subr.bf16.mxu0 0
        %1023 = vmatpush1.bf16.msra.mxu0 0
        %1024 = vmatprep.subr.bf16.mxu0 0
        %1025 = vmatpush1.bf16.msra.mxu0 0
        %1026 = vmatprep.subr.bf16.mxu0 0
        %1027 = vmatpush1.bf16.msra.mxu0 0
        %1028 = vmatprep.subr.bf16.mxu0 0
        %1029 = vmatpush1.bf16.msra.mxu0 0
        %1030 = vmatprep.subr.bf16.mxu0 0
        %1031 = vmatpush1.bf16.msra.mxu0 0
        %1032 = vmatprep.subr.bf16.mxu0 0
        %1033 = vmatpush1.bf16.msra.mxu0 0
        %1034 = vmatprep.subr.bf16.mxu0 0
        %1035 = vmatpush1.bf16.msra.mxu0 0
        %1036 = vmatprep.subr.bf16.mxu0 0
        %1037 = vmatpush1.bf16.msra.mxu0 0
        %1038 = vmatprep.subr.bf16.mxu0 0
        %1039 = vmatpush1.bf16.msra.mxu0 0
        %1040 = vmatprep.subr.bf16.mxu0 0
        %1041 = vmatpush1.bf16.msra.mxu0 0
        %1042 = vmatprep.subr.bf16.mxu0 0
        %1043 = vmatpush1.bf16.msra.mxu0 0
        %1044 = vmatprep.subr.bf16.mxu0 0
        %1045 = vmatpush1.bf16.msra.mxu0 0
        %1046 = vmatprep.mubr.bf16.mxu0 0
        %1047 = vmatmul.mubr.bf16.gmra.mrb[0].mxu0 %v1009
        %v1048 = vpop.f32.mrb[0].mxu0
        %v1049 = vadd.f32 %v994, %v1048
        %v1050 = vpop.f32.mrb[0].mxu0
        %v1051 = vpop.f32.mrb[0].mxu0
        %v1052 = vadd.f32 %v994, %v1051
        %v1053 = vpop.f32.mrb[0].mxu0
        %1054 = vmatprep.mubr.bf16.mxu0 0
        %1055 = vmatmul.mubr.bf16.gmra.mrb[0].mxu0 %v1012
        %v1056 = vpop.f32.mrb[0].mxu0
        %v1057 = vadd.f32 %v994, %v1056
        %v1058 = vpop.f32.mrb[0].mxu0
        %v1059 = vpop.f32.mrb[0].mxu0
        %v1060 = vpop.f32.mrb[0].mxu0
        %1061 = vdwg.mxu0
        %v1062 = vmul.f32 %v1049, 0.35355338
        %v1063 = vmul.f32 %v1052, 0.35355338
        %v1064 = vmul.f32 %v1057, 0.35355338
        %1068 = vrot.lane.b32.xlu0 %v1062, 120
        %v1069 = vpop.permute.xlu0 %1068
        %1070 = vrot.lane.b32.xlu0 %v1063, 120
        %v1071 = vpop.permute.xlu0 %1070
        %1072 = vrot.lane.b32.xlu0 %v1064, 120
        %v1073 = vpop.permute.xlu0 %1072
        %1077 = vrot.lane.b32.xlu0 %v1062, 112
        %v1078 = vpop.permute.xlu0 %1077
        %1079 = vrot.lane.b32.xlu0 %v1063, 112
        %v1080 = vpop.permute.xlu0 %1079
        %1081 = vrot.lane.b32.xlu0 %v1064, 112
        %v1082 = vpop.permute.xlu0 %1081
        %1086 = vrot.lane.b32.xlu0 %v1062, 104
        %v1087 = vpop.permute.xlu0 %1086
        %1088 = vrot.lane.b32.xlu0 %v1063, 104
        %v1089 = vpop.permute.xlu0 %1088
        %1090 = vrot.lane.b32.xlu0 %v1064, 104
        %v1091 = vpop.permute.xlu0 %1090
        %v1095 = vcombine.low %v1062, %v1078
        %v1096 = vcombine.high %v1062, %v1078
        %v1098 = vunpack.c.l.s4 1983009808
        %v1099 = vunpack.c.0.s8 %v1098
        %v1100 = vlaneseq
        %v1101 = vshrl.u32 %v1100, 7
        %v1102 = vsub.s32 %v1099, %v1101
        %v1103 = vrot.slane %v1095, %v1102
        %v1105 = vunpack.c.l.s4 1983009808
        %v1106 = vunpack.c.0.s8 %v1105
        %v1107 = vlaneseq
        %v1108 = vshrl.u32 %v1107, 7
        %v1109 = vsub.s32 %v1106, %v1108
        %v1110 = vrot.slane %v1096, %v1109
        %v1111 = vcombine.low %v1069, %v1087
        %v1112 = vcombine.high %v1069, %v1087
        %v1114 = vunpack.c.l.s4 1983009808
        %v1115 = vunpack.c.0.s8 %v1114
        %v1116 = vlaneseq
        %v1117 = vshrl.u32 %v1116, 7
        %v1118 = vsub.s32 %v1115, %v1117
        %v1119 = vrot.slane %v1111, %v1118
        %v1121 = vunpack.c.l.s4 1983009808
        %v1122 = vunpack.c.0.s8 %v1121
        %v1123 = vlaneseq
        %v1124 = vshrl.u32 %v1123, 7
        %v1125 = vsub.s32 %v1122, %v1124
        %v1126 = vrot.slane %v1112, %v1125
        %v1127 = vcombine.low %v1103, %v1119
        %v1128 = vcombine.high %v1103, %v1119
        %v1130 = vunpack.c.l.s4 1934713408
        %v1131 = vunpack.c.0.s8 %v1130
        %v1132 = vlaneseq
        %v1133 = vshrl.u32 %v1132, 7
        %v1134 = vsub.s32 %v1131, %v1133
        %v1135 = vrot.slane %v1127, %v1134
        %v1137 = vunpack.c.l.s4 1934713408
        %v1138 = vunpack.c.0.s8 %v1137
        %v1139 = vlaneseq
        %v1140 = vshrl.u32 %v1139, 7
        %v1141 = vsub.s32 %v1138, %v1140
        %v1142 = vrot.slane %v1128, %v1141
        %v1143 = vcombine.low %v1110, %v1126
        %v1144 = vcombine.high %v1110, %v1126
        %v1146 = vunpack.c.l.s4 1934713408
        %v1147 = vunpack.c.0.s8 %v1146
        %v1148 = vlaneseq
        %v1149 = vshrl.u32 %v1148, 7
        %v1150 = vsub.s32 %v1147, %v1149
        %v1151 = vrot.slane %v1143, %v1150
        %v1153 = vunpack.c.l.s4 1934713408
        %v1154 = vunpack.c.0.s8 %v1153
        %v1155 = vlaneseq
        %v1156 = vshrl.u32 %v1155, 7
        %v1157 = vsub.s32 %v1154, %v1156
        %v1158 = vrot.slane %v1144, %v1157
        %v1159 = vcombine.high %v1135, 0.0
        %v1160 = vcombine.high %v1142, 0.0
        %v1161 = vcombine.high %v1151, 0.0
        %v1162 = vcombine.high %v1158, 0.0
        %v1163 = vcombine.low %v1063, %v1080
        %v1164 = vcombine.high %v1063, %v1080
        %v1166 = vunpack.c.l.s4 1983009808
        %v1167 = vunpack.c.0.s8 %v1166
        %v1168 = vlaneseq
        %v1169 = vshrl.u32 %v1168, 7
        %v1170 = vsub.s32 %v1167, %v1169
        %v1171 = vrot.slane %v1163, %v1170
        %v1173 = vunpack.c.l.s4 1983009808
        %v1174 = vunpack.c.0.s8 %v1173
        %v1175 = vlaneseq
        %v1176 = vshrl.u32 %v1175, 7
        %v1177 = vsub.s32 %v1174, %v1176
        %v1178 = vrot.slane %v1164, %v1177
        %v1179 = vcombine.low %v1071, %v1089
        %v1180 = vcombine.high %v1071, %v1089
        %v1182 = vunpack.c.l.s4 1983009808
        %v1183 = vunpack.c.0.s8 %v1182
        %v1184 = vlaneseq
        %v1185 = vshrl.u32 %v1184, 7
        %v1186 = vsub.s32 %v1183, %v1185
        %v1187 = vrot.slane %v1179, %v1186
        %v1189 = vunpack.c.l.s4 1983009808
        %v1190 = vunpack.c.0.s8 %v1189
        %v1191 = vlaneseq
        %v1192 = vshrl.u32 %v1191, 7
        %v1193 = vsub.s32 %v1190, %v1192
        %v1194 = vrot.slane %v1180, %v1193
        %v1195 = vcombine.low %v1171, %v1187
        %v1196 = vcombine.high %v1171, %v1187
        %v1198 = vunpack.c.l.s4 1934713408
        %v1199 = vunpack.c.0.s8 %v1198
        %v1200 = vlaneseq
        %v1201 = vshrl.u32 %v1200, 7
        %v1202 = vsub.s32 %v1199, %v1201
        %v1203 = vrot.slane %v1195, %v1202
        %v1205 = vunpack.c.l.s4 1934713408
        %v1206 = vunpack.c.0.s8 %v1205
        %v1207 = vlaneseq
        %v1208 = vshrl.u32 %v1207, 7
        %v1209 = vsub.s32 %v1206, %v1208
        %v1210 = vrot.slane %v1196, %v1209
        %v1211 = vcombine.low %v1178, %v1194
        %v1212 = vcombine.high %v1178, %v1194
        %v1214 = vunpack.c.l.s4 1934713408
        %v1215 = vunpack.c.0.s8 %v1214
        %v1216 = vlaneseq
        %v1217 = vshrl.u32 %v1216, 7
        %v1218 = vsub.s32 %v1215, %v1217
        %v1219 = vrot.slane %v1211, %v1218
        %v1221 = vunpack.c.l.s4 1934713408
        %v1222 = vunpack.c.0.s8 %v1221
        %v1223 = vlaneseq
        %v1224 = vshrl.u32 %v1223, 7
        %v1225 = vsub.s32 %v1222, %v1224
        %v1226 = vrot.slane %v1212, %v1225
        %v1227 = vcombine.high %v1203, 0.0
        %v1228 = vcombine.high %v1210, 0.0
        %v1229 = vcombine.high %v1219, 0.0
        %v1230 = vcombine.high %v1226, 0.0
        %v1231 = vcombine.low %v1064, %v1082
        %v1233 = vunpack.c.l.s4 1983009808
        %v1234 = vunpack.c.0.s8 %v1233
        %v1235 = vlaneseq
        %v1236 = vshrl.u32 %v1235, 7
        %v1237 = vsub.s32 %v1234, %v1236
        %v1238 = vrot.slane %v1231, %v1237
        %v1239 = vcombine.low %v1073, %v1091
        %v1241 = vunpack.c.l.s4 1983009808
        %v1242 = vunpack.c.0.s8 %v1241
        %v1243 = vlaneseq
        %v1244 = vshrl.u32 %v1243, 7
        %v1245 = vsub.s32 %v1242, %v1244
        %v1246 = vrot.slane %v1239, %v1245
        %v1247 = vcombine.low %v1238, %v1246
        %v1248 = vcombine.low %v1135, %v1142
        %v1250 = vunpack.c.l.s4 1983009808
        %v1251 = vunpack.c.0.s8 %v1250
        %v1252 = vlaneseq
        %v1253 = vshrl.u32 %v1252, 7
        %v1254 = vsub.s32 %v1251, %v1253
        %v1255 = vrot.slane %v1248, %v1254
        %v1256 = vcombine.low %v1159, %v1160
        %v1258 = vunpack.c.l.s4 1983009808
        %v1259 = vunpack.c.0.s8 %v1258
        %v1260 = vlaneseq
        %v1261 = vshrl.u32 %v1260, 7
        %v1262 = vsub.s32 %v1259, %v1261
        %v1263 = vrot.slane %v1256, %v1262
        %v1264 = vcombine.low %v1151, %v1158
        %v1266 = vunpack.c.l.s4 1983009808
        %v1267 = vunpack.c.0.s8 %v1266
        %v1268 = vlaneseq
        %v1269 = vshrl.u32 %v1268, 7
        %v1270 = vsub.s32 %v1267, %v1269
        %v1271 = vrot.slane %v1264, %v1270
        %v1272 = vcombine.low %v1161, %v1162
        %v1274 = vunpack.c.l.s4 1983009808
        %v1275 = vunpack.c.0.s8 %v1274
        %v1276 = vlaneseq
        %v1277 = vshrl.u32 %v1276, 7
        %v1278 = vsub.s32 %v1275, %v1277
        %v1279 = vrot.slane %v1272, %v1278
        %v1280 = vcombine.low %v1255, %v1263
        %v1281 = vcombine.high %v1255, %v1263
        %v1283 = vunpack.c.l.s4 1934713408
        %v1284 = vunpack.c.0.s8 %v1283
        %v1285 = vlaneseq
        %v1286 = vshrl.u32 %v1285, 7
        %v1287 = vsub.s32 %v1284, %v1286
        %v1288 = vrot.slane %v1280, %v1287
        %v1290 = vunpack.c.l.s4 1934713408
        %v1291 = vunpack.c.0.s8 %v1290
        %v1292 = vlaneseq
        %v1293 = vshrl.u32 %v1292, 7
        %v1294 = vsub.s32 %v1291, %v1293
        %v1295 = vrot.slane %v1281, %v1294
        %v1296 = vcombine.low %v1271, %v1279
        %v1297 = vcombine.high %v1271, %v1279
        %v1299 = vunpack.c.l.s4 1934713408
        %v1300 = vunpack.c.0.s8 %v1299
        %v1301 = vlaneseq
        %v1302 = vshrl.u32 %v1301, 7
        %v1303 = vsub.s32 %v1300, %v1302
        %v1304 = vrot.slane %v1296, %v1303
        %v1306 = vunpack.c.l.s4 1934713408
        %v1307 = vunpack.c.0.s8 %v1306
        %v1308 = vlaneseq
        %v1309 = vshrl.u32 %v1308, 7
        %v1310 = vsub.s32 %v1307, %v1309
        %v1311 = vrot.slane %v1297, %v1310
        %v1312 = vcombine.low %v1288, %v1304
        %v1313 = vcombine.high %v1288, %v1304
        %v1314 = vcombine.low %v1295, %v1311
        %v1315 = vcombine.high %v1295, %v1311
        %v1316 = vcombine.low %v1203, %v1210
        %v1318 = vunpack.c.l.s4 1983009808
        %v1319 = vunpack.c.0.s8 %v1318
        %v1320 = vlaneseq
        %v1321 = vshrl.u32 %v1320, 7
        %v1322 = vsub.s32 %v1319, %v1321
        %v1323 = vrot.slane %v1316, %v1322
        %v1324 = vcombine.low %v1227, %v1228
        %v1326 = vunpack.c.l.s4 1983009808
        %v1327 = vunpack.c.0.s8 %v1326
        %v1328 = vlaneseq
        %v1329 = vshrl.u32 %v1328, 7
        %v1330 = vsub.s32 %v1327, %v1329
        %v1331 = vrot.slane %v1324, %v1330
        %v1332 = vcombine.low %v1219, %v1226
        %v1334 = vunpack.c.l.s4 1983009808
        %v1335 = vunpack.c.0.s8 %v1334
        %v1336 = vlaneseq
        %v1337 = vshrl.u32 %v1336, 7
        %v1338 = vsub.s32 %v1335, %v1337
        %v1339 = vrot.slane %v1332, %v1338
        %v1340 = vcombine.low %v1229, %v1230
        %v1342 = vunpack.c.l.s4 1983009808
        %v1343 = vunpack.c.0.s8 %v1342
        %v1344 = vlaneseq
        %v1345 = vshrl.u32 %v1344, 7
        %v1346 = vsub.s32 %v1343, %v1345
        %v1347 = vrot.slane %v1340, %v1346
        %v1348 = vcombine.low %v1323, %v1331
        %v1349 = vcombine.high %v1323, %v1331
        %v1351 = vunpack.c.l.s4 1934713408
        %v1352 = vunpack.c.0.s8 %v1351
        %v1353 = vlaneseq
        %v1354 = vshrl.u32 %v1353, 7
        %v1355 = vsub.s32 %v1352, %v1354
        %v1356 = vrot.slane %v1348, %v1355
        %v1358 = vunpack.c.l.s4 1934713408
        %v1359 = vunpack.c.0.s8 %v1358
        %v1360 = vlaneseq
        %v1361 = vshrl.u32 %v1360, 7
        %v1362 = vsub.s32 %v1359, %v1361
        %v1363 = vrot.slane %v1349, %v1362
        %v1364 = vcombine.low %v1339, %v1347
        %v1365 = vcombine.high %v1339, %v1347
        %v1367 = vunpack.c.l.s4 1934713408
        %v1368 = vunpack.c.0.s8 %v1367
        %v1369 = vlaneseq
        %v1370 = vshrl.u32 %v1369, 7
        %v1371 = vsub.s32 %v1368, %v1370
        %v1372 = vrot.slane %v1364, %v1371
        %v1374 = vunpack.c.l.s4 1934713408
        %v1375 = vunpack.c.0.s8 %v1374
        %v1376 = vlaneseq
        %v1377 = vshrl.u32 %v1376, 7
        %v1378 = vsub.s32 %v1375, %v1377
        %v1379 = vrot.slane %v1365, %v1378
        %v1380 = vcombine.low %v1356, %v1372
        %v1381 = vcombine.high %v1356, %v1372
        %v1382 = vcombine.low %v1363, %v1379
        %v1383 = vcombine.high %v1363, %v1379
        %v1385 = vunpack.c.l.s4 1934713408
        %v1386 = vunpack.c.0.s8 %v1385
        %v1387 = vlaneseq
        %v1388 = vshrl.u32 %v1387, 7
        %v1389 = vsub.s32 %v1386, %v1388
        %v1390 = vrot.slane %v1247, %v1389
        %v1392 = vunpack.c.l.s4 1983009808
        %v1393 = vunpack.c.0.s8 %v1392
        %v1394 = vlaneseq
        %v1395 = vshrl.u32 %v1394, 7
        %v1396 = vsub.s32 %v1393, %v1395
        %v1397 = vrot.slane %v1390, %v1396
        %v1398 = vcombine.high %v1397, 0.0
        %v1400 = vunpack.c.l.s4 1934713408
        %v1401 = vunpack.c.0.s8 %v1400
        %v1402 = vlaneseq
        %v1403 = vshrl.u32 %v1402, 7
        %v1404 = vsub.s32 %v1401, %v1403
        %v1405 = vrot.slane %v1397, %v1404
        %v1407 = vunpack.c.l.s4 1934713408
        %v1408 = vunpack.c.0.s8 %v1407
        %v1409 = vlaneseq
        %v1410 = vshrl.u32 %v1409, 7
        %v1411 = vsub.s32 %v1408, %v1410
        %v1412 = vrot.slane %v1398, %v1411
        %v1413 = vcombine.high %v1405, 0.0
        %v1414 = vcombine.high %v1412, 0.0
        %v1415 = vpack.c.bf16 %v1380, %v1312
        %v1416 = vpack.c.bf16 %v1405, %v1405
        %v1417 = vpack.c.bf16 %v1381, %v1313
        %v1418 = vpack.c.bf16 %v1413, %v1413
        %v1419 = vpack.c.bf16 %v1382, %v1314
        %v1420 = vpack.c.bf16 %v1412, %v1412
        %v1421 = vpack.c.bf16 %v1383, %v1315
        %v1422 = vpack.c.bf16 %v1414, %v1414
        %1426 = vrot.lane.b32.xlu0 %v1049, 120
        %v1427 = vpop.permute.xlu0 %1426
        %1428 = vrot.lane.b32.xlu0 %v1052, 120
        %v1429 = vpop.permute.xlu0 %1428
        %1430 = vrot.lane.b32.xlu0 %v1057, 120
        %v1431 = vpop.permute.xlu0 %1430
        %1432 = vrot.lane.b32.xlu0 %v1049, 112
        %v1433 = vpop.permute.xlu0 %1432
        %1434 = vrot.lane.b32.xlu0 %v1052, 112
        %v1435 = vpop.permute.xlu0 %1434
        %1436 = vrot.lane.b32.xlu0 %v1057, 112
        %v1437 = vpop.permute.xlu0 %1436
        %1438 = vrot.lane.b32.xlu0 %v1049, 104
        %v1439 = vpop.permute.xlu0 %1438
        %1440 = vrot.lane.b32.xlu0 %v1052, 104
        %v1441 = vpop.permute.xlu0 %1440
        %1442 = vrot.lane.b32.xlu0 %v1057, 104
        %v1443 = vpop.permute.xlu0 %1442
        %1444 = vrot.lane.b32.xlu0 %v1049, 96
        %v1445 = vpop.permute.xlu0 %1444
        %1446 = vrot.lane.b32.xlu0 %v1052, 96
        %v1447 = vpop.permute.xlu0 %1446
        %1448 = vrot.lane.b32.xlu0 %v1057, 96
        %v1449 = vpop.permute.xlu0 %1448
        %1450 = vrot.lane.b32.xlu0 %v1427, 96
        %v1451 = vpop.permute.xlu0 %1450
        %1452 = vrot.lane.b32.xlu0 %v1429, 96
        %v1453 = vpop.permute.xlu0 %1452
        %1454 = vrot.lane.b32.xlu0 %v1431, 96
        %v1455 = vpop.permute.xlu0 %1454
        %1456 = vrot.lane.b32.xlu0 %v1433, 96
        %v1457 = vpop.permute.xlu0 %1456
        %1458 = vrot.lane.b32.xlu0 %v1435, 96
        %v1459 = vpop.permute.xlu0 %1458
        %1460 = vrot.lane.b32.xlu0 %v1437, 96
        %v1461 = vpop.permute.xlu0 %1460
        %1462 = vrot.lane.b32.xlu0 %v1439, 96
        %v1463 = vpop.permute.xlu0 %1462
        %1464 = vrot.lane.b32.xlu0 %v1441, 96
        %v1465 = vpop.permute.xlu0 %1464
        %1466 = vrot.lane.b32.xlu0 %v1443, 96
        %v1467 = vpop.permute.xlu0 %1466
        %v1480 = vcombine.low %v1445, %v1457
        %v1481 = vcombine.high %v1445, %v1457
        %v1483 = vunpack.c.l.s4 1983009808
        %v1484 = vunpack.c.0.s8 %v1483
        %v1485 = vlaneseq
        %v1486 = vshrl.u32 %v1485, 7
        %v1487 = vsub.s32 %v1484, %v1486
        %v1488 = vrot.slane %v1480, %v1487
        %v1490 = vunpack.c.l.s4 1983009808
        %v1491 = vunpack.c.0.s8 %v1490
        %v1492 = vlaneseq
        %v1493 = vshrl.u32 %v1492, 7
        %v1494 = vsub.s32 %v1491, %v1493
        %v1495 = vrot.slane %v1481, %v1494
        %v1496 = vcombine.low %v1451, %v1463
        %v1497 = vcombine.high %v1451, %v1463
        %v1499 = vunpack.c.l.s4 1983009808
        %v1500 = vunpack.c.0.s8 %v1499
        %v1501 = vlaneseq
        %v1502 = vshrl.u32 %v1501, 7
        %v1503 = vsub.s32 %v1500, %v1502
        %v1504 = vrot.slane %v1496, %v1503
        %v1506 = vunpack.c.l.s4 1983009808
        %v1507 = vunpack.c.0.s8 %v1506
        %v1508 = vlaneseq
        %v1509 = vshrl.u32 %v1508, 7
        %v1510 = vsub.s32 %v1507, %v1509
        %v1511 = vrot.slane %v1497, %v1510
        %v1512 = vcombine.low %v1488, %v1504
        %v1513 = vcombine.high %v1488, %v1504
        %v1515 = vunpack.c.l.s4 1934713408
        %v1516 = vunpack.c.0.s8 %v1515
        %v1517 = vlaneseq
        %v1518 = vshrl.u32 %v1517, 7
        %v1519 = vsub.s32 %v1516, %v1518
        %v1520 = vrot.slane %v1512, %v1519
        %v1522 = vunpack.c.l.s4 1934713408
        %v1523 = vunpack.c.0.s8 %v1522
        %v1524 = vlaneseq
        %v1525 = vshrl.u32 %v1524, 7
        %v1526 = vsub.s32 %v1523, %v1525
        %v1527 = vrot.slane %v1513, %v1526
        %v1528 = vcombine.low %v1495, %v1511
        %v1529 = vcombine.high %v1495, %v1511
        %v1531 = vunpack.c.l.s4 1934713408
        %v1532 = vunpack.c.0.s8 %v1531
        %v1533 = vlaneseq
        %v1534 = vshrl.u32 %v1533, 7
        %v1535 = vsub.s32 %v1532, %v1534
        %v1536 = vrot.slane %v1528, %v1535
        %v1538 = vunpack.c.l.s4 1934713408
        %v1539 = vunpack.c.0.s8 %v1538
        %v1540 = vlaneseq
        %v1541 = vshrl.u32 %v1540, 7
        %v1542 = vsub.s32 %v1539, %v1541
        %v1543 = vrot.slane %v1529, %v1542
        %v1544 = vcombine.high %v1520, 0.0
        %v1545 = vcombine.high %v1527, 0.0
        %v1546 = vcombine.high %v1536, 0.0
        %v1547 = vcombine.high %v1543, 0.0
        %v1548 = vcombine.low %v1447, %v1459
        %v1549 = vcombine.high %v1447, %v1459
        %v1551 = vunpack.c.l.s4 1983009808
        %v1552 = vunpack.c.0.s8 %v1551
        %v1553 = vlaneseq
        %v1554 = vshrl.u32 %v1553, 7
        %v1555 = vsub.s32 %v1552, %v1554
        %v1556 = vrot.slane %v1548, %v1555
        %v1558 = vunpack.c.l.s4 1983009808
        %v1559 = vunpack.c.0.s8 %v1558
        %v1560 = vlaneseq
        %v1561 = vshrl.u32 %v1560, 7
        %v1562 = vsub.s32 %v1559, %v1561
        %v1563 = vrot.slane %v1549, %v1562
        %v1564 = vcombine.low %v1453, %v1465
        %v1565 = vcombine.high %v1453, %v1465
        %v1567 = vunpack.c.l.s4 1983009808
        %v1568 = vunpack.c.0.s8 %v1567
        %v1569 = vlaneseq
        %v1570 = vshrl.u32 %v1569, 7
        %v1571 = vsub.s32 %v1568, %v1570
        %v1572 = vrot.slane %v1564, %v1571
        %v1574 = vunpack.c.l.s4 1983009808
        %v1575 = vunpack.c.0.s8 %v1574
        %v1576 = vlaneseq
        %v1577 = vshrl.u32 %v1576, 7
        %v1578 = vsub.s32 %v1575, %v1577
        %v1579 = vrot.slane %v1565, %v1578
        %v1580 = vcombine.low %v1556, %v1572
        %v1581 = vcombine.high %v1556, %v1572
        %v1583 = vunpack.c.l.s4 1934713408
        %v1584 = vunpack.c.0.s8 %v1583
        %v1585 = vlaneseq
        %v1586 = vshrl.u32 %v1585, 7
        %v1587 = vsub.s32 %v1584, %v1586
        %v1588 = vrot.slane %v1580, %v1587
        %v1590 = vunpack.c.l.s4 1934713408
        %v1591 = vunpack.c.0.s8 %v1590
        %v1592 = vlaneseq
        %v1593 = vshrl.u32 %v1592, 7
        %v1594 = vsub.s32 %v1591, %v1593
        %v1595 = vrot.slane %v1581, %v1594
        %v1596 = vcombine.low %v1563, %v1579
        %v1597 = vcombine.high %v1563, %v1579
        %v1599 = vunpack.c.l.s4 1934713408
        %v1600 = vunpack.c.0.s8 %v1599
        %v1601 = vlaneseq
        %v1602 = vshrl.u32 %v1601, 7
        %v1603 = vsub.s32 %v1600, %v1602
        %v1604 = vrot.slane %v1596, %v1603
        %v1606 = vunpack.c.l.s4 1934713408
        %v1607 = vunpack.c.0.s8 %v1606
        %v1608 = vlaneseq
        %v1609 = vshrl.u32 %v1608, 7
        %v1610 = vsub.s32 %v1607, %v1609
        %v1611 = vrot.slane %v1597, %v1610
        %v1612 = vcombine.high %v1588, 0.0
        %v1613 = vcombine.high %v1595, 0.0
        %v1614 = vcombine.high %v1604, 0.0
        %v1615 = vcombine.high %v1611, 0.0
        %v1616 = vcombine.low %v1449, %v1461
        %v1618 = vunpack.c.l.s4 1983009808
        %v1619 = vunpack.c.0.s8 %v1618
        %v1620 = vlaneseq
        %v1621 = vshrl.u32 %v1620, 7
        %v1622 = vsub.s32 %v1619, %v1621
        %v1623 = vrot.slane %v1616, %v1622
        %v1624 = vcombine.low %v1455, %v1467
        %v1626 = vunpack.c.l.s4 1983009808
        %v1627 = vunpack.c.0.s8 %v1626
        %v1628 = vlaneseq
        %v1629 = vshrl.u32 %v1628, 7
        %v1630 = vsub.s32 %v1627, %v1629
        %v1631 = vrot.slane %v1624, %v1630
        %v1632 = vcombine.low %v1623, %v1631
        %v1633 = vcombine.low %v1520, %v1527
        %v1635 = vunpack.c.l.s4 1983009808
        %v1636 = vunpack.c.0.s8 %v1635
        %v1637 = vlaneseq
        %v1638 = vshrl.u32 %v1637, 7
        %v1639 = vsub.s32 %v1636, %v1638
        %v1640 = vrot.slane %v1633, %v1639
        %v1641 = vcombine.low %v1544, %v1545
        %v1643 = vunpack.c.l.s4 1983009808
        %v1644 = vunpack.c.0.s8 %v1643
        %v1645 = vlaneseq
        %v1646 = vshrl.u32 %v1645, 7
        %v1647 = vsub.s32 %v1644, %v1646
        %v1648 = vrot.slane %v1641, %v1647
        %v1649 = vcombine.low %v1536, %v1543
        %v1651 = vunpack.c.l.s4 1983009808
        %v1652 = vunpack.c.0.s8 %v1651
        %v1653 = vlaneseq
        %v1654 = vshrl.u32 %v1653, 7
        %v1655 = vsub.s32 %v1652, %v1654
        %v1656 = vrot.slane %v1649, %v1655
        %v1657 = vcombine.low %v1546, %v1547
        %v1659 = vunpack.c.l.s4 1983009808
        %v1660 = vunpack.c.0.s8 %v1659
        %v1661 = vlaneseq
        %v1662 = vshrl.u32 %v1661, 7
        %v1663 = vsub.s32 %v1660, %v1662
        %v1664 = vrot.slane %v1657, %v1663
        %v1665 = vcombine.low %v1640, %v1648
        %v1666 = vcombine.high %v1640, %v1648
        %v1668 = vunpack.c.l.s4 1934713408
        %v1669 = vunpack.c.0.s8 %v1668
        %v1670 = vlaneseq
        %v1671 = vshrl.u32 %v1670, 7
        %v1672 = vsub.s32 %v1669, %v1671
        %v1673 = vrot.slane %v1665, %v1672
        %v1675 = vunpack.c.l.s4 1934713408
        %v1676 = vunpack.c.0.s8 %v1675
        %v1677 = vlaneseq
        %v1678 = vshrl.u32 %v1677, 7
        %v1679 = vsub.s32 %v1676, %v1678
        %v1680 = vrot.slane %v1666, %v1679
        %v1681 = vcombine.low %v1656, %v1664
        %v1682 = vcombine.high %v1656, %v1664
        %v1684 = vunpack.c.l.s4 1934713408
        %v1685 = vunpack.c.0.s8 %v1684
        %v1686 = vlaneseq
        %v1687 = vshrl.u32 %v1686, 7
        %v1688 = vsub.s32 %v1685, %v1687
        %v1689 = vrot.slane %v1681, %v1688
        %v1691 = vunpack.c.l.s4 1934713408
        %v1692 = vunpack.c.0.s8 %v1691
        %v1693 = vlaneseq
        %v1694 = vshrl.u32 %v1693, 7
        %v1695 = vsub.s32 %v1692, %v1694
        %v1696 = vrot.slane %v1682, %v1695
        %v1697 = vcombine.low %v1673, %v1689
        %v1698 = vcombine.high %v1673, %v1689
        %v1699 = vcombine.low %v1680, %v1696
        %v1700 = vcombine.high %v1680, %v1696
        %v1701 = vcombine.low %v1588, %v1595
        %v1703 = vunpack.c.l.s4 1983009808
        %v1704 = vunpack.c.0.s8 %v1703
        %v1705 = vlaneseq
        %v1706 = vshrl.u32 %v1705, 7
        %v1707 = vsub.s32 %v1704, %v1706
        %v1708 = vrot.slane %v1701, %v1707
        %v1709 = vcombine.low %v1612, %v1613
        %v1711 = vunpack.c.l.s4 1983009808
        %v1712 = vunpack.c.0.s8 %v1711
        %v1713 = vlaneseq
        %v1714 = vshrl.u32 %v1713, 7
        %v1715 = vsub.s32 %v1712, %v1714
        %v1716 = vrot.slane %v1709, %v1715
        %v1717 = vcombine.low %v1604, %v1611
        %v1719 = vunpack.c.l.s4 1983009808
        %v1720 = vunpack.c.0.s8 %v1719
        %v1721 = vlaneseq
        %v1722 = vshrl.u32 %v1721, 7
        %v1723 = vsub.s32 %v1720, %v1722
        %v1724 = vrot.slane %v1717, %v1723
        %v1725 = vcombine.low %v1614, %v1615
        %v1727 = vunpack.c.l.s4 1983009808
        %v1728 = vunpack.c.0.s8 %v1727
        %v1729 = vlaneseq
        %v1730 = vshrl.u32 %v1729, 7
        %v1731 = vsub.s32 %v1728, %v1730
        %v1732 = vrot.slane %v1725, %v1731
        %v1733 = vcombine.low %v1708, %v1716
        %v1734 = vcombine.high %v1708, %v1716
        %v1736 = vunpack.c.l.s4 1934713408
        %v1737 = vunpack.c.0.s8 %v1736
        %v1738 = vlaneseq
        %v1739 = vshrl.u32 %v1738, 7
        %v1740 = vsub.s32 %v1737, %v1739
        %v1741 = vrot.slane %v1733, %v1740
        %v1743 = vunpack.c.l.s4 1934713408
        %v1744 = vunpack.c.0.s8 %v1743
        %v1745 = vlaneseq
        %v1746 = vshrl.u32 %v1745, 7
        %v1747 = vsub.s32 %v1744, %v1746
        %v1748 = vrot.slane %v1734, %v1747
        %v1749 = vcombine.low %v1724, %v1732
        %v1750 = vcombine.high %v1724, %v1732
        %v1752 = vunpack.c.l.s4 1934713408
        %v1753 = vunpack.c.0.s8 %v1752
        %v1754 = vlaneseq
        %v1755 = vshrl.u32 %v1754, 7
        %v1756 = vsub.s32 %v1753, %v1755
        %v1757 = vrot.slane %v1749, %v1756
        %v1759 = vunpack.c.l.s4 1934713408
        %v1760 = vunpack.c.0.s8 %v1759
        %v1761 = vlaneseq
        %v1762 = vshrl.u32 %v1761, 7
        %v1763 = vsub.s32 %v1760, %v1762
        %v1764 = vrot.slane %v1750, %v1763
        %v1765 = vcombine.low %v1741, %v1757
        %v1766 = vcombine.high %v1741, %v1757
        %v1767 = vcombine.low %v1748, %v1764
        %v1768 = vcombine.high %v1748, %v1764
        %v1770 = vunpack.c.l.s4 1934713408
        %v1771 = vunpack.c.0.s8 %v1770
        %v1772 = vlaneseq
        %v1773 = vshrl.u32 %v1772, 7
        %v1774 = vsub.s32 %v1771, %v1773
        %v1775 = vrot.slane %v1632, %v1774
        %v1777 = vunpack.c.l.s4 1983009808
        %v1778 = vunpack.c.0.s8 %v1777
        %v1779 = vlaneseq
        %v1780 = vshrl.u32 %v1779, 7
        %v1781 = vsub.s32 %v1778, %v1780
        %v1782 = vrot.slane %v1775, %v1781
        %v1783 = vcombine.high %v1782, 0.0
        %v1785 = vunpack.c.l.s4 1934713408
        %v1786 = vunpack.c.0.s8 %v1785
        %v1787 = vlaneseq
        %v1788 = vshrl.u32 %v1787, 7
        %v1789 = vsub.s32 %v1786, %v1788
        %v1790 = vrot.slane %v1782, %v1789
        %v1792 = vunpack.c.l.s4 1934713408
        %v1793 = vunpack.c.0.s8 %v1792
        %v1794 = vlaneseq
        %v1795 = vshrl.u32 %v1794, 7
        %v1796 = vsub.s32 %v1793, %v1795
        %v1797 = vrot.slane %v1783, %v1796
        %v1798 = vcombine.high %v1790, 0.0
        %v1799 = vcombine.high %v1797, 0.0
        %v1800 = vpack.c.bf16 %v1765, %v1697
        %v1801 = vpack.c.bf16 %v1790, %v1790
        %v1802 = vpack.c.bf16 %v1766, %v1698
        %v1803 = vpack.c.bf16 %v1798, %v1798
        %v1804 = vpack.c.bf16 %v1767, %v1699
        %v1805 = vpack.c.bf16 %v1797, %v1797
        %v1806 = vpack.c.bf16 %v1768, %v1700
        %v1807 = vpack.c.bf16 %v1799, %v1799
        %1808 = vrot.lane.b32.xlu0 %v1049, 64
        %v1809 = vpop.permute.xlu0 %1808
        %1810 = vrot.lane.b32.xlu0 %v1052, 64
        %v1811 = vpop.permute.xlu0 %1810
        %1812 = vrot.lane.b32.xlu0 %v1057, 64
        %v1813 = vpop.permute.xlu0 %1812
        %1814 = vrot.lane.b32.xlu0 %v1427, 64
        %v1815 = vpop.permute.xlu0 %1814
        %1816 = vrot.lane.b32.xlu0 %v1429, 64
        %v1817 = vpop.permute.xlu0 %1816
        %1818 = vrot.lane.b32.xlu0 %v1431, 64
        %v1819 = vpop.permute.xlu0 %1818
        %1820 = vrot.lane.b32.xlu0 %v1433, 64
        %v1821 = vpop.permute.xlu0 %1820
        %1822 = vrot.lane.b32.xlu0 %v1435, 64
        %v1823 = vpop.permute.xlu0 %1822
        %1824 = vrot.lane.b32.xlu0 %v1437, 64
        %v1825 = vpop.permute.xlu0 %1824
        %1826 = vrot.lane.b32.xlu0 %v1439, 64
        %v1827 = vpop.permute.xlu0 %1826
        %1828 = vrot.lane.b32.xlu0 %v1441, 64
        %v1829 = vpop.permute.xlu0 %1828
        %1830 = vrot.lane.b32.xlu0 %v1443, 64
        %v1831 = vpop.permute.xlu0 %1830
        %v1844 = vcombine.low %v1809, %v1821
        %v1845 = vcombine.high %v1809, %v1821
        %v1847 = vunpack.c.l.s4 1983009808
        %v1848 = vunpack.c.0.s8 %v1847
        %v1849 = vlaneseq
        %v1850 = vshrl.u32 %v1849, 7
        %v1851 = vsub.s32 %v1848, %v1850
        %v1852 = vrot.slane %v1844, %v1851
        %v1854 = vunpack.c.l.s4 1983009808
        %v1855 = vunpack.c.0.s8 %v1854
        %v1856 = vlaneseq
        %v1857 = vshrl.u32 %v1856, 7
        %v1858 = vsub.s32 %v1855, %v1857
        %v1859 = vrot.slane %v1845, %v1858
        %v1860 = vcombine.low %v1815, %v1827
        %v1861 = vcombine.high %v1815, %v1827
        %v1863 = vunpack.c.l.s4 1983009808
        %v1864 = vunpack.c.0.s8 %v1863
        %v1865 = vlaneseq
        %v1866 = vshrl.u32 %v1865, 7
        %v1867 = vsub.s32 %v1864, %v1866
        %v1868 = vrot.slane %v1860, %v1867
        %v1870 = vunpack.c.l.s4 1983009808
        %v1871 = vunpack.c.0.s8 %v1870
        %v1872 = vlaneseq
        %v1873 = vshrl.u32 %v1872, 7
        %v1874 = vsub.s32 %v1871, %v1873
        %v1875 = vrot.slane %v1861, %v1874
        %v1876 = vcombine.low %v1852, %v1868
        %v1877 = vcombine.high %v1852, %v1868
        %v1879 = vunpack.c.l.s4 1934713408
        %v1880 = vunpack.c.0.s8 %v1879
        %v1881 = vlaneseq
        %v1882 = vshrl.u32 %v1881, 7
        %v1883 = vsub.s32 %v1880, %v1882
        %v1884 = vrot.slane %v1876, %v1883
        %v1886 = vunpack.c.l.s4 1934713408
        %v1887 = vunpack.c.0.s8 %v1886
        %v1888 = vlaneseq
        %v1889 = vshrl.u32 %v1888, 7
        %v1890 = vsub.s32 %v1887, %v1889
        %v1891 = vrot.slane %v1877, %v1890
        %v1892 = vcombine.low %v1859, %v1875
        %v1893 = vcombine.high %v1859, %v1875
        %v1895 = vunpack.c.l.s4 1934713408
        %v1896 = vunpack.c.0.s8 %v1895
        %v1897 = vlaneseq
        %v1898 = vshrl.u32 %v1897, 7
        %v1899 = vsub.s32 %v1896, %v1898
        %v1900 = vrot.slane %v1892, %v1899
        %v1902 = vunpack.c.l.s4 1934713408
        %v1903 = vunpack.c.0.s8 %v1902
        %v1904 = vlaneseq
        %v1905 = vshrl.u32 %v1904, 7
        %v1906 = vsub.s32 %v1903, %v1905
        %v1907 = vrot.slane %v1893, %v1906
        %v1908 = vcombine.high %v1884, 0.0
        %v1909 = vcombine.high %v1891, 0.0
        %v1910 = vcombine.high %v1900, 0.0
        %v1911 = vcombine.high %v1907, 0.0
        %v1912 = vcombine.low %v1811, %v1823
        %v1913 = vcombine.high %v1811, %v1823
        %v1915 = vunpack.c.l.s4 1983009808
        %v1916 = vunpack.c.0.s8 %v1915
        %v1917 = vlaneseq
        %v1918 = vshrl.u32 %v1917, 7
        %v1919 = vsub.s32 %v1916, %v1918
        %v1920 = vrot.slane %v1912, %v1919
        %v1922 = vunpack.c.l.s4 1983009808
        %v1923 = vunpack.c.0.s8 %v1922
        %v1924 = vlaneseq
        %v1925 = vshrl.u32 %v1924, 7
        %v1926 = vsub.s32 %v1923, %v1925
        %v1927 = vrot.slane %v1913, %v1926
        %v1928 = vcombine.low %v1817, %v1829
        %v1929 = vcombine.high %v1817, %v1829
        %v1931 = vunpack.c.l.s4 1983009808
        %v1932 = vunpack.c.0.s8 %v1931
        %v1933 = vlaneseq
        %v1934 = vshrl.u32 %v1933, 7
        %v1935 = vsub.s32 %v1932, %v1934
        %v1936 = vrot.slane %v1928, %v1935
        %v1938 = vunpack.c.l.s4 1983009808
        %v1939 = vunpack.c.0.s8 %v1938
        %v1940 = vlaneseq
        %v1941 = vshrl.u32 %v1940, 7
        %v1942 = vsub.s32 %v1939, %v1941
        %v1943 = vrot.slane %v1929, %v1942
        %v1944 = vcombine.low %v1920, %v1936
        %v1945 = vcombine.high %v1920, %v1936
        %v1947 = vunpack.c.l.s4 1934713408
        %v1948 = vunpack.c.0.s8 %v1947
        %v1949 = vlaneseq
        %v1950 = vshrl.u32 %v1949, 7
        %v1951 = vsub.s32 %v1948, %v1950
        %v1952 = vrot.slane %v1944, %v1951
        %v1954 = vunpack.c.l.s4 1934713408
        %v1955 = vunpack.c.0.s8 %v1954
        %v1956 = vlaneseq
        %v1957 = vshrl.u32 %v1956, 7
        %v1958 = vsub.s32 %v1955, %v1957
        %v1959 = vrot.slane %v1945, %v1958
        %v1960 = vcombine.low %v1927, %v1943
        %v1961 = vcombine.high %v1927, %v1943
        %v1963 = vunpack.c.l.s4 1934713408
        %v1964 = vunpack.c.0.s8 %v1963
        %v1965 = vlaneseq
        %v1966 = vshrl.u32 %v1965, 7
        %v1967 = vsub.s32 %v1964, %v1966
        %v1968 = vrot.slane %v1960, %v1967
        %v1970 = vunpack.c.l.s4 1934713408
        %v1971 = vunpack.c.0.s8 %v1970
        %v1972 = vlaneseq
        %v1973 = vshrl.u32 %v1972, 7
        %v1974 = vsub.s32 %v1971, %v1973
        %v1975 = vrot.slane %v1961, %v1974
        %v1976 = vcombine.high %v1952, 0.0
        %v1977 = vcombine.high %v1959, 0.0
        %v1978 = vcombine.high %v1968, 0.0
        %v1979 = vcombine.high %v1975, 0.0
        %v1980 = vcombine.low %v1813, %v1825
        %v1982 = vunpack.c.l.s4 1983009808
        %v1983 = vunpack.c.0.s8 %v1982
        %v1984 = vlaneseq
        %v1985 = vshrl.u32 %v1984, 7
        %v1986 = vsub.s32 %v1983, %v1985
        %v1987 = vrot.slane %v1980, %v1986
        %v1988 = vcombine.low %v1819, %v1831
        %v1990 = vunpack.c.l.s4 1983009808
        %v1991 = vunpack.c.0.s8 %v1990
        %v1992 = vlaneseq
        %v1993 = vshrl.u32 %v1992, 7
        %v1994 = vsub.s32 %v1991, %v1993
        %v1995 = vrot.slane %v1988, %v1994
        %v1996 = vcombine.low %v1987, %v1995
        %v1997 = vcombine.low %v1884, %v1891
        %v1999 = vunpack.c.l.s4 1983009808
        %v2000 = vunpack.c.0.s8 %v1999
        %v2001 = vlaneseq
        %v2002 = vshrl.u32 %v2001, 7
        %v2003 = vsub.s32 %v2000, %v2002
        %v2004 = vrot.slane %v1997, %v2003
        %v2005 = vcombine.low %v1908, %v1909
        %v2007 = vunpack.c.l.s4 1983009808
        %v2008 = vunpack.c.0.s8 %v2007
        %v2009 = vlaneseq
        %v2010 = vshrl.u32 %v2009, 7
        %v2011 = vsub.s32 %v2008, %v2010
        %v2012 = vrot.slane %v2005, %v2011
        %v2013 = vcombine.low %v1900, %v1907
        %v2015 = vunpack.c.l.s4 1983009808
        %v2016 = vunpack.c.0.s8 %v2015
        %v2017 = vlaneseq
        %v2018 = vshrl.u32 %v2017, 7
        %v2019 = vsub.s32 %v2016, %v2018
        %v2020 = vrot.slane %v2013, %v2019
        %v2021 = vcombine.low %v1910, %v1911
        %v2023 = vunpack.c.l.s4 1983009808
        %v2024 = vunpack.c.0.s8 %v2023
        %v2025 = vlaneseq
        %v2026 = vshrl.u32 %v2025, 7
        %v2027 = vsub.s32 %v2024, %v2026
        %v2028 = vrot.slane %v2021, %v2027
        %v2029 = vcombine.low %v2004, %v2012
        %v2030 = vcombine.high %v2004, %v2012
        %v2032 = vunpack.c.l.s4 1934713408
        %v2033 = vunpack.c.0.s8 %v2032
        %v2034 = vlaneseq
        %v2035 = vshrl.u32 %v2034, 7
        %v2036 = vsub.s32 %v2033, %v2035
        %v2037 = vrot.slane %v2029, %v2036
        %v2039 = vunpack.c.l.s4 1934713408
        %v2040 = vunpack.c.0.s8 %v2039
        %v2041 = vlaneseq
        %v2042 = vshrl.u32 %v2041, 7
        %v2043 = vsub.s32 %v2040, %v2042
        %v2044 = vrot.slane %v2030, %v2043
        %v2045 = vcombine.low %v2020, %v2028
        %v2046 = vcombine.high %v2020, %v2028
        %v2048 = vunpack.c.l.s4 1934713408
        %v2049 = vunpack.c.0.s8 %v2048
        %v2050 = vlaneseq
        %v2051 = vshrl.u32 %v2050, 7
        %v2052 = vsub.s32 %v2049, %v2051
        %v2053 = vrot.slane %v2045, %v2052
        %v2055 = vunpack.c.l.s4 1934713408
        %v2056 = vunpack.c.0.s8 %v2055
        %v2057 = vlaneseq
        %v2058 = vshrl.u32 %v2057, 7
        %v2059 = vsub.s32 %v2056, %v2058
        %v2060 = vrot.slane %v2046, %v2059
        %v2061 = vcombine.low %v2037, %v2053
        %v2062 = vcombine.high %v2037, %v2053
        %v2063 = vcombine.low %v2044, %v2060
        %v2064 = vcombine.high %v2044, %v2060
        %v2065 = vcombine.low %v1952, %v1959
        %v2067 = vunpack.c.l.s4 1983009808
        %v2068 = vunpack.c.0.s8 %v2067
        %v2069 = vlaneseq
        %v2070 = vshrl.u32 %v2069, 7
        %v2071 = vsub.s32 %v2068, %v2070
        %v2072 = vrot.slane %v2065, %v2071
        %v2073 = vcombine.low %v1976, %v1977
        %v2075 = vunpack.c.l.s4 1983009808
        %v2076 = vunpack.c.0.s8 %v2075
        %v2077 = vlaneseq
        %v2078 = vshrl.u32 %v2077, 7
        %v2079 = vsub.s32 %v2076, %v2078
        %v2080 = vrot.slane %v2073, %v2079
        %v2081 = vcombine.low %v1968, %v1975
        %v2083 = vunpack.c.l.s4 1983009808
        %v2084 = vunpack.c.0.s8 %v2083
        %v2085 = vlaneseq
        %v2086 = vshrl.u32 %v2085, 7
        %v2087 = vsub.s32 %v2084, %v2086
        %v2088 = vrot.slane %v2081, %v2087
        %v2089 = vcombine.low %v1978, %v1979
        %v2091 = vunpack.c.l.s4 1983009808
        %v2092 = vunpack.c.0.s8 %v2091
        %v2093 = vlaneseq
        %v2094 = vshrl.u32 %v2093, 7
        %v2095 = vsub.s32 %v2092, %v2094
        %v2096 = vrot.slane %v2089, %v2095
        %v2097 = vcombine.low %v2072, %v2080
        %v2098 = vcombine.high %v2072, %v2080
        %v2100 = vunpack.c.l.s4 1934713408
        %v2101 = vunpack.c.0.s8 %v2100
        %v2102 = vlaneseq
        %v2103 = vshrl.u32 %v2102, 7
        %v2104 = vsub.s32 %v2101, %v2103
        %v2105 = vrot.slane %v2097, %v2104
        %v2107 = vunpack.c.l.s4 1934713408
        %v2108 = vunpack.c.0.s8 %v2107
        %v2109 = vlaneseq
        %v2110 = vshrl.u32 %v2109, 7
        %v2111 = vsub.s32 %v2108, %v2110
        %v2112 = vrot.slane %v2098, %v2111
        %v2113 = vcombine.low %v2088, %v2096
        %v2114 = vcombine.high %v2088, %v2096
        %v2116 = vunpack.c.l.s4 1934713408
        %v2117 = vunpack.c.0.s8 %v2116
        %v2118 = vlaneseq
        %v2119 = vshrl.u32 %v2118, 7
        %v2120 = vsub.s32 %v2117, %v2119
        %v2121 = vrot.slane %v2113, %v2120
        %v2123 = vunpack.c.l.s4 1934713408
        %v2124 = vunpack.c.0.s8 %v2123
        %v2125 = vlaneseq
        %v2126 = vshrl.u32 %v2125, 7
        %v2127 = vsub.s32 %v2124, %v2126
        %v2128 = vrot.slane %v2114, %v2127
        %v2129 = vcombine.low %v2105, %v2121
        %v2130 = vcombine.high %v2105, %v2121
        %v2131 = vcombine.low %v2112, %v2128
        %v2132 = vcombine.high %v2112, %v2128
        %v2134 = vunpack.c.l.s4 1934713408
        %v2135 = vunpack.c.0.s8 %v2134
        %v2136 = vlaneseq
        %v2137 = vshrl.u32 %v2136, 7
        %v2138 = vsub.s32 %v2135, %v2137
        %v2139 = vrot.slane %v1996, %v2138
        %v2141 = vunpack.c.l.s4 1983009808
        %v2142 = vunpack.c.0.s8 %v2141
        %v2143 = vlaneseq
        %v2144 = vshrl.u32 %v2143, 7
        %v2145 = vsub.s32 %v2142, %v2144
        %v2146 = vrot.slane %v2139, %v2145
        %v2147 = vcombine.high %v2146, 0.0
        %v2149 = vunpack.c.l.s4 1934713408
        %v2150 = vunpack.c.0.s8 %v2149
        %v2151 = vlaneseq
        %v2152 = vshrl.u32 %v2151, 7
        %v2153 = vsub.s32 %v2150, %v2152
        %v2154 = vrot.slane %v2146, %v2153
        %v2156 = vunpack.c.l.s4 1934713408
        %v2157 = vunpack.c.0.s8 %v2156
        %v2158 = vlaneseq
        %v2159 = vshrl.u32 %v2158, 7
        %v2160 = vsub.s32 %v2157, %v2159
        %v2161 = vrot.slane %v2147, %v2160
        %v2162 = vcombine.high %v2154, 0.0
        %v2163 = vcombine.high %v2161, 0.0
        %v2164 = vpack.c.bf16 %v2129, %v2061
        %v2165 = vpack.c.bf16 %v2154, %v2154
        %v2166 = vpack.c.bf16 %v2130, %v2062
        %v2167 = vpack.c.bf16 %v2162, %v2162
        %v2168 = vpack.c.bf16 %v2131, %v2063
        %v2169 = vpack.c.bf16 %v2161, %v2161
        %v2170 = vpack.c.bf16 %v2132, %v2064
        %v2171 = vpack.c.bf16 %v2163, %v2163
        %vm2172 = vcmask 64512
        %v2174 = vsel %vm2172, %v1415, 0
        %v2177 = vsel %vm2172, %v1416, 0
        %v2180 = vsel %vm2172, %v1800, 0
        %v2183 = vsel %vm2172, %v1801, 0
        %2185 = vmatprep.subr.bf16.mxu0 0
        %2186 = vmatpush1.bf16.xpose.msra.mxu0 %v2180
        %2187 = vmatprep.subr.bf16.mxu0 0
        %2188 = vmatpush1.bf16.xpose.msra.mxu0 %v2183
        %2189 = vmatprep.subr.bf16.mxu0 0
        %2190 = vmatpush1.bf16.xpose.msra.mxu0 0
        %2191 = vmatprep.subr.bf16.mxu0 0
        %2192 = vmatpush1.bf16.xpose.msra.mxu0 0
        %2193 = vmatprep.subr.bf16.mxu0 0
        %2194 = vmatpush1.bf16.xpose.msra.mxu0 0
        %2195 = vmatprep.subr.bf16.mxu0 0
        %2196 = vmatpush1.bf16.xpose.msra.mxu0 0
        %2197 = vmatprep.subr.bf16.mxu0 0
        %2198 = vmatpush1.bf16.xpose.msra.mxu0 0
        %2199 = vmatprep.subr.bf16.mxu0 0
        %2200 = vmatpush1.bf16.xpose.msra.mxu0 0
        %2201 = vmatprep.subr.bf16.mxu0 0
        %2202 = vmatpush1.bf16.xpose.msra.mxu0 0
        %2203 = vmatprep.subr.bf16.mxu0 0
        %2204 = vmatpush1.bf16.xpose.msra.mxu0 0
        %2205 = vmatprep.subr.bf16.mxu0 0
        %2206 = vmatpush1.bf16.xpose.msra.mxu0 0
        %2207 = vmatprep.subr.bf16.mxu0 0
        %2208 = vmatpush1.bf16.xpose.msra.mxu0 0
        %2209 = vmatprep.subr.bf16.mxu0 0
        %2210 = vmatpush1.bf16.xpose.msra.mxu0 0
        %2211 = vmatprep.subr.bf16.mxu0 0
        %2212 = vmatpush1.bf16.xpose.msra.mxu0 0
        %2213 = vmatprep.subr.bf16.mxu0 0
        %2214 = vmatpush1.bf16.xpose.msra.mxu0 0
        %2215 = vmatprep.subr.bf16.mxu0 0
        %2216 = vmatpush1.bf16.xpose.msra.mxu0 0
        %2217 = vmatprep.mubr.bf16.mxu0 0
        %2218 = vmatmul.mubr.bf16.gmra.mrb[0].mxu0 %v2174
        %v2219 = vpop.f32.mrb[0].mxu0
        %v2220 = vadd.f32 0.0, %v2219
        %v2221 = vpop.f32.mrb[0].mxu0
        %v2222 = vpop.f32.mrb[0].mxu0
        %v2223 = vadd.f32 0.0, %v2222
        %v2224 = vpop.f32.mrb[0].mxu0
        %2225 = vmatprep.mubr.bf16.mxu0 0
        %2226 = vmatmul.mubr.bf16.gmra.mrb[0].mxu0 %v2177
        %v2227 = vpop.f32.mrb[0].mxu0
        %v2228 = vadd.f32 0.0, %v2227
        %v2229 = vpop.f32.mrb[0].mxu0
        %v2230 = vpop.f32.mrb[0].mxu0
        %v2231 = vpop.f32.mrb[0].mxu0
        %2232 = vdwg.mxu0
        %v2234 = vsel %vm2172, %v1417, 0
        %v2237 = vsel %vm2172, %v1418, 0
        %v2240 = vsel %vm2172, %v1802, 0
        %v2243 = vsel %vm2172, %v1803, 0
        %2245 = vmatprep.subr.bf16.mxu0 0
        %2246 = vmatpush1.bf16.xpose.msra.mxu0 %v2240
        %2247 = vmatprep.subr.bf16.mxu0 0
        %2248 = vmatpush1.bf16.xpose.msra.mxu0 %v2243
        %2249 = vmatprep.subr.bf16.mxu0 0
        %2250 = vmatpush1.bf16.xpose.msra.mxu0 0
        %2251 = vmatprep.subr.bf16.mxu0 0
        %2252 = vmatpush1.bf16.xpose.msra.mxu0 0
        %2253 = vmatprep.subr.bf16.mxu0 0
        %2254 = vmatpush1.bf16.xpose.msra.mxu0 0
        %2255 = vmatprep.subr.bf16.mxu0 0
        %2256 = vmatpush1.bf16.xpose.msra.mxu0 0
        %2257 = vmatprep.subr.bf16.mxu0 0
        %2258 = vmatpush1.bf16.xpose.msra.mxu0 0
        %2259 = vmatprep.subr.bf16.mxu0 0
        %2260 = vmatpush1.bf16.xpose.msra.mxu0 0
        %2261 = vmatprep.subr.bf16.mxu0 0
        %2262 = vmatpush1.bf16.xpose.msra.mxu0 0
        %2263 = vmatprep.subr.bf16.mxu0 0
        %2264 = vmatpush1.bf16.xpose.msra.mxu0 0
        %2265 = vmatprep.subr.bf16.mxu0 0
        %2266 = vmatpush1.bf16.xpose.msra.mxu0 0
        %2267 = vmatprep.subr.bf16.mxu0 0
        %2268 = vmatpush1.bf16.xpose.msra.mxu0 0
        %2269 = vmatprep.subr.bf16.mxu0 0
        %2270 = vmatpush1.bf16.xpose.msra.mxu0 0
        %2271 = vmatprep.subr.bf16.mxu0 0
        %2272 = vmatpush1.bf16.xpose.msra.mxu0 0
        %2273 = vmatprep.subr.bf16.mxu0 0
        %2274 = vmatpush1.bf16.xpose.msra.mxu0 0
        %2275 = vmatprep.subr.bf16.mxu0 0
        %2276 = vmatpush1.bf16.xpose.msra.mxu0 0
        %2277 = vmatprep.mubr.bf16.mxu0 0
        %2278 = vmatmul.mubr.bf16.gmra.mrb[0].mxu0 %v2234
        %v2279 = vpop.f32.mrb[0].mxu0
        %v2280 = vadd.f32 0.0, %v2279
        %v2281 = vpop.f32.mrb[0].mxu0
        %v2282 = vpop.f32.mrb[0].mxu0
        %v2283 = vadd.f32 0.0, %v2282
        %v2284 = vpop.f32.mrb[0].mxu0
        %2285 = vmatprep.mubr.bf16.mxu0 0
        %2286 = vmatmul.mubr.bf16.gmra.mrb[0].mxu0 %v2237
        %v2287 = vpop.f32.mrb[0].mxu0
        %v2288 = vadd.f32 0.0, %v2287
        %v2289 = vpop.f32.mrb[0].mxu0
        %v2290 = vpop.f32.mrb[0].mxu0
        %v2291 = vpop.f32.mrb[0].mxu0
        %2292 = vdwg.mxu0
        %v2294 = vsel %vm2172, %v1419, 0
        %v2297 = vsel %vm2172, %v1420, 0
        %v2300 = vsel %vm2172, %v1804, 0
        %v2303 = vsel %vm2172, %v1805, 0
        %2305 = vmatprep.subr.bf16.mxu0 0
        %2306 = vmatpush1.bf16.xpose.msra.mxu0 %v2300
        %2307 = vmatprep.subr.bf16.mxu0 0
        %2308 = vmatpush1.bf16.xpose.msra.mxu0 %v2303
        %2309 = vmatprep.subr.bf16.mxu0 0
        %2310 = vmatpush1.bf16.xpose.msra.mxu0 0
        %2311 = vmatprep.subr.bf16.mxu0 0
        %2312 = vmatpush1.bf16.xpose.msra.mxu0 0
        %2313 = vmatprep.subr.bf16.mxu0 0
        %2314 = vmatpush1.bf16.xpose.msra.mxu0 0
        %2315 = vmatprep.subr.bf16.mxu0 0
        %2316 = vmatpush1.bf16.xpose.msra.mxu0 0
        %2317 = vmatprep.subr.bf16.mxu0 0
        %2318 = vmatpush1.bf16.xpose.msra.mxu0 0
        %2319 = vmatprep.subr.bf16.mxu0 0
        %2320 = vmatpush1.bf16.xpose.msra.mxu0 0
        %2321 = vmatprep.subr.bf16.mxu0 0
        %2322 = vmatpush1.bf16.xpose.msra.mxu0 0
        %2323 = vmatprep.subr.bf16.mxu0 0
        %2324 = vmatpush1.bf16.xpose.msra.mxu0 0
        %2325 = vmatprep.subr.bf16.mxu0 0
        %2326 = vmatpush1.bf16.xpose.msra.mxu0 0
        %2327 = vmatprep.subr.bf16.mxu0 0
        %2328 = vmatpush1.bf16.xpose.msra.mxu0 0
        %2329 = vmatprep.subr.bf16.mxu0 0
        %2330 = vmatpush1.bf16.xpose.msra.mxu0 0
        %2331 = vmatprep.subr.bf16.mxu0 0
        %2332 = vmatpush1.bf16.xpose.msra.mxu0 0
        %2333 = vmatprep.subr.bf16.mxu0 0
        %2334 = vmatpush1.bf16.xpose.msra.mxu0 0
        %2335 = vmatprep.subr.bf16.mxu0 0
        %2336 = vmatpush1.bf16.xpose.msra.mxu0 0
        %2337 = vmatprep.mubr.bf16.mxu0 0
        %2338 = vmatmul.mubr.bf16.gmra.mrb[0].mxu0 %v2294
        %v2339 = vpop.f32.mrb[0].mxu0
        %v2340 = vadd.f32 0.0, %v2339
        %v2341 = vpop.f32.mrb[0].mxu0
        %v2342 = vpop.f32.mrb[0].mxu0
        %v2343 = vadd.f32 0.0, %v2342
        %v2344 = vpop.f32.mrb[0].mxu0
        %2345 = vmatprep.mubr.bf16.mxu0 0
        %2346 = vmatmul.mubr.bf16.gmra.mrb[0].mxu0 %v2297
        %v2347 = vpop.f32.mrb[0].mxu0
        %v2348 = vadd.f32 0.0, %v2347
        %v2349 = vpop.f32.mrb[0].mxu0
        %v2350 = vpop.f32.mrb[0].mxu0
        %v2351 = vpop.f32.mrb[0].mxu0
        %2352 = vdwg.mxu0
        %v2354 = vsel %vm2172, %v1421, 0
        %v2357 = vsel %vm2172, %v1422, 0
        %v2360 = vsel %vm2172, %v1806, 0
        %v2363 = vsel %vm2172, %v1807, 0
        %2365 = vmatprep.subr.bf16.mxu0 0
        %2366 = vmatpush1.bf16.xpose.msra.mxu0 %v2360
        %2367 = vmatprep.subr.bf16.mxu0 0
        %2368 = vmatpush1.bf16.xpose.msra.mxu0 %v2363
        %2369 = vmatprep.subr.bf16.mxu0 0
        %2370 = vmatpush1.bf16.xpose.msra.mxu0 0
        %2371 = vmatprep.subr.bf16.mxu0 0
        %2372 = vmatpush1.bf16.xpose.msra.mxu0 0
        %2373 = vmatprep.subr.bf16.mxu0 0
        %2374 = vmatpush1.bf16.xpose.msra.mxu0 0
        %2375 = vmatprep.subr.bf16.mxu0 0
        %2376 = vmatpush1.bf16.xpose.msra.mxu0 0
        %2377 = vmatprep.subr.bf16.mxu0 0
        %2378 = vmatpush1.bf16.xpose.msra.mxu0 0
        %2379 = vmatprep.subr.bf16.mxu0 0
        %2380 = vmatpush1.bf16.xpose.msra.mxu0 0
        %2381 = vmatprep.subr.bf16.mxu0 0
        %2382 = vmatpush1.bf16.xpose.msra.mxu0 0
        %2383 = vmatprep.subr.bf16.mxu0 0
        %2384 = vmatpush1.bf16.xpose.msra.mxu0 0
        %2385 = vmatprep.subr.bf16.mxu0 0
        %2386 = vmatpush1.bf16.xpose.msra.mxu0 0
        %2387 = vmatprep.subr.bf16.mxu0 0
        %2388 = vmatpush1.bf16.xpose.msra.mxu0 0
        %2389 = vmatprep.subr.bf16.mxu0 0
        %2390 = vmatpush1.bf16.xpose.msra.mxu0 0
        %2391 = vmatprep.subr.bf16.mxu0 0
        %2392 = vmatpush1.bf16.xpose.msra.mxu0 0
        %2393 = vmatprep.subr.bf16.mxu0 0
        %2394 = vmatpush1.bf16.xpose.msra.mxu0 0
        %2395 = vmatprep.subr.bf16.mxu0 0
        %2396 = vmatpush1.bf16.xpose.msra.mxu0 0
        %2397 = vmatprep.mubr.bf16.mxu0 0
        %2398 = vmatmul.mubr.bf16.gmra.mrb[0].mxu0 %v2354
        %v2399 = vpop.f32.mrb[0].mxu0
        %v2400 = vadd.f32 0.0, %v2399
        %v2401 = vpop.f32.mrb[0].mxu0
        %v2402 = vpop.f32.mrb[0].mxu0
        %v2403 = vadd.f32 0.0, %v2402
        %v2404 = vpop.f32.mrb[0].mxu0
        %2405 = vmatprep.mubr.bf16.mxu0 0
        %2406 = vmatmul.mubr.bf16.gmra.mrb[0].mxu0 %v2357
        %v2407 = vpop.f32.mrb[0].mxu0
        %v2408 = vadd.f32 0.0, %v2407
        %v2409 = vpop.f32.mrb[0].mxu0
        %v2410 = vpop.f32.mrb[0].mxu0
        %v2411 = vpop.f32.mrb[0].mxu0
        %2412 = vdwg.mxu0
        %vm2413 = vcmask 138240
        %v2414 = vsel %vm2413, %v2220, -inf
        %2415 = vmax.xlane.f32.xlu0 %v2414
        %v2416 = vpop.xlane.xlu0 %2415
        %v2417 = vsel %vm2413, %v2223, -inf
        %2418 = vmax.xlane.f32.xlu0 %v2417
        %v2419 = vpop.xlane.xlu0 %2418
        %vm2420 = vcmask 131072
        %v2421 = vsel %vm2420, %v2228, -inf
        %2422 = vmax.xlane.f32.xlu0 %v2421
        %v2423 = vpop.xlane.xlu0 %2422
        %v2424 = vsel %vm2413, %v2280, -inf
        %2425 = vmax.xlane.f32.xlu0 %v2424
        %v2426 = vpop.xlane.xlu0 %2425
        %v2427 = vsel %vm2413, %v2283, -inf
        %2428 = vmax.xlane.f32.xlu0 %v2427
        %v2429 = vpop.xlane.xlu0 %2428
        %v2430 = vsel %vm2420, %v2288, -inf
        %2431 = vmax.xlane.f32.xlu0 %v2430
        %v2432 = vpop.xlane.xlu0 %2431
        %v2433 = vsel %vm2413, %v2340, -inf
        %2434 = vmax.xlane.f32.xlu0 %v2433
        %v2435 = vpop.xlane.xlu0 %2434
        %v2436 = vsel %vm2413, %v2343, -inf
        %2437 = vmax.xlane.f32.xlu0 %v2436
        %v2438 = vpop.xlane.xlu0 %2437
        %v2439 = vsel %vm2420, %v2348, -inf
        %2440 = vmax.xlane.f32.xlu0 %v2439
        %v2441 = vpop.xlane.xlu0 %2440
        %v2442 = vsel %vm2413, %v2400, -inf
        %2443 = vmax.xlane.f32.xlu0 %v2442
        %v2444 = vpop.xlane.xlu0 %2443
        %v2445 = vsel %vm2413, %v2403, -inf
        %2446 = vmax.xlane.f32.xlu0 %v2445
        %v2447 = vpop.xlane.xlu0 %2446
        %v2448 = vsel %vm2420, %v2408, -inf
        %2449 = vmax.xlane.f32.xlu0 %v2448
        %v2450 = vpop.xlane.xlu0 %2449
        %v2451 = vsub.f32 %v2220, %v2416
        %v2452 = vsub.f32 %v2223, %v2419
        %v2453 = vsub.f32 %v2228, %v2423
        %v2454 = vsub.f32 %v2280, %v2426
        %v2455 = vsub.f32 %v2283, %v2429
        %v2456 = vsub.f32 %v2288, %v2432
        %v2457 = vsub.f32 %v2340, %v2435
        %v2458 = vsub.f32 %v2343, %v2438
        %v2459 = vsub.f32 %v2348, %v2441
        %v2460 = vsub.f32 %v2400, %v2444
        %v2461 = vsub.f32 %v2403, %v2447
        %v2462 = vsub.f32 %v2408, %v2450
        %v2463 = vmul.f32 %v2451, 1.442695
        %v2464 = vpow.pop %v2463
        %v2465 = vmul.f32 %v2452, 1.442695
        %v2466 = vpow.pop %v2465
        %v2467 = vmul.f32 %v2453, 1.442695
        %v2468 = vpow.pop %v2467
        %v2469 = vmul.f32 %v2454, 1.442695
        %v2470 = vpow.pop %v2469
        %v2471 = vmul.f32 %v2455, 1.442695
        %v2472 = vpow.pop %v2471
        %v2473 = vmul.f32 %v2456, 1.442695
        %v2474 = vpow.pop %v2473
        %v2475 = vmul.f32 %v2457, 1.442695
        %v2476 = vpow.pop %v2475
        %v2477 = vmul.f32 %v2458, 1.442695
        %v2478 = vpow.pop %v2477
        %v2479 = vmul.f32 %v2459, 1.442695
        %v2480 = vpow.pop %v2479
        %v2481 = vmul.f32 %v2460, 1.442695
        %v2482 = vpow.pop %v2481
        %v2483 = vmul.f32 %v2461, 1.442695
        %v2484 = vpow.pop %v2483
        %v2485 = vmul.f32 %v2462, 1.442695
        %v2486 = vpow.pop %v2485
        %v2487 = vsel %vm2413, %v2464, 0.0
        %2488 = vadd.xlane.f32.xlu0 %v2487
        %v2489 = vpop.xlane.xlu0 %2488
        %v2490 = vsel %vm2413, %v2466, 0.0
        %2491 = vadd.xlane.f32.xlu0 %v2490
        %v2492 = vpop.xlane.xlu0 %2491
        %v2493 = vsel %vm2420, %v2468, 0.0
        %2494 = vadd.xlane.f32.xlu0 %v2493
        %v2495 = vpop.xlane.xlu0 %2494
        %v2496 = vsel %vm2413, %v2470, 0.0
        %2497 = vadd.xlane.f32.xlu0 %v2496
        %v2498 = vpop.xlane.xlu0 %2497
        %v2499 = vsel %vm2413, %v2472, 0.0
        %2500 = vadd.xlane.f32.xlu0 %v2499
        %v2501 = vpop.xlane.xlu0 %2500
        %v2502 = vsel %vm2420, %v2474, 0.0
        %2503 = vadd.xlane.f32.xlu0 %v2502
        %v2504 = vpop.xlane.xlu0 %2503
        %v2505 = vsel %vm2413, %v2476, 0.0
        %2506 = vadd.xlane.f32.xlu0 %v2505
        %v2507 = vpop.xlane.xlu0 %2506
        %v2508 = vsel %vm2413, %v2478, 0.0
        %2509 = vadd.xlane.f32.xlu0 %v2508
        %v2510 = vpop.xlane.xlu0 %2509
        %v2511 = vsel %vm2420, %v2480, 0.0
        %2512 = vadd.xlane.f32.xlu0 %v2511
        %v2513 = vpop.xlane.xlu0 %2512
        %v2514 = vsel %vm2413, %v2482, 0.0
        %2515 = vadd.xlane.f32.xlu0 %v2514
        %v2516 = vpop.xlane.xlu0 %2515
        %v2517 = vsel %vm2413, %v2484, 0.0
        %2518 = vadd.xlane.f32.xlu0 %v2517
        %v2519 = vpop.xlane.xlu0 %2518
        %v2520 = vsel %vm2420, %v2486, 0.0
        %2521 = vadd.xlane.f32.xlu0 %v2520
        %v2522 = vpop.xlane.xlu0 %2521
        %v2523 = vrcp.pop %v2489
        %v2524 = vrcp.pop %v2492
        %v2525 = vrcp.pop %v2495
        %v2526 = vrcp.pop %v2498
        %v2527 = vrcp.pop %v2501
        %v2528 = vrcp.pop %v2504
        %v2529 = vrcp.pop %v2507
        %v2530 = vrcp.pop %v2510
        %v2531 = vrcp.pop %v2513
        %v2532 = vrcp.pop %v2516
        %v2533 = vrcp.pop %v2519
        %v2534 = vrcp.pop %v2522
        %v2535 = vmul.f32 %v2464, %v2523
        %v2536 = vmul.f32 %v2466, %v2524
        %v2537 = vmul.f32 %v2468, %v2525
        %v2538 = vmul.f32 %v2470, %v2526
        %v2539 = vmul.f32 %v2472, %v2527
        %v2540 = vmul.f32 %v2474, %v2528
        %v2541 = vmul.f32 %v2476, %v2529
        %v2542 = vmul.f32 %v2478, %v2530
        %v2543 = vmul.f32 %v2480, %v2531
        %v2544 = vmul.f32 %v2482, %v2532
        %v2545 = vmul.f32 %v2484, %v2533
        %v2546 = vmul.f32 %v2486, %v2534
        %v2547 = vpack.c.bf16 %v2536, %v2535
        %v2548 = vpack.c.bf16 %v2537, %v2537
        %v2549 = vpack.c.bf16 %v2539, %v2538
        %v2550 = vpack.c.bf16 %v2540, %v2540
        %v2551 = vpack.c.bf16 %v2542, %v2541
        %v2552 = vpack.c.bf16 %v2543, %v2543
        %v2553 = vpack.c.bf16 %v2545, %v2544
        %v2554 = vpack.c.bf16 %v2546, %v2546
        %v2556 = vsel %vm2413, %v2547, 0
        %v2559 = vsel %vm2413, %v2548, 0
        %vm2561 = vcmask 1040384
        %v2562 = vsel 0, 4294967295, 65535
        %v2563 = vsel %vm2561, %v2562, 0
        %v2565 = vand.u32 %v2165, %v2563
        %2567 = vmatprep.subr.bf16.mxu0 0
        %2568 = vmatpush1.bf16.msra.mxu0 %v2164
        %2569 = vmatprep.subr.bf16.mxu0 0
        %2570 = vmatpush1.bf16.msra.mxu0 %v2565
        %2571 = vmatprep.subr.bf16.mxu0 0
        %2572 = vmatpush1.bf16.msra.mxu0 0
        %2573 = vmatprep.subr.bf16.mxu0 0
        %2574 = vmatpush1.bf16.msra.mxu0 0
        %2575 = vmatprep.subr.bf16.mxu0 0
        %2576 = vmatpush1.bf16.msra.mxu0 0
        %2577 = vmatprep.subr.bf16.mxu0 0
        %2578 = vmatpush1.bf16.msra.mxu0 0
        %2579 = vmatprep.subr.bf16.mxu0 0
        %2580 = vmatpush1.bf16.msra.mxu0 0
        %2581 = vmatprep.subr.bf16.mxu0 0
        %2582 = vmatpush1.bf16.msra.mxu0 0
        %2583 = vmatprep.subr.bf16.mxu0 0
        %2584 = vmatpush1.bf16.msra.mxu0 0
        %2585 = vmatprep.subr.bf16.mxu0 0
        %2586 = vmatpush1.bf16.msra.mxu0 0
        %2587 = vmatprep.subr.bf16.mxu0 0
        %2588 = vmatpush1.bf16.msra.mxu0 0
        %2589 = vmatprep.subr.bf16.mxu0 0
        %2590 = vmatpush1.bf16.msra.mxu0 0
        %2591 = vmatprep.subr.bf16.mxu0 0
        %2592 = vmatpush1.bf16.msra.mxu0 0
        %2593 = vmatprep.subr.bf16.mxu0 0
        %2594 = vmatpush1.bf16.msra.mxu0 0
        %2595 = vmatprep.subr.bf16.mxu0 0
        %2596 = vmatpush1.bf16.msra.mxu0 0
        %2597 = vmatprep.subr.bf16.mxu0 0
        %2598 = vmatpush1.bf16.msra.mxu0 0
        %2599 = vmatprep.mubr.bf16.mxu0 0
        %2600 = vmatmul.mubr.bf16.gmra.mrb[0].mxu0 %v2556
        %v2601 = vpop.f32.mrb[0].mxu0
        %v2602 = vadd.f32 0.0, %v2601
        %v2603 = vpop.f32.mrb[0].mxu0
        %v2604 = vpop.f32.mrb[0].mxu0
        %v2605 = vadd.f32 0.0, %v2604
        %v2606 = vpop.f32.mrb[0].mxu0
        %2607 = vmatprep.mubr.bf16.mxu0 0
        %2608 = vmatmul.mubr.bf16.gmra.mrb[0].mxu0 %v2559
        %v2609 = vpop.f32.mrb[0].mxu0
        %v2610 = vadd.f32 0.0, %v2609
        %v2611 = vpop.f32.mrb[0].mxu0
        %v2612 = vpop.f32.mrb[0].mxu0
        %v2613 = vpop.f32.mrb[0].mxu0
        %2614 = vdwg.mxu0
        %v2616 = vsel %vm2413, %v2549, 0
        %v2619 = vsel %vm2413, %v2550, 0
        %v2622 = vand.u32 %v2167, %v2563
        %2624 = vmatprep.subr.bf16.mxu0 0
        %2625 = vmatpush1.bf16.msra.mxu0 %v2166
        %2626 = vmatprep.subr.bf16.mxu0 0
        %2627 = vmatpush1.bf16.msra.mxu0 %v2622
        %2628 = vmatprep.subr.bf16.mxu0 0
        %2629 = vmatpush1.bf16.msra.mxu0 0
        %2630 = vmatprep.subr.bf16.mxu0 0
        %2631 = vmatpush1.bf16.msra.mxu0 0
        %2632 = vmatprep.subr.bf16.mxu0 0
        %2633 = vmatpush1.bf16.msra.mxu0 0
        %2634 = vmatprep.subr.bf16.mxu0 0
        %2635 = vmatpush1.bf16.msra.mxu0 0
        %2636 = vmatprep.subr.bf16.mxu0 0
        %2637 = vmatpush1.bf16.msra.mxu0 0
        %2638 = vmatprep.subr.bf16.mxu0 0
        %2639 = vmatpush1.bf16.msra.mxu0 0
        %2640 = vmatprep.subr.bf16.mxu0 0
        %2641 = vmatpush1.bf16.msra.mxu0 0
        %2642 = vmatprep.subr.bf16.mxu0 0
        %2643 = vmatpush1.bf16.msra.mxu0 0
        %2644 = vmatprep.subr.bf16.mxu0 0
        %2645 = vmatpush1.bf16.msra.mxu0 0
        %2646 = vmatprep.subr.bf16.mxu0 0
        %2647 = vmatpush1.bf16.msra.mxu0 0
        %2648 = vmatprep.subr.bf16.mxu0 0
        %2649 = vmatpush1.bf16.msra.mxu0 0
        %2650 = vmatprep.subr.bf16.mxu0 0
        %2651 = vmatpush1.bf16.msra.mxu0 0
        %2652 = vmatprep.subr.bf16.mxu0 0
        %2653 = vmatpush1.bf16.msra.mxu0 0
        %2654 = vmatprep.subr.bf16.mxu0 0
        %2655 = vmatpush1.bf16.msra.mxu0 0
        %2656 = vmatprep.mubr.bf16.mxu0 0
        %2657 = vmatmul.mubr.bf16.gmra.mrb[0].mxu0 %v2616
        %v2658 = vpop.f32.mrb[0].mxu0
        %v2659 = vadd.f32 0.0, %v2658
        %v2660 = vpop.f32.mrb[0].mxu0
        %v2661 = vpop.f32.mrb[0].mxu0
        %v2662 = vadd.f32 0.0, %v2661
        %v2663 = vpop.f32.mrb[0].mxu0
        %2664 = vmatprep.mubr.bf16.mxu0 0
        %2665 = vmatmul.mubr.bf16.gmra.mrb[0].mxu0 %v2619
        %v2666 = vpop.f32.mrb[0].mxu0
        %v2667 = vadd.f32 0.0, %v2666
        %v2668 = vpop.f32.mrb[0].mxu0
        %v2669 = vpop.f32.mrb[0].mxu0
        %v2670 = vpop.f32.mrb[0].mxu0
        %2671 = vdwg.mxu0
        %v2673 = vsel %vm2413, %v2551, 0
        %v2676 = vsel %vm2413, %v2552, 0
        %v2679 = vand.u32 %v2169, %v2563
        %2681 = vmatprep.subr.bf16.mxu0 0
        %2682 = vmatpush1.bf16.msra.mxu0 %v2168
        %2683 = vmatprep.subr.bf16.mxu0 0
        %2684 = vmatpush1.bf16.msra.mxu0 %v2679
        %2685 = vmatprep.subr.bf16.mxu0 0
        %2686 = vmatpush1.bf16.msra.mxu0 0
        %2687 = vmatprep.subr.bf16.mxu0 0
        %2688 = vmatpush1.bf16.msra.mxu0 0
        %2689 = vmatprep.subr.bf16.mxu0 0
        %2690 = vmatpush1.bf16.msra.mxu0 0
        %2691 = vmatprep.subr.bf16.mxu0 0
        %2692 = vmatpush1.bf16.msra.mxu0 0
        %2693 = vmatprep.subr.bf16.mxu0 0
        %2694 = vmatpush1.bf16.msra.mxu0 0
        %2695 = vmatprep.subr.bf16.mxu0 0
        %2696 = vmatpush1.bf16.msra.mxu0 0
        %2697 = vmatprep.subr.bf16.mxu0 0
        %2698 = vmatpush1.bf16.msra.mxu0 0
        %2699 = vmatprep.subr.bf16.mxu0 0
        %2700 = vmatpush1.bf16.msra.mxu0 0
        %2701 = vmatprep.subr.bf16.mxu0 0
        %2702 = vmatpush1.bf16.msra.mxu0 0
        %2703 = vmatprep.subr.bf16.mxu0 0
        %2704 = vmatpush1.bf16.msra.mxu0 0
        %2705 = vmatprep.subr.bf16.mxu0 0
        %2706 = vmatpush1.bf16.msra.mxu0 0
        %2707 = vmatprep.subr.bf16.mxu0 0
        %2708 = vmatpush1.bf16.msra.mxu0 0
        %2709 = vmatprep.subr.bf16.mxu0 0
        %2710 = vmatpush1.bf16.msra.mxu0 0
        %2711 = vmatprep.subr.bf16.mxu0 0
        %2712 = vmatpush1.bf16.msra.mxu0 0
        %2713 = vmatprep.mubr.bf16.mxu0 0
        %2714 = vmatmul.mubr.bf16.gmra.mrb[0].mxu0 %v2673
        %v2715 = vpop.f32.mrb[0].mxu0
        %v2716 = vadd.f32 0.0, %v2715
        %v2717 = vpop.f32.mrb[0].mxu0
        %v2718 = vpop.f32.mrb[0].mxu0
        %v2719 = vadd.f32 0.0, %v2718
        %v2720 = vpop.f32.mrb[0].mxu0
        %2721 = vmatprep.mubr.bf16.mxu0 0
        %2722 = vmatmul.mubr.bf16.gmra.mrb[0].mxu0 %v2676
        %v2723 = vpop.f32.mrb[0].mxu0
        %v2724 = vadd.f32 0.0, %v2723
        %v2725 = vpop.f32.mrb[0].mxu0
        %v2726 = vpop.f32.mrb[0].mxu0
        %v2727 = vpop.f32.mrb[0].mxu0
        %2728 = vdwg.mxu0
        %v2730 = vsel %vm2413, %v2553, 0
        %v2733 = vsel %vm2413, %v2554, 0
        %v2736 = vand.u32 %v2171, %v2563
        %2738 = vmatprep.subr.bf16.mxu0 0
        %2739 = vmatpush1.bf16.msra.mxu0 %v2170
        %2740 = vmatprep.subr.bf16.mxu0 0
        %2741 = vmatpush1.bf16.msra.mxu0 %v2736
        %2742 = vmatprep.subr.bf16.mxu0 0
        %2743 = vmatpush1.bf16.msra.mxu0 0
        %2744 = vmatprep.subr.bf16.mxu0 0
        %2745 = vmatpush1.bf16.msra.mxu0 0
        %2746 = vmatprep.subr.bf16.mxu0 0
        %2747 = vmatpush1.bf16.msra.mxu0 0
        %2748 = vmatprep.subr.bf16.mxu0 0
        %2749 = vmatpush1.bf16.msra.mxu0 0
        %2750 = vmatprep.subr.bf16.mxu0 0
        %2751 = vmatpush1.bf16.msra.mxu0 0
        %2752 = vmatprep.subr.bf16.mxu0 0
        %2753 = vmatpush1.bf16.msra.mxu0 0
        %2754 = vmatprep.subr.bf16.mxu0 0
        %2755 = vmatpush1.bf16.msra.mxu0 0
        %2756 = vmatprep.subr.bf16.mxu0 0
        %2757 = vmatpush1.bf16.msra.mxu0 0
        %2758 = vmatprep.subr.bf16.mxu0 0
        %2759 = vmatpush1.bf16.msra.mxu0 0
        %2760 = vmatprep.subr.bf16.mxu0 0
        %2761 = vmatpush1.bf16.msra.mxu0 0
        %2762 = vmatprep.subr.bf16.mxu0 0
        %2763 = vmatpush1.bf16.msra.mxu0 0
        %2764 = vmatprep.subr.bf16.mxu0 0
        %2765 = vmatpush1.bf16.msra.mxu0 0
        %2766 = vmatprep.subr.bf16.mxu0 0
        %2767 = vmatpush1.bf16.msra.mxu0 0
        %2768 = vmatprep.subr.bf16.mxu0 0
        %2769 = vmatpush1.bf16.msra.mxu0 0
        %2770 = vmatprep.mubr.bf16.mxu0 0
        %2771 = vmatmul.mubr.bf16.gmra.mrb[0].mxu0 %v2730
        %v2772 = vpop.f32.mrb[0].mxu0
        %v2773 = vadd.f32 0.0, %v2772
        %v2774 = vpop.f32.mrb[0].mxu0
        %v2775 = vpop.f32.mrb[0].mxu0
        %v2776 = vadd.f32 0.0, %v2775
        %v2777 = vpop.f32.mrb[0].mxu0
        %2778 = vmatprep.mubr.bf16.mxu0 0
        %2779 = vmatmul.mubr.bf16.gmra.mrb[0].mxu0 %v2733
        %v2780 = vpop.f32.mrb[0].mxu0
        %v2781 = vadd.f32 0.0, %v2780
        %v2782 = vpop.f32.mrb[0].mxu0
        %v2783 = vpop.f32.mrb[0].mxu0
        %v2784 = vpop.f32.mrb[0].mxu0
        %2785 = vdwg.mxu0
        %v2786 = vcombine.low %v2602, %v2716
        %v2787 = vcombine.high %v2602, %v2716
        %v2789 = vunpack.c.l.s4 1983009808
        %v2790 = vunpack.c.0.s8 %v2789
        %v2791 = vlaneseq
        %v2792 = vshrl.u32 %v2791, 7
        %v2793 = vsub.s32 %v2790, %v2792
        %v2794 = vrot.slane %v2786, %v2793
        %v2796 = vunpack.c.l.s4 1983009808
        %v2797 = vunpack.c.0.s8 %v2796
        %v2798 = vlaneseq
        %v2799 = vshrl.u32 %v2798, 7
        %v2800 = vsub.s32 %v2797, %v2799
        %v2801 = vrot.slane %v2787, %v2800
        %v2802 = vcombine.low %v2659, %v2773
        %v2803 = vcombine.high %v2659, %v2773
        %v2805 = vunpack.c.l.s4 1983009808
        %v2806 = vunpack.c.0.s8 %v2805
        %v2807 = vlaneseq
        %v2808 = vshrl.u32 %v2807, 7
        %v2809 = vsub.s32 %v2806, %v2808
        %v2810 = vrot.slane %v2802, %v2809
        %v2812 = vunpack.c.l.s4 1983009808
        %v2813 = vunpack.c.0.s8 %v2812
        %v2814 = vlaneseq
        %v2815 = vshrl.u32 %v2814, 7
        %v2816 = vsub.s32 %v2813, %v2815
        %v2817 = vrot.slane %v2803, %v2816
        %v2818 = vcombine.low %v2794, %v2810
        %v2819 = vcombine.high %v2794, %v2810
        %v2821 = vunpack.c.l.s4 1934713408
        %v2822 = vunpack.c.0.s8 %v2821
        %v2823 = vlaneseq
        %v2824 = vshrl.u32 %v2823, 7
        %v2825 = vsub.s32 %v2822, %v2824
        %v2826 = vrot.slane %v2818, %v2825
        %v2828 = vunpack.c.l.s4 1934713408
        %v2829 = vunpack.c.0.s8 %v2828
        %v2830 = vlaneseq
        %v2831 = vshrl.u32 %v2830, 7
        %v2832 = vsub.s32 %v2829, %v2831
        %v2833 = vrot.slane %v2819, %v2832
        %v2834 = vcombine.low %v2801, %v2817
        %v2835 = vcombine.high %v2801, %v2817
        %v2837 = vunpack.c.l.s4 1934713408
        %v2838 = vunpack.c.0.s8 %v2837
        %v2839 = vlaneseq
        %v2840 = vshrl.u32 %v2839, 7
        %v2841 = vsub.s32 %v2838, %v2840
        %v2842 = vrot.slane %v2834, %v2841
        %v2844 = vunpack.c.l.s4 1934713408
        %v2845 = vunpack.c.0.s8 %v2844
        %v2846 = vlaneseq
        %v2847 = vshrl.u32 %v2846, 7
        %v2848 = vsub.s32 %v2845, %v2847
        %v2849 = vrot.slane %v2835, %v2848
        %v2850 = vcombine.high %v2826, 0.0
        %v2851 = vcombine.high %v2833, 0.0
        %v2852 = vcombine.high %v2842, 0.0
        %v2853 = vcombine.high %v2849, 0.0
        %v2854 = vcombine.low %v2605, %v2719
        %v2855 = vcombine.high %v2605, %v2719
        %v2857 = vunpack.c.l.s4 1983009808
        %v2858 = vunpack.c.0.s8 %v2857
        %v2859 = vlaneseq
        %v2860 = vshrl.u32 %v2859, 7
        %v2861 = vsub.s32 %v2858, %v2860
        %v2862 = vrot.slane %v2854, %v2861
        %v2864 = vunpack.c.l.s4 1983009808
        %v2865 = vunpack.c.0.s8 %v2864
        %v2866 = vlaneseq
        %v2867 = vshrl.u32 %v2866, 7
        %v2868 = vsub.s32 %v2865, %v2867
        %v2869 = vrot.slane %v2855, %v2868
        %v2870 = vcombine.low %v2662, %v2776
        %v2871 = vcombine.high %v2662, %v2776
        %v2873 = vunpack.c.l.s4 1983009808
        %v2874 = vunpack.c.0.s8 %v2873
        %v2875 = vlaneseq
        %v2876 = vshrl.u32 %v2875, 7
        %v2877 = vsub.s32 %v2874, %v2876
        %v2878 = vrot.slane %v2870, %v2877
        %v2880 = vunpack.c.l.s4 1983009808
        %v2881 = vunpack.c.0.s8 %v2880
        %v2882 = vlaneseq
        %v2883 = vshrl.u32 %v2882, 7
        %v2884 = vsub.s32 %v2881, %v2883
        %v2885 = vrot.slane %v2871, %v2884
        %v2886 = vcombine.low %v2862, %v2878
        %v2887 = vcombine.high %v2862, %v2878
        %v2889 = vunpack.c.l.s4 1934713408
        %v2890 = vunpack.c.0.s8 %v2889
        %v2891 = vlaneseq
        %v2892 = vshrl.u32 %v2891, 7
        %v2893 = vsub.s32 %v2890, %v2892
        %v2894 = vrot.slane %v2886, %v2893
        %v2896 = vunpack.c.l.s4 1934713408
        %v2897 = vunpack.c.0.s8 %v2896
        %v2898 = vlaneseq
        %v2899 = vshrl.u32 %v2898, 7
        %v2900 = vsub.s32 %v2897, %v2899
        %v2901 = vrot.slane %v2887, %v2900
        %v2902 = vcombine.low %v2869, %v2885
        %v2903 = vcombine.high %v2869, %v2885
        %v2905 = vunpack.c.l.s4 1934713408
        %v2906 = vunpack.c.0.s8 %v2905
        %v2907 = vlaneseq
        %v2908 = vshrl.u32 %v2907, 7
        %v2909 = vsub.s32 %v2906, %v2908
        %v2910 = vrot.slane %v2902, %v2909
        %v2912 = vunpack.c.l.s4 1934713408
        %v2913 = vunpack.c.0.s8 %v2912
        %v2914 = vlaneseq
        %v2915 = vshrl.u32 %v2914, 7
        %v2916 = vsub.s32 %v2913, %v2915
        %v2917 = vrot.slane %v2903, %v2916
        %v2918 = vcombine.high %v2894, 0.0
        %v2919 = vcombine.high %v2901, 0.0
        %v2920 = vcombine.high %v2910, 0.0
        %v2921 = vcombine.high %v2917, 0.0
        %v2922 = vcombine.low %v2610, %v2724
        %v2924 = vunpack.c.l.s4 1983009808
        %v2925 = vunpack.c.0.s8 %v2924
        %v2926 = vlaneseq
        %v2927 = vshrl.u32 %v2926, 7
        %v2928 = vsub.s32 %v2925, %v2927
        %v2929 = vrot.slane %v2922, %v2928
        %v2930 = vcombine.low %v2667, %v2781
        %v2932 = vunpack.c.l.s4 1983009808
        %v2933 = vunpack.c.0.s8 %v2932
        %v2934 = vlaneseq
        %v2935 = vshrl.u32 %v2934, 7
        %v2936 = vsub.s32 %v2933, %v2935
        %v2937 = vrot.slane %v2930, %v2936
        %v2938 = vcombine.low %v2929, %v2937
        %v2939 = vcombine.low %v2826, %v2833
        %v2941 = vunpack.c.l.s4 1983009808
        %v2942 = vunpack.c.0.s8 %v2941
        %v2943 = vlaneseq
        %v2944 = vshrl.u32 %v2943, 7
        %v2945 = vsub.s32 %v2942, %v2944
        %v2946 = vrot.slane %v2939, %v2945
        %v2947 = vcombine.low %v2850, %v2851
        %v2949 = vunpack.c.l.s4 1983009808
        %v2950 = vunpack.c.0.s8 %v2949
        %v2951 = vlaneseq
        %v2952 = vshrl.u32 %v2951, 7
        %v2953 = vsub.s32 %v2950, %v2952
        %v2954 = vrot.slane %v2947, %v2953
        %v2955 = vcombine.low %v2842, %v2849
        %v2957 = vunpack.c.l.s4 1983009808
        %v2958 = vunpack.c.0.s8 %v2957
        %v2959 = vlaneseq
        %v2960 = vshrl.u32 %v2959, 7
        %v2961 = vsub.s32 %v2958, %v2960
        %v2962 = vrot.slane %v2955, %v2961
        %v2963 = vcombine.low %v2852, %v2853
        %v2965 = vunpack.c.l.s4 1983009808
        %v2966 = vunpack.c.0.s8 %v2965
        %v2967 = vlaneseq
        %v2968 = vshrl.u32 %v2967, 7
        %v2969 = vsub.s32 %v2966, %v2968
        %v2970 = vrot.slane %v2963, %v2969
        %v2971 = vcombine.low %v2946, %v2954
        %v2972 = vcombine.high %v2946, %v2954
        %v2974 = vunpack.c.l.s4 1934713408
        %v2975 = vunpack.c.0.s8 %v2974
        %v2976 = vlaneseq
        %v2977 = vshrl.u32 %v2976, 7
        %v2978 = vsub.s32 %v2975, %v2977
        %v2979 = vrot.slane %v2971, %v2978
        %v2981 = vunpack.c.l.s4 1934713408
        %v2982 = vunpack.c.0.s8 %v2981
        %v2983 = vlaneseq
        %v2984 = vshrl.u32 %v2983, 7
        %v2985 = vsub.s32 %v2982, %v2984
        %v2986 = vrot.slane %v2972, %v2985
        %v2987 = vcombine.low %v2962, %v2970
        %v2988 = vcombine.high %v2962, %v2970
        %v2990 = vunpack.c.l.s4 1934713408
        %v2991 = vunpack.c.0.s8 %v2990
        %v2992 = vlaneseq
        %v2993 = vshrl.u32 %v2992, 7
        %v2994 = vsub.s32 %v2991, %v2993
        %v2995 = vrot.slane %v2987, %v2994
        %v2997 = vunpack.c.l.s4 1934713408
        %v2998 = vunpack.c.0.s8 %v2997
        %v2999 = vlaneseq
        %v3000 = vshrl.u32 %v2999, 7
        %v3001 = vsub.s32 %v2998, %v3000
        %v3002 = vrot.slane %v2988, %v3001
        %v3003 = vcombine.low %v2979, %v2995
        %v3004 = vcombine.high %v2979, %v2995
        %v3005 = vcombine.low %v2986, %v3002
        %v3006 = vcombine.high %v2986, %v3002
        %v3007 = vcombine.low %v2894, %v2901
        %v3009 = vunpack.c.l.s4 1983009808
        %v3010 = vunpack.c.0.s8 %v3009
        %v3011 = vlaneseq
        %v3012 = vshrl.u32 %v3011, 7
        %v3013 = vsub.s32 %v3010, %v3012
        %v3014 = vrot.slane %v3007, %v3013
        %v3015 = vcombine.low %v2918, %v2919
        %v3017 = vunpack.c.l.s4 1983009808
        %v3018 = vunpack.c.0.s8 %v3017
        %v3019 = vlaneseq
        %v3020 = vshrl.u32 %v3019, 7
        %v3021 = vsub.s32 %v3018, %v3020
        %v3022 = vrot.slane %v3015, %v3021
        %v3023 = vcombine.low %v2910, %v2917
        %v3025 = vunpack.c.l.s4 1983009808
        %v3026 = vunpack.c.0.s8 %v3025
        %v3027 = vlaneseq
        %v3028 = vshrl.u32 %v3027, 7
        %v3029 = vsub.s32 %v3026, %v3028
        %v3030 = vrot.slane %v3023, %v3029
        %v3031 = vcombine.low %v2920, %v2921
        %v3033 = vunpack.c.l.s4 1983009808
        %v3034 = vunpack.c.0.s8 %v3033
        %v3035 = vlaneseq
        %v3036 = vshrl.u32 %v3035, 7
        %v3037 = vsub.s32 %v3034, %v3036
        %v3038 = vrot.slane %v3031, %v3037
        %v3039 = vcombine.low %v3014, %v3022
        %v3040 = vcombine.high %v3014, %v3022
        %v3042 = vunpack.c.l.s4 1934713408
        %v3043 = vunpack.c.0.s8 %v3042
        %v3044 = vlaneseq
        %v3045 = vshrl.u32 %v3044, 7
        %v3046 = vsub.s32 %v3043, %v3045
        %v3047 = vrot.slane %v3039, %v3046
        %v3049 = vunpack.c.l.s4 1934713408
        %v3050 = vunpack.c.0.s8 %v3049
        %v3051 = vlaneseq
        %v3052 = vshrl.u32 %v3051, 7
        %v3053 = vsub.s32 %v3050, %v3052
        %v3054 = vrot.slane %v3040, %v3053
        %v3055 = vcombine.low %v3030, %v3038
        %v3056 = vcombine.high %v3030, %v3038
        %v3058 = vunpack.c.l.s4 1934713408
        %v3059 = vunpack.c.0.s8 %v3058
        %v3060 = vlaneseq
        %v3061 = vshrl.u32 %v3060, 7
        %v3062 = vsub.s32 %v3059, %v3061
        %v3063 = vrot.slane %v3055, %v3062
        %v3065 = vunpack.c.l.s4 1934713408
        %v3066 = vunpack.c.0.s8 %v3065
        %v3067 = vlaneseq
        %v3068 = vshrl.u32 %v3067, 7
        %v3069 = vsub.s32 %v3066, %v3068
        %v3070 = vrot.slane %v3056, %v3069
        %v3071 = vcombine.low %v3047, %v3063
        %v3072 = vcombine.high %v3047, %v3063
        %v3073 = vcombine.low %v3054, %v3070
        %v3074 = vcombine.high %v3054, %v3070
        %v3076 = vunpack.c.l.s4 1934713408
        %v3077 = vunpack.c.0.s8 %v3076
        %v3078 = vlaneseq
        %v3079 = vshrl.u32 %v3078, 7
        %v3080 = vsub.s32 %v3077, %v3079
        %v3081 = vrot.slane %v2938, %v3080
        %v3083 = vunpack.c.l.s4 1983009808
        %v3084 = vunpack.c.0.s8 %v3083
        %v3085 = vlaneseq
        %v3086 = vshrl.u32 %v3085, 7
        %v3087 = vsub.s32 %v3084, %v3086
        %v3088 = vrot.slane %v3081, %v3087
        %v3089 = vcombine.high %v3088, 0.0
        %v3091 = vunpack.c.l.s4 1934713408
        %v3092 = vunpack.c.0.s8 %v3091
        %v3093 = vlaneseq
        %v3094 = vshrl.u32 %v3093, 7
        %v3095 = vsub.s32 %v3092, %v3094
        %v3096 = vrot.slane %v3088, %v3095
        %v3098 = vunpack.c.l.s4 1934713408
        %v3099 = vunpack.c.0.s8 %v3098
        %v3100 = vlaneseq
        %v3101 = vshrl.u32 %v3100, 7
        %v3102 = vsub.s32 %v3099, %v3101
        %v3103 = vrot.slane %v3089, %v3102
        %v3104 = vcombine.high %v3096, 0.0
        %v3105 = vcombine.high %v3103, 0.0
        %3109 = vrot.lane.b32.xlu0 %v3004, 8
        %v3110 = vpop.permute.xlu0 %3109
        %3111 = vrot.lane.b32.xlu0 %v3072, 8
        %v3112 = vpop.permute.xlu0 %3111
        %3113 = vrot.lane.b32.xlu0 %v3104, 8
        %v3114 = vpop.permute.xlu0 %3113
        %3121 = vrot.lane.b32.xlu0 %v3005, 16
        %v3122 = vpop.permute.xlu0 %3121
        %3123 = vrot.lane.b32.xlu0 %v3073, 16
        %v3124 = vpop.permute.xlu0 %3123
        %3125 = vrot.lane.b32.xlu0 %v3103, 16
        %v3126 = vpop.permute.xlu0 %3125
        %3133 = vrot.lane.b32.xlu0 %v3006, 24
        %v3134 = vpop.permute.xlu0 %3133
        %3135 = vrot.lane.b32.xlu0 %v3074, 24
        %v3136 = vpop.permute.xlu0 %3135
        %3137 = vrot.lane.b32.xlu0 %v3105, 24
        %v3138 = vpop.permute.xlu0 %3137
        %v3142 = vsel %vm2172, %v3003, %v3110
        %v3143 = vsel %vm2172, %v3071, %v3112
        %v3144 = vsel %vm2172, %v3096, %v3114
        %vm3145 = vcmask 130048
        %v3146 = vsel %vm3145, %v3142, %v3122
        %v3147 = vsel %vm3145, %v3143, %v3124
        %v3148 = vsel %vm3145, %v3144, %v3126
        %vm3149 = vcmask 195584
        %v3150 = vsel %vm3149, %v3146, %v3134
        %v3151 = vsel %vm3149, %v3147, %v3136
        %v3152 = vsel %vm3149, %v3148, %v3138
        %v3153 = vpack.c.bf16 %v3151, %v3150
        %v3154 = vpack.c.bf16 %v3152, %v3152
        %v3155 = vld [vmem:[%s778] sm:$0xf]
        %v3156 = vld [vmem:[%s778 + $0x4] sm:$0xf]
        %v3157 = vld [vmem:[%s778 + $0x8] sm:$0xf]
        %v3158 = vld [vmem:[%s778 + $0xc] sm:$0xf]
        %v3159 = vld [vmem:[%s781] sm:$0x1]
        %v3161 = vlaneseq
        %v3162 = vshrl.u32 %v3161, 7
        %v3163 = vsub.s32 0, %v3162
        %v3164 = vrot.slane %v3159, %v3163
        %v3170 = vunpack.c.l.b16 %v3155
        %v3171 = vunpack.c.l.b16 %v3156
        %v3172 = vunpack.c.l.b16 %v3157
        %v3173 = vunpack.c.l.b16 %v3158
        %v3174 = vpack.c.b16 %v3171, %v3170
        %v3175 = vpack.c.b16 %v3173, %v3172
        %v3179 = vsel %vm923, %v3153, 0
        %v3182 = vsel %vm923, %v3154, 0
        %3184 = vmatprep.subr.bf16.mxu0 0
        %3185 = vmatpush1.bf16.msra.mxu0 %v3174
        %3186 = vmatprep.subr.bf16.mxu0 0
        %3187 = vmatpush1.bf16.msra.mxu0 %v3175
        %3188 = vmatprep.subr.bf16.mxu0 0
        %3189 = vmatpush1.bf16.msra.mxu0 0
        %3190 = vmatprep.subr.bf16.mxu0 0
        %3191 = vmatpush1.bf16.msra.mxu0 0
        %3192 = vmatprep.subr.bf16.mxu0 0
        %3193 = vmatpush1.bf16.msra.mxu0 0
        %3194 = vmatprep.subr.bf16.mxu0 0
        %3195 = vmatpush1.bf16.msra.mxu0 0
        %3196 = vmatprep.subr.bf16.mxu0 0
        %3197 = vmatpush1.bf16.msra.mxu0 0
        %3198 = vmatprep.subr.bf16.mxu0 0
        %3199 = vmatpush1.bf16.msra.mxu0 0
        %3200 = vmatprep.subr.bf16.mxu0 0
        %3201 = vmatpush1.bf16.msra.mxu0 0
        %3202 = vmatprep.subr.bf16.mxu0 0
        %3203 = vmatpush1.bf16.msra.mxu0 0
        %3204 = vmatprep.subr.bf16.mxu0 0
        %3205 = vmatpush1.bf16.msra.mxu0 0
        %3206 = vmatprep.subr.bf16.mxu0 0
        %3207 = vmatpush1.bf16.msra.mxu0 0
        %3208 = vmatprep.subr.bf16.mxu0 0
        %3209 = vmatpush1.bf16.msra.mxu0 0
        %3210 = vmatprep.subr.bf16.mxu0 0
        %3211 = vmatpush1.bf16.msra.mxu0 0
        %3212 = vmatprep.subr.bf16.mxu0 0
        %3213 = vmatpush1.bf16.msra.mxu0 0
        %3214 = vmatprep.subr.bf16.mxu0 0
        %3215 = vmatpush1.bf16.msra.mxu0 0
        %3216 = vmatprep.mubr.bf16.mxu0 0
        %3217 = vmatmul.mubr.bf16.gmra.mrb[0].mxu0 %v3179
        %v3218 = vpop.f32.mrb[0].mxu0
        %v3219 = vadd.f32 %v3164, %v3218
        %v3220 = vpop.f32.mrb[0].mxu0
        %v3221 = vpop.f32.mrb[0].mxu0
        %v3222 = vadd.f32 %v3164, %v3221
        %v3223 = vpop.f32.mrb[0].mxu0
        %3224 = vmatprep.mubr.bf16.mxu0 0
        %3225 = vmatmul.mubr.bf16.gmra.mrb[0].mxu0 %v3182
        %v3226 = vpop.f32.mrb[0].mxu0
        %v3227 = vadd.f32 %v3164, %v3226
        %v3228 = vpop.f32.mrb[0].mxu0
        %v3229 = vpop.f32.mrb[0].mxu0
        %v3230 = vpop.f32.mrb[0].mxu0
        %3231 = vdwg.mxu0
        %v3232 = vadd.f32 %v918, %v3219
        %v3233 = vadd.f32 %v919, %v3222
        %v3234 = vadd.f32 %v920, %v3227
        %v3235 = vld [vmem:[%s784] sm:$0x1]
        %v3236 = vld [vmem:[%s787] sm:$0x1]
        %v3237 = vsel %vm923, %v3232, 0.0
        %3238 = vadd.xlane.f32.xlu0 %v3237
        %v3239 = vpop.xlane.xlu0 %3238
        %v3240 = vsel %vm923, %v3233, 0.0
        %3241 = vadd.xlane.f32.xlu0 %v3240
        %v3242 = vpop.xlane.xlu0 %3241
        %v3243 = vsel %vm930, %v3234, 0.0
        %3244 = vadd.xlane.f32.xlu0 %v3243
        %v3245 = vpop.xlane.xlu0 %3244
        %v3246 = vmul.f32 %v3239, %v934
        %v3247 = vmul.f32 %v3242, %v934
        %v3248 = vmul.f32 %v3245, %v934
        %v3249 = vsub.f32 %v3232, %v3246
        %v3250 = vsub.f32 %v3233, %v3247
        %v3251 = vsub.f32 %v3234, %v3248
        %v3252 = vmul.f32 %v3249, %v3249
        %v3253 = vmul.f32 %v3250, %v3250
        %v3254 = vmul.f32 %v3251, %v3251
        %v3255 = vsel %vm923, %v3252, 0.0
        %3256 = vadd.xlane.f32.xlu0 %v3255
        %v3257 = vpop.xlane.xlu0 %3256
        %v3258 = vsel %vm923, %v3253, 0.0
        %3259 = vadd.xlane.f32.xlu0 %v3258
        %v3260 = vpop.xlane.xlu0 %3259
        %v3261 = vsel %vm930, %v3254, 0.0
        %3262 = vadd.xlane.f32.xlu0 %v3261
        %v3263 = vpop.xlane.xlu0 %3262
        %v3264 = vmul.f32 %v3257, %v934
        %v3265 = vmul.f32 %v3260, %v934
        %v3266 = vmul.f32 %v3263, %v934
        %v3267 = vadd.f32 %v3264, 1e-06
        %v3268 = vadd.f32 %v3265, 1e-06
        %v3269 = vadd.f32 %v3266, 1e-06
        %v3270 = vrsqrt.pop %v3267
        %v3271 = vrsqrt.pop %v3268
        %v3272 = vrsqrt.pop %v3269
        %v3273 = vmul.f32 %v3249, %v3270
        %v3274 = vmul.f32 %v3250, %v3271
        %v3275 = vmul.f32 %v3251, %v3272
        %v3277 = vlaneseq
        %v3278 = vshrl.u32 %v3277, 7
        %v3279 = vsub.s32 0, %v3278
        %v3280 = vrot.slane %v3235, %v3279
        %v3282 = vmul.f32 %v3273, %v3280
        %v3283 = vmul.f32 %v3274, %v3280
        %v3284 = vmul.f32 %v3275, %v3280
        %v3286 = vlaneseq
        %v3287 = vshrl.u32 %v3286, 7
        %v3288 = vsub.s32 0, %v3287
        %v3289 = vrot.slane %v3236, %v3288
        %v3291 = vadd.f32 %v3282, %v3289
        %v3292 = vadd.f32 %v3283, %v3289
        %v3293 = vadd.f32 %v3284, %v3289
        %v3294 = vpack.c.bf16 %v3292, %v3291
        %v3295 = vpack.c.bf16 %v3293, %v3293
        %v3296 = vld [vmem:[%s792] sm:$0xf]
        %v3297 = vld [vmem:[%s792 + $0x4] sm:$0xf]
        %v3298 = vld [vmem:[%s792 + $0x8] sm:$0xf]
        %v3299 = vld [vmem:[%s792 + $0xc] sm:$0xf]
        %v3300 = vld [vmem:[%s795] sm:$0x1]
        %v3302 = vlaneseq
        %v3303 = vshrl.u32 %v3302, 7
        %v3304 = vsub.s32 0, %v3303
        %v3305 = vrot.slane %v3300, %v3304
        %v3311 = vunpack.c.l.b16 %v3296
        %v3312 = vunpack.c.l.b16 %v3297
        %v3313 = vunpack.c.l.b16 %v3298
        %v3314 = vunpack.c.l.b16 %v3299
        %v3315 = vpack.c.b16 %v3312, %v3311
        %v3316 = vpack.c.b16 %v3314, %v3313
        %v3320 = vsel %vm923, %v3294, 0
        %v3323 = vsel %vm923, %v3295, 0
        %3325 = vmatprep.subr.bf16.mxu0 0
        %3326 = vmatpush1.bf16.msra.mxu0 %v3315
        %3327 = vmatprep.subr.bf16.mxu0 0
        %3328 = vmatpush1.bf16.msra.mxu0 %v3316
        %3329 = vmatprep.subr.bf16.mxu0 0
        %3330 = vmatpush1.bf16.msra.mxu0 0
        %3331 = vmatprep.subr.bf16.mxu0 0
        %3332 = vmatpush1.bf16.msra.mxu0 0
        %3333 = vmatprep.subr.bf16.mxu0 0
        %3334 = vmatpush1.bf16.msra.mxu0 0
        %3335 = vmatprep.subr.bf16.mxu0 0
        %3336 = vmatpush1.bf16.msra.mxu0 0
        %3337 = vmatprep.subr.bf16.mxu0 0
        %3338 = vmatpush1.bf16.msra.mxu0 0
        %3339 = vmatprep.subr.bf16.mxu0 0
        %3340 = vmatpush1.bf16.msra.mxu0 0
        %3341 = vmatprep.subr.bf16.mxu0 0
        %3342 = vmatpush1.bf16.msra.mxu0 0
        %3343 = vmatprep.subr.bf16.mxu0 0
        %3344 = vmatpush1.bf16.msra.mxu0 0
        %3345 = vmatprep.subr.bf16.mxu0 0
        %3346 = vmatpush1.bf16.msra.mxu0 0
        %3347 = vmatprep.subr.bf16.mxu0 0
        %3348 = vmatpush1.bf16.msra.mxu0 0
        %3349 = vmatprep.subr.bf16.mxu0 0
        %3350 = vmatpush1.bf16.msra.mxu0 0
        %3351 = vmatprep.subr.bf16.mxu0 0
        %3352 = vmatpush1.bf16.msra.mxu0 0
        %3353 = vmatprep.subr.bf16.mxu0 0
        %3354 = vmatpush1.bf16.msra.mxu0 0
        %3355 = vmatprep.subr.bf16.mxu0 0
        %3356 = vmatpush1.bf16.msra.mxu0 0
        %3357 = vmatprep.mubr.bf16.mxu0 0
        %3358 = vmatmul.mubr.bf16.gmra.mrb[0].mxu0 %v3320
        %v3359 = vpop.f32.mrb[0].mxu0
        %v3360 = vadd.f32 %v3305, %v3359
        %v3361 = vpop.f32.mrb[0].mxu0
        %v3362 = vpop.f32.mrb[0].mxu0
        %v3363 = vadd.f32 %v3305, %v3362
        %v3364 = vpop.f32.mrb[0].mxu0
        %3365 = vmatprep.mubr.bf16.mxu0 0
        %3366 = vmatmul.mubr.bf16.gmra.mrb[0].mxu0 %v3323
        %v3367 = vpop.f32.mrb[0].mxu0
        %v3368 = vadd.f32 %v3305, %v3367
        %v3369 = vpop.f32.mrb[0].mxu0
        %v3370 = vpop.f32.mrb[0].mxu0
        %v3371 = vpop.f32.mrb[0].mxu0
        %3372 = vdwg.mxu0
        %v3373 = vmul.f32 %v3360, 0.5
        %v3374 = vmul.f32 %v3363, 0.5
        %v3375 = vmul.f32 %v3368, 0.5
        %v3376 = vmul.f32 %v3360, 0.70710677
        %v3377 = vmul.f32 %v3363, 0.70710677
        %v3378 = vmul.f32 %v3368, 0.70710677
        %v3379 = verf.f32.pop %v3376
        %v3380 = verf.f32.pop %v3377
        %v3381 = verf.f32.pop %v3378
        %v3382 = vadd.f32 %v3379, 1.0
        %v3383 = vadd.f32 %v3380, 1.0
        %v3384 = vadd.f32 %v3381, 1.0
        %v3385 = vmul.f32 %v3373, %v3382
        %v3386 = vmul.f32 %v3374, %v3383
        %v3387 = vmul.f32 %v3375, %v3384
        %v3388 = vpack.c.bf16 %v3386, %v3385
        %v3389 = vpack.c.bf16 %v3387, %v3387
        %v3390 = vld [vmem:[%s800] sm:$0xf]
        %v3391 = vld [vmem:[%s800 + $0x4] sm:$0xf]
        %v3392 = vld [vmem:[%s800 + $0x8] sm:$0xf]
        %v3393 = vld [vmem:[%s800 + $0xc] sm:$0xf]
        %v3394 = vld [vmem:[%s800 + $0x10] sm:$0xf]
        %v3395 = vld [vmem:[%s800 + $0x14] sm:$0xf]
        %v3396 = vld [vmem:[%s800 + $0x18] sm:$0xf]
        %v3397 = vld [vmem:[%s800 + $0x1c] sm:$0xf]
        %v3398 = vld [vmem:[%s800 + $0x20] sm:$0xf]
        %v3399 = vld [vmem:[%s800 + $0x24] sm:$0xf]
        %v3400 = vld [vmem:[%s800 + $0x28] sm:$0xf]
        %v3401 = vld [vmem:[%s800 + $0x2c] sm:$0xf]
        %v3402 = vld [vmem:[%s800 + $0x30] sm:$0xf]
        %v3403 = vld [vmem:[%s800 + $0x34] sm:$0xf]
        %v3404 = vld [vmem:[%s800 + $0x38] sm:$0xf]
        %v3405 = vld [vmem:[%s800 + $0x3c] sm:$0xf]
        %v3406 = vld [vmem:[%s803] sm:$0x1]
        %v3408 = vlaneseq
        %v3409 = vshrl.u32 %v3408, 7
        %v3410 = vsub.s32 0, %v3409
        %v3411 = vrot.slane %v3406, %v3410
        %v3429 = vunpack.c.l.b16 %v3390
        %v3430 = vunpack.c.l.b16 %v3391
        %v3431 = vunpack.c.l.b16 %v3392
        %v3432 = vunpack.c.l.b16 %v3393
        %v3433 = vunpack.c.l.b16 %v3394
        %v3434 = vunpack.c.l.b16 %v3395
        %v3435 = vunpack.c.l.b16 %v3396
        %v3436 = vunpack.c.l.b16 %v3397
        %v3437 = vunpack.c.l.b16 %v3398
        %v3438 = vunpack.c.l.b16 %v3399
        %v3439 = vunpack.c.l.b16 %v3400
        %v3440 = vunpack.c.l.b16 %v3401
        %v3441 = vunpack.c.l.b16 %v3402
        %v3442 = vunpack.c.l.b16 %v3403
        %v3443 = vunpack.c.l.b16 %v3404
        %v3444 = vunpack.c.l.b16 %v3405
        %v3445 = vpack.c.b16 %v3430, %v3429
        %v3446 = vpack.c.b16 %v3432, %v3431
        %v3447 = vpack.c.b16 %v3434, %v3433
        %v3448 = vpack.c.b16 %v3436, %v3435
        %v3449 = vpack.c.b16 %v3438, %v3437
        %v3450 = vpack.c.b16 %v3440, %v3439
        %v3451 = vpack.c.b16 %v3442, %v3441
        %v3452 = vpack.c.b16 %v3444, %v3443
        %3461 = vmatprep.subr.bf16.mxu0 0
        %3462 = vmatpush1.bf16.msra.mxu0 %v3445
        %3463 = vmatprep.subr.bf16.mxu0 0
        %3464 = vmatpush1.bf16.msra.mxu0 %v3446
        %3465 = vmatprep.subr.bf16.mxu0 0
        %3466 = vmatpush1.bf16.msra.mxu0 %v3447
        %3467 = vmatprep.subr.bf16.mxu0 0
        %3468 = vmatpush1.bf16.msra.mxu0 %v3448
        %3469 = vmatprep.subr.bf16.mxu0 0
        %3470 = vmatpush1.bf16.msra.mxu0 %v3449
        %3471 = vmatprep.subr.bf16.mxu0 0
        %3472 = vmatpush1.bf16.msra.mxu0 %v3450
        %3473 = vmatprep.subr.bf16.mxu0 0
        %3474 = vmatpush1.bf16.msra.mxu0 %v3451
        %3475 = vmatprep.subr.bf16.mxu0 0
        %3476 = vmatpush1.bf16.msra.mxu0 %v3452
        %3477 = vmatprep.subr.bf16.mxu0 0
        %3478 = vmatpush1.bf16.msra.mxu0 0
        %3479 = vmatprep.subr.bf16.mxu0 0
        %3480 = vmatpush1.bf16.msra.mxu0 0
        %3481 = vmatprep.subr.bf16.mxu0 0
        %3482 = vmatpush1.bf16.msra.mxu0 0
        %3483 = vmatprep.subr.bf16.mxu0 0
        %3484 = vmatpush1.bf16.msra.mxu0 0
        %3485 = vmatprep.subr.bf16.mxu0 0
        %3486 = vmatpush1.bf16.msra.mxu0 0
        %3487 = vmatprep.subr.bf16.mxu0 0
        %3488 = vmatpush1.bf16.msra.mxu0 0
        %3489 = vmatprep.subr.bf16.mxu0 0
        %3490 = vmatpush1.bf16.msra.mxu0 0
        %3491 = vmatprep.subr.bf16.mxu0 0
        %3492 = vmatpush1.bf16.msra.mxu0 0
        %3493 = vmatprep.mubr.bf16.mxu0 0
        %3494 = vmatmul.mubr.bf16.gmra.mrb[0].mxu0 %v3388
        %v3495 = vpop.f32.mrb[0].mxu0
        %v3496 = vadd.f32 %v3411, %v3495
        %v3497 = vpop.f32.mrb[0].mxu0
        %v3498 = vpop.f32.mrb[0].mxu0
        %v3499 = vadd.f32 %v3411, %v3498
        %v3500 = vpop.f32.mrb[0].mxu0
        %3501 = vmatprep.mubr.bf16.mxu0 0
        %3502 = vmatmul.mubr.bf16.gmra.mrb[0].mxu0 %v3389
        %v3503 = vpop.f32.mrb[0].mxu0
        %v3504 = vadd.f32 %v3411, %v3503
        %v3505 = vpop.f32.mrb[0].mxu0
        %v3506 = vpop.f32.mrb[0].mxu0
        %v3507 = vpop.f32.mrb[0].mxu0
        %3508 = vdwg.mxu0
        %v3509 = vadd.f32 %v3232, %v3496
        %v3510 = vadd.f32 %v3233, %v3499
        %v3511 = vadd.f32 %v3234, %v3504
        %3512 = vst.msk [vmem:[#allocation2] sm:$0xff] %vm923, %v3509
        %3513 = vst.msk [vmem:[#allocation2 + $0x8] sm:$0xff] %vm923, %v3510
        %3514 = vst.msk [vmem:[#allocation2 + $0x10] sm:$0x1] %vm930, %v3511
        %p3515 = scmp.eq.s32.totalorder %s38, 1
        // Predicated region
        $region101: #{_vit_forward.1} parent=95 // pred_check
          %p3516 = pneg %p3515
        $region102: #{_vit_forward.1} parent=95 // pred_check_branch
          %3518 = sbr.rel (%p3516) target = $region104
        $region103: #{_vit_forward.1} parent=95 // pred_region
          %v3519 = vld [vmem:[%s15] sm:$0x1]
          %v3520 = vld [vmem:[%s16] sm:$0x1]
          %v3521 = vsel %vm930, %v3509, 0.0
          %3522 = vadd.xlane.f32.xlu0 %v3521
          %v3523 = vpop.xlane.xlu0 %3522
          %v3524 = vmul.f32 %v3523, %v934
          %v3525 = vsub.f32 %v3509, %v3524
          %v3526 = vmul.f32 %v3525, %v3525
          %v3527 = vsel %vm930, %v3526, 0.0
          %3528 = vadd.xlane.f32.xlu0 %v3527
          %v3529 = vpop.xlane.xlu0 %3528
          %v3530 = vmul.f32 %v3529, %v934
          %v3531 = vadd.f32 %v3530, 1e-06
          %v3532 = vrsqrt.pop %v3531
          %v3533 = vmul.f32 %v3525, %v3532
          %v3534 = vmul.f32 %v3533, %v3519
          %v3535 = vadd.f32 %v3534, %v3520
          %v3536 = vpack.c.bf16 %v3535, %v3535
          %v3537 = vld [vmem:[%s17] sm:$0xf]
          %v3538 = vld [vmem:[%s17 + $0x4] sm:$0xf]
          %v3539 = vld [vmem:[%s17 + $0x8] sm:$0xf]
          %v3540 = vld [vmem:[%s17 + $0xc] sm:$0xf]
          %v3541 = vld [vmem:[%s18] sm:$0x1]
          %v3546 = vunpack.c.l.b16 %v3537
          %v3547 = vunpack.c.l.b16 %v3538
          %v3548 = vunpack.c.l.b16 %v3539
          %v3549 = vunpack.c.l.b16 %v3540
          %v3550 = vpack.c.b16 %v3547, %v3546
          %v3551 = vpack.c.b16 %v3549, %v3548
          %v3555 = vsel %vm923, %v3536, 0
          %3557 = vmatprep.subr.bf16.mxu0 0
          %3558 = vmatpush1.bf16.msra.mxu0 %v3550
          %3559 = vmatprep.subr.bf16.mxu0 0
          %3560 = vmatpush1.bf16.msra.mxu0 %v3551
          %3561 = vmatprep.subr.bf16.mxu0 0
          %3562 = vmatpush1.bf16.msra.mxu0 0
          %3563 = vmatprep.subr.bf16.mxu0 0
          %3564 = vmatpush1.bf16.msra.mxu0 0
          %3565 = vmatprep.subr.bf16.mxu0 0
          %3566 = vmatpush1.bf16.msra.mxu0 0
          %3567 = vmatprep.subr.bf16.mxu0 0
          %3568 = vmatpush1.bf16.msra.mxu0 0
          %3569 = vmatprep.subr.bf16.mxu0 0
          %3570 = vmatpush1.bf16.msra.mxu0 0
          %3571 = vmatprep.subr.bf16.mxu0 0
          %3572 = vmatpush1.bf16.msra.mxu0 0
          %3573 = vmatprep.subr.bf16.mxu0 0
          %3574 = vmatpush1.bf16.msra.mxu0 0
          %3575 = vmatprep.subr.bf16.mxu0 0
          %3576 = vmatpush1.bf16.msra.mxu0 0
          %3577 = vmatprep.subr.bf16.mxu0 0
          %3578 = vmatpush1.bf16.msra.mxu0 0
          %3579 = vmatprep.subr.bf16.mxu0 0
          %3580 = vmatpush1.bf16.msra.mxu0 0
          %3581 = vmatprep.subr.bf16.mxu0 0
          %3582 = vmatpush1.bf16.msra.mxu0 0
          %3583 = vmatprep.subr.bf16.mxu0 0
          %3584 = vmatpush1.bf16.msra.mxu0 0
          %3585 = vmatprep.subr.bf16.mxu0 0
          %3586 = vmatpush1.bf16.msra.mxu0 0
          %3587 = vmatprep.subr.bf16.mxu0 0
          %3588 = vmatpush1.bf16.msra.mxu0 0
          %3589 = vmatprep.mubr.bf16.mxu0 0
          %3590 = vmatmul.mubr.bf16.gmra.mrb[0].mxu0 %v3555
          %v3591 = vpop.f32.mrb[0].mxu0
          %v3592 = vadd.f32 %v3541, %v3591
          %v3593 = vpop.f32.mrb[0].mxu0
          %v3594 = vpop.f32.mrb[0].mxu0
          %v3595 = vpop.f32.mrb[0].mxu0
          %3596 = vdwg.mxu0
          %3597 = vst [vmem:[%s754] sm:$0x1] %v3592
        $region104: #{_vit_forward.1} parent=95 // pred_fallthru
          _
        %s3598 = sand.u32 %s517, 1
        %s3599 = scalar_lea.sflag [#allocation4], %s3598
        %s3600 = sand.u32 %s517, 1
        %s3601 = scalar_lea.vmem [#allocation3], %s3600
        // Predicated region
        $region105: #{_vit_forward.1} parent=95 // pred_check
          %p3602 = pneg %p527
        $region106: #{_vit_forward.1} parent=95 // pred_check_branch
          %3604 = sbr.rel (%p3602) target = $region108
        $region107: #{_vit_forward.1} parent=95 // pred_region
          %s3606 = ssub.s32 16, 16
          %3607 = vsyncadd %s3599, %s3606
          %s3608 = smul.addr %s37, 16
          %s3609 = scalar_lea.hbm %s19, %s3608
          %s3611 = sshll.u32 %s3601, 4
          %s3612 = int_to_ptr.vmem [resolvable:$true] %s3611
          %3614 = dma.vmem_to_hbm [thread:$0]  %s3612, 16, %s3609, %s3599
        $region108: #{_vit_forward.1} parent=95 // pred_fallthru
          _
      $region96: #{_vit_forward.1} parent=5 // pred_fallthru
        _
      %p3615 = scmp.le.s32.totalorder 2, %s28
      // Predicated region
      $region109: #{_vit_forward.1} parent=5 // pred_check
        %p3616 = pneg %p3615
      $region110: #{_vit_forward.1} parent=5 // pred_check_branch
        %3618 = sbr.rel (%p3616) target = $region112
      $region111: #{_vit_forward.1} parent=5 // pred_region
        %s3619 = ssub.s32 %s28, 2
        // Predicated region
        $region113: #{_vit_forward.1} parent=111 // pred_check
          %p3620 = pneg %p533
        $region114: #{_vit_forward.1} parent=111 // pred_check_branch
          %3622 = sbr.rel (%p3620) target = $region116
        $region115: #{_vit_forward.1} parent=111 // pred_region
          %s3623 = sand.u32 %s518, 1
          %s3624 = scalar_lea.sflag [#allocation4], %s3623
          %s3625 = sand.u32 %s518, 1
          %s3626 = scalar_lea.vmem [#allocation3], %s3625
          %3627 = dma.done %s3624, 16
        $region116: #{_vit_forward.1} parent=111 // pred_fallthru
          _
      $region112: #{_vit_forward.1} parent=5 // pred_fallthru
        _
    $region6: #{_vit_forward.1} parent=1 // loop_footer
      %s32 = sadd.s32 1, %s28
    $region7: #{_vit_forward.1} parent=1 // loop_footer_branch
      %27 = sbr.rel target = $region3
    $region8: #{_vit_forward.1} parent=1 // loop_exit
      _
    %3628 = vsyncpa [#allocation4], 1
    %s3629 = scalar_lea.sflag [#allocation4], 1
    %3630 = vsyncpa %s3629, 1

</llo_original>
